<compile_context>
chip_gen: v7x
topology: tpu7x:2x2x1
jax: 0.10.0
libtpu: 0.0.40
codegen_flags: <defaults>
</compile_context>

<pallas_src>
import functools

import jax
import jax.numpy as jnp
import numpy as np
from jax.experimental import pallas as pl
from jax.experimental.pallas import tpu as pltpu


def _round_up(x, m):
    return ((x + m - 1) // m) * m


# ----------------------------------------------------------------------------
# Pallas kernel: fused conv (tap-decomposed matmuls) + bias [+ 1x1 residual] [+ relu]
# ----------------------------------------------------------------------------
def _fused_conv_kernel(*refs, taps, mrows, has_res, relu):
    if has_res:
        x_ref, w_ref, b_ref, xr_ref, wr_ref, br_ref, o_ref = refs
    else:
        x_ref, w_ref, b_ref, o_ref = refs

    coutp = o_ref.shape[-1]
    acc = jnp.zeros((mrows, coutp), jnp.float32)
    # kh*kw shifted matmuls, accumulated in f32 (bf16 operands -> MXU).
    for t, (phase, start) in enumerate(taps):
        a = x_ref[phase, 0, pl.ds(start, mrows), :]          # (mrows, Cin) bf16
        acc = acc + jnp.dot(a, w_ref[t], preferred_element_type=jnp.float32)
    acc = acc + b_ref[...]            # folded-BN bias (scale already in weights)
    if has_res:
        # fused residual: downsample 1x1 conv (or identity via eye weight)
        acc = acc + jnp.dot(xr_ref[0], wr_ref[...], preferred_element_type=jnp.float32)
        acc = acc + br_ref[...]
    if relu:
        acc = jnp.maximum(acc, 0.0)
    o_ref[0] = acc.astype(o_ref.dtype)


# ----------------------------------------------------------------------------
# Wrapper-side layout plumbing (cheap, ~1x traffic; no 9x im2col)
# ----------------------------------------------------------------------------
def _phase_split(xp, stride, hout, wout, kh, kw):
    """Space-to-depth split of the spatially padded input so that every conv tap
    becomes an UNSTRIDED contiguous window of one phase image.
    Returns (stride*stride, N, Hq, Wq, C) plus (Hq, Wq)."""
    r0max, c0max = (kh - 1) // stride, (kw - 1) // stride
    hq_need = hout + r0max + (1 if c0max > 0 else 0)  # keeps every flat slab in-bounds
    wq_need = wout + c0max
    phases = [xp[:, pi::stride, pj::stride, :]
              for pi in range(stride) for pj in range(stride)]
    hq = max([hq_need] + [p.shape[1] for p in phases])
    wq = max([wq_need] + [p.shape[2] for p in phases])
    phases = [jnp.pad(p, ((0, 0), (0, hq - p.shape[1]), (0, wq - p.shape[2]), (0, 0)))
              for p in phases]
    return jnp.stack(phases, axis=0), hq, wq


def fused_conv_bn(x_nhwc, w_oihw, scale, bias, *, stride, padding, relu,
                  out_dtype, xr=None, wr=None, biasr=None):
    """One fused conv + folded-BN [+ 1x1 residual matmul] [+ relu] pallas_call.

    Returns (N, Hout, Wq, Coutp); caller slices [:, :, :Wout, :Cout]."""
    n, h, w_in, cin = x_nhwc.shape
    cout, _, kh, kw = w_oihw.shape
    hout = (h + 2 * padding - kh) // stride + 1
    wout = (w_in + 2 * padding - kw) // stride + 1
    coutp = _round_up(cout, 128)                     # lane-dense output stores
    nphase = stride * stride

    # input: spatial pad -> phase split -> flatten spatial -> bf16
    xp = jnp.pad(x_nhwc, ((0, 0), (padding, padding), (padding, padding), (0, 0)))
    xph, hq, wq = _phase_split(xp, stride, hout, wout, kh, kw)
    x_flat = xph.reshape(nphase, n, hq * wq, cin).astype(jnp.bfloat16)
    mrows = hout * wq

    # weights: OIHW -> (kh*kw, Cin, Coutp), BN scale folded in, bf16
    wt = jnp.transpose(w_oihw, (2, 3, 1, 0)).reshape(kh * kw, cin, cout)
    wt = wt * scale[None, None, :]
    wt = jnp.pad(wt, ((0, 0), (0, 0), (0, coutp - cout))).astype(jnp.bfloat16)
    bvec = jnp.pad(bias, (0, coutp - cout)).reshape(1, coutp).astype(jnp.float32)

    # static tap table: (phase index, flat-row offset) for each (di, dj)
    taps = tuple(((di % stride) * stride + (dj % stride),
                  (di // stride) * wq + (dj // stride))
                 for di in range(kh) for dj in range(kw))

    in_specs = [
        pl.BlockSpec((nphase, 1, hq * wq, cin), lambda i: (0, i, 0, 0)),
        pl.BlockSpec((kh * kw, cin, coutp), lambda i: (0, 0, 0)),
        pl.BlockSpec((1, coutp), lambda i: (0, 0)),
    ]
    args = [x_flat, wt, bvec]

    has_res = xr is not None
    if has_res:
        cr = xr.shape[-1]
        xr_flat = jnp.pad(xr, ((0, 0), (0, 0), (0, wq - wout), (0, 0)))
        xr_flat = xr_flat.reshape(n, mrows, cr).astype(jnp.bfloat16)
        wrp = jnp.pad(wr, ((0, 0), (0, coutp - cout))).astype(jnp.bfloat16)
        brp = jnp.pad(biasr, (0, coutp - cout)).reshape(1, coutp).astype(jnp.float32)
        in_specs += [
            pl.BlockSpec((1, mrows, cr), lambda i: (i, 0, 0)),
            pl.BlockSpec((cr, coutp), lambda i: (0, 0)),
            pl.BlockSpec((1, coutp), lambda i: (0, 0)),
        ]
        args += [xr_flat, wrp, brp]

    kernel = functools.partial(_fused_conv_kernel, taps=taps, mrows=mrows,
                               has_res=has_res, relu=relu)
    out = pl.pallas_call(
        kernel,
        out_shape=jax.ShapeDtypeStruct((n, mrows, coutp), out_dtype),
        grid=(n,),
        in_specs=in_specs,
        out_specs=pl.BlockSpec((1, mrows, coutp), lambda i: (i, 0, 0)),
        compiler_params=pltpu.CompilerParams(dimension_semantics=("parallel",)),
    )(*args)
    return out.reshape(n, hout, wq, coutp), hout, wout


def _fold_bn(bn, eps=1e-5):
    scale = bn["gamma"] / jnp.sqrt(bn["var"] + eps)
    bias = bn["beta"] - bn["mean"] * scale
    return scale.astype(jnp.float32), bias.astype(jnp.float32)


# ----------------------------------------------------------------------------
# BasicBlock forward (NCHW in / NCHW out, matching the PyTorch module)
# ----------------------------------------------------------------------------
def basic_block_forward(x_nchw, params, stride):
    x = jnp.transpose(x_nchw, (0, 2, 3, 1))  # NCHW -> NHWC
    cout = params["conv1_w"].shape[0]
    sc1, bi1 = _fold_bn(params["bn1"])
    sc2, bi2 = _fold_bn(params["bn2"])

    # conv1 + bn1 + relu  (one fused kernel, bf16 intermediate in HBM)
    o1, h1, w1 = fused_conv_bn(x, params["conv1_w"], sc1, bi1, stride=stride,
                               padding=1, relu=True, out_dtype=jnp.bfloat16)
    out1 = o1[:, :, :w1, :cout]

    # residual operand for the fused conv2 kernel
    if params["ds_w"] is not None:
        sd, bd = _fold_bn(params["ds_bn"])
        xr = x[:, ::stride, ::stride, :]            # 1x1 stride-s conv == strided matmul
        wr = jnp.transpose(params["ds_w"][:, :, 0, 0], (1, 0)) * sd[None, :]
        br = bd
    else:
        xr = x                                      # nn.Identity() as eye-weight matmul
        wr = jnp.eye(cout, dtype=jnp.float32)
        br = jnp.zeros((cout,), jnp.float32)

    # conv2 + bn2 + residual + relu  (one fused kernel)
    o2, h2, w2 = fused_conv_bn(out1, params["conv2_w"], sc2, bi2, stride=1,
                               padding=1, relu=True, out_dtype=jnp.float32,
                               xr=xr, wr=wr, biasr=br)
    out = o2[:, :, :w2, :cout]
    return jnp.transpose(out, (0, 3, 1, 2))  # NHWC -> NCHW


# ----------------------------------------------------------------------------
# Deterministic synthetic parameters (shapes from BasicBlock.__init__)
# ----------------------------------------------------------------------------
def init_params(key, in_c, out_c, stride):
    ks = jax.random.split(key, 16)

    def bn_params(k0, k1, k2, k3, c):
        return dict(
            gamma=1.0 + 0.1 * jax.random.normal(k0, (c,), jnp.float32),
            beta=0.1 * jax.random.normal(k1, (c,), jnp.float32),
            mean=0.1 * jax.random.normal(k2, (c,), jnp.float32),
            var=jnp.abs(jax.random.normal(k3, (c,), jnp.float32)) + 0.5,
        )

    has_ds = (in_c != out_c) or (stride != 1)
    return dict(
        conv1_w=0.1 * jax.random.normal(ks[0], (out_c, in_c, 3, 3), jnp.float32),
        bn1=bn_params(ks[1], ks[2], ks[3], ks[4], out_c),
        conv2_w=0.1 * jax.random.normal(ks[5], (out_c, out_c, 3, 3), jnp.float32),
        bn2=bn_params(ks[6], ks[7], ks[8], ks[9], out_c),
        ds_w=(0.1 * jax.random.normal(ks[10], (out_c, in_c, 1, 1), jnp.float32)
              if has_ds else None),
        ds_bn=(bn_params(ks[11], ks[12], ks[13], ks[14], out_c) if has_ds else None),
    )


# ----------------------------------------------------------------------------
# Pure-JAX f32 reference (lax.conv) for correctness check
# ----------------------------------------------------------------------------
def _ref_conv(x, w, stride, padding):
    return jax.lax.conv_general_dilated(
        x, w, window_strides=(stride, stride),
        padding=((padding, padding), (padding, padding)),
        dimension_numbers=("NCHW", "OIHW", "NCHW"))


def reference_forward(x, params, stride):
    def bn(y, b):
        s, c = _fold_bn(b)
        return y * s[None, :, None, None] + c[None, :, None, None]

    out = jax.nn.relu(bn(_ref_conv(x, params["conv1_w"], stride, 1), params["bn1"]))
    out = bn(_ref_conv(out, params["conv2_w"], 1, 1), params["bn2"])
    if params["ds_w"] is not None:
        res = bn(_ref_conv(x, params["ds_w"], stride, 0), params["ds_bn"])
    else:
        res = x
    return jax.nn.relu(out + res)


if __name__ == "__main__":
    key = jax.random.PRNGKey(0)
    kx, kp = jax.random.split(key)

    in_channel, out_channel, stride = 4, 8, 2
    x = jax.random.normal(kx, (2, in_channel, 16, 16), jnp.float32)  # NCHW like PyTorch
    params = init_params(kp, in_channel, out_channel, stride)

    fwd = jax.jit(basic_block_forward, static_argnums=2)
    y = jax.block_until_ready(fwd(x, params, stride))

    # Kernel uses bf16 MXU operands / bf16 intermediates (f32 accumulation), so
    # compare against the f32 reference with a bf16-appropriate tolerance.
    y_ref = reference_forward(x, params, stride)
    np.testing.assert_allclose(np.asarray(y), np.asarray(y_ref), atol=5e-2, rtol=5e-2)

    print("KERNEL_OK")
</pallas_src>

<mosaic_0001>
module attributes {stable_mosaic.version = 11 : i64} {
  func.func @_fused_conv_kernel(%arg0: i32, %arg1: memref<4x1x90x4xbf16, #tpu.memory_space<vmem>>, %arg2: memref<9x4x128xbf16, #tpu.memory_space<vmem>>, %arg3: memref<1x128xf32, #tpu.memory_space<vmem>>, %arg4: memref<1x72x128xbf16, #tpu.memory_space<vmem>>) attributes {dimension_semantics = [#tpu.dimension_semantics<parallel>], iteration_bounds = array<i64: 2>, scalar_prefetch = 0 : i64, scratch_operands = 0 : i64, tpu.core_type = #tpu.core_type<tc>, window_params = [{transform_indices = @transform_0, window_bounds = array<i64: 4, 1, 90, 4>}, {pipeline_mode = #tpu.pipeline_mode<synchronous>, transform_indices = @transform_1, window_bounds = array<i64: 9, 4, 128>}, {pipeline_mode = #tpu.pipeline_mode<synchronous>, transform_indices = @transform_2, window_bounds = array<i64: 1, 128>}, {transform_indices = @transform_3, window_bounds = array<i64: 1, 72, 128>}]} {
    %cst = arith.constant 0.000000e+00 : f32
    %0 = vector.broadcast %cst : f32 to vector<72x128xf32>
    %c0 = arith.constant 0 : index
    %c0_0 = arith.constant 0 : index
    %c0_1 = arith.constant 0 : index
    %c0_2 = arith.constant 0 : index
    %1 = vector.load %arg1[%c0, %c0_0, %c0_1, %c0_2] : memref<4x1x90x4xbf16, #tpu.memory_space<vmem>>, vector<1x1x72x4xbf16>
    %2 = vector.shape_cast %1 : vector<1x1x72x4xbf16> to vector<72x4xbf16>
    %c0_3 = arith.constant 0 : index
    %c0_4 = arith.constant 0 : index
    %c0_5 = arith.constant 0 : index
    %3 = vector.load %arg2[%c0_3, %c0_4, %c0_5] : memref<9x4x128xbf16, #tpu.memory_space<vmem>>, vector<1x4x128xbf16>
    %4 = vector.shape_cast %3 : vector<1x4x128xbf16> to vector<4x128xbf16>
    %cst_6 = arith.constant dense<0.000000e+00> : vector<72x128xf32>
    %5 = tpu.matmul %2, %4, %cst_6 {dimension_numbers = #tpu.dot_dimension_numbers<[1], [0], [0], [1], [0, 0, 1, 1], [], []>} : vector<72x4xbf16>, vector<4x128xbf16>, vector<72x128xf32> -> vector<72x128xf32>
    %6 = arith.addf %0, %5 : vector<72x128xf32>
    %c1 = arith.constant 1 : index
    %c0_7 = arith.constant 0 : index
    %c0_8 = arith.constant 0 : index
    %c0_9 = arith.constant 0 : index
    %7 = vector.load %arg1[%c1, %c0_7, %c0_8, %c0_9] : memref<4x1x90x4xbf16, #tpu.memory_space<vmem>>, vector<1x1x72x4xbf16>
    %8 = vector.shape_cast %7 : vector<1x1x72x4xbf16> to vector<72x4xbf16>
    %c1_10 = arith.constant 1 : index
    %c0_11 = arith.constant 0 : index
    %c0_12 = arith.constant 0 : index
    %9 = vector.load %arg2[%c1_10, %c0_11, %c0_12] : memref<9x4x128xbf16, #tpu.memory_space<vmem>>, vector<1x4x128xbf16>
    %10 = vector.shape_cast %9 : vector<1x4x128xbf16> to vector<4x128xbf16>
    %cst_13 = arith.constant dense<0.000000e+00> : vector<72x128xf32>
    %11 = tpu.matmul %8, %10, %cst_13 {dimension_numbers = #tpu.dot_dimension_numbers<[1], [0], [0], [1], [0, 0, 1, 1], [], []>} : vector<72x4xbf16>, vector<4x128xbf16>, vector<72x128xf32> -> vector<72x128xf32>
    %12 = arith.addf %6, %11 : vector<72x128xf32>
    %c0_14 = arith.constant 0 : index
    %c0_15 = arith.constant 0 : index
    %c1_16 = arith.constant 1 : index
    %c0_17 = arith.constant 0 : index
    %13 = vector.load %arg1[%c0_14, %c0_15, %c1_16, %c0_17] : memref<4x1x90x4xbf16, #tpu.memory_space<vmem>>, vector<1x1x72x4xbf16>
    %14 = vector.shape_cast %13 : vector<1x1x72x4xbf16> to vector<72x4xbf16>
    %c2 = arith.constant 2 : index
    %c0_18 = arith.constant 0 : index
    %c0_19 = arith.constant 0 : index
    %15 = vector.load %arg2[%c2, %c0_18, %c0_19] : memref<9x4x128xbf16, #tpu.memory_space<vmem>>, vector<1x4x128xbf16>
    %16 = vector.shape_cast %15 : vector<1x4x128xbf16> to vector<4x128xbf16>
    %cst_20 = arith.constant dense<0.000000e+00> : vector<72x128xf32>
    %17 = tpu.matmul %14, %16, %cst_20 {dimension_numbers = #tpu.dot_dimension_numbers<[1], [0], [0], [1], [0, 0, 1, 1], [], []>} : vector<72x4xbf16>, vector<4x128xbf16>, vector<72x128xf32> -> vector<72x128xf32>
    %18 = arith.addf %12, %17 : vector<72x128xf32>
    %c2_21 = arith.constant 2 : index
    %c0_22 = arith.constant 0 : index
    %c0_23 = arith.constant 0 : index
    %c0_24 = arith.constant 0 : index
    %19 = vector.load %arg1[%c2_21, %c0_22, %c0_23, %c0_24] : memref<4x1x90x4xbf16, #tpu.memory_space<vmem>>, vector<1x1x72x4xbf16>
    %20 = vector.shape_cast %19 : vector<1x1x72x4xbf16> to vector<72x4xbf16>
    %c3 = arith.constant 3 : index
    %c0_25 = arith.constant 0 : index
    %c0_26 = arith.constant 0 : index
    %21 = vector.load %arg2[%c3, %c0_25, %c0_26] : memref<9x4x128xbf16, #tpu.memory_space<vmem>>, vector<1x4x128xbf16>
    %22 = vector.shape_cast %21 : vector<1x4x128xbf16> to vector<4x128xbf16>
    %cst_27 = arith.constant dense<0.000000e+00> : vector<72x128xf32>
    %23 = tpu.matmul %20, %22, %cst_27 {dimension_numbers = #tpu.dot_dimension_numbers<[1], [0], [0], [1], [0, 0, 1, 1], [], []>} : vector<72x4xbf16>, vector<4x128xbf16>, vector<72x128xf32> -> vector<72x128xf32>
    %24 = arith.addf %18, %23 : vector<72x128xf32>
    %c3_28 = arith.constant 3 : index
    %c0_29 = arith.constant 0 : index
    %c0_30 = arith.constant 0 : index
    %c0_31 = arith.constant 0 : index
    %25 = vector.load %arg1[%c3_28, %c0_29, %c0_30, %c0_31] : memref<4x1x90x4xbf16, #tpu.memory_space<vmem>>, vector<1x1x72x4xbf16>
    %26 = vector.shape_cast %25 : vector<1x1x72x4xbf16> to vector<72x4xbf16>
    %c4 = arith.constant 4 : index
    %c0_32 = arith.constant 0 : index
    %c0_33 = arith.constant 0 : index
    %27 = vector.load %arg2[%c4, %c0_32, %c0_33] : memref<9x4x128xbf16, #tpu.memory_space<vmem>>, vector<1x4x128xbf16>
    %28 = vector.shape_cast %27 : vector<1x4x128xbf16> to vector<4x128xbf16>
    %cst_34 = arith.constant dense<0.000000e+00> : vector<72x128xf32>
    %29 = tpu.matmul %26, %28, %cst_34 {dimension_numbers = #tpu.dot_dimension_numbers<[1], [0], [0], [1], [0, 0, 1, 1], [], []>} : vector<72x4xbf16>, vector<4x128xbf16>, vector<72x128xf32> -> vector<72x128xf32>
    %30 = arith.addf %24, %29 : vector<72x128xf32>
    %c2_35 = arith.constant 2 : index
    %c0_36 = arith.constant 0 : index
    %c1_37 = arith.constant 1 : index
    %c0_38 = arith.constant 0 : index
    %31 = vector.load %arg1[%c2_35, %c0_36, %c1_37, %c0_38] : memref<4x1x90x4xbf16, #tpu.memory_space<vmem>>, vector<1x1x72x4xbf16>
    %32 = vector.shape_cast %31 : vector<1x1x72x4xbf16> to vector<72x4xbf16>
    %c5 = arith.constant 5 : index
    %c0_39 = arith.constant 0 : index
    %c0_40 = arith.constant 0 : index
    %33 = vector.load %arg2[%c5, %c0_39, %c0_40] : memref<9x4x128xbf16, #tpu.memory_space<vmem>>, vector<1x4x128xbf16>
    %34 = vector.shape_cast %33 : vector<1x4x128xbf16> to vector<4x128xbf16>
    %cst_41 = arith.constant dense<0.000000e+00> : vector<72x128xf32>
    %35 = tpu.matmul %32, %34, %cst_41 {dimension_numbers = #tpu.dot_dimension_numbers<[1], [0], [0], [1], [0, 0, 1, 1], [], []>} : vector<72x4xbf16>, vector<4x128xbf16>, vector<72x128xf32> -> vector<72x128xf32>
    %36 = arith.addf %30, %35 : vector<72x128xf32>
    %c0_42 = arith.constant 0 : index
    %c0_43 = arith.constant 0 : index
    %c9 = arith.constant 9 : index
    %c0_44 = arith.constant 0 : index
    %37 = vector.load %arg1[%c0_42, %c0_43, %c9, %c0_44] : memref<4x1x90x4xbf16, #tpu.memory_space<vmem>>, vector<1x1x72x4xbf16>
    %38 = vector.shape_cast %37 : vector<1x1x72x4xbf16> to vector<72x4xbf16>
    %c6 = arith.constant 6 : index
    %c0_45 = arith.constant 0 : index
    %c0_46 = arith.constant 0 : index
    %39 = vector.load %arg2[%c6, %c0_45, %c0_46] : memref<9x4x128xbf16, #tpu.memory_space<vmem>>, vector<1x4x128xbf16>
    %40 = vector.shape_cast %39 : vector<1x4x128xbf16> to vector<4x128xbf16>
    %cst_47 = arith.constant dense<0.000000e+00> : vector<72x128xf32>
    %41 = tpu.matmul %38, %40, %cst_47 {dimension_numbers = #tpu.dot_dimension_numbers<[1], [0], [0], [1], [0, 0, 1, 1], [], []>} : vector<72x4xbf16>, vector<4x128xbf16>, vector<72x128xf32> -> vector<72x128xf32>
    %42 = arith.addf %36, %41 : vector<72x128xf32>
    %c1_48 = arith.constant 1 : index
    %c0_49 = arith.constant 0 : index
    %c9_50 = arith.constant 9 : index
    %c0_51 = arith.constant 0 : index
    %43 = vector.load %arg1[%c1_48, %c0_49, %c9_50, %c0_51] : memref<4x1x90x4xbf16, #tpu.memory_space<vmem>>, vector<1x1x72x4xbf16>
    %44 = vector.shape_cast %43 : vector<1x1x72x4xbf16> to vector<72x4xbf16>
    %c7 = arith.constant 7 : index
    %c0_52 = arith.constant 0 : index
    %c0_53 = arith.constant 0 : index
    %45 = vector.load %arg2[%c7, %c0_52, %c0_53] : memref<9x4x128xbf16, #tpu.memory_space<vmem>>, vector<1x4x128xbf16>
    %46 = vector.shape_cast %45 : vector<1x4x128xbf16> to vector<4x128xbf16>
    %cst_54 = arith.constant dense<0.000000e+00> : vector<72x128xf32>
    %47 = tpu.matmul %44, %46, %cst_54 {dimension_numbers = #tpu.dot_dimension_numbers<[1], [0], [0], [1], [0, 0, 1, 1], [], []>} : vector<72x4xbf16>, vector<4x128xbf16>, vector<72x128xf32> -> vector<72x128xf32>
    %48 = arith.addf %42, %47 : vector<72x128xf32>
    %c0_55 = arith.constant 0 : index
    %c0_56 = arith.constant 0 : index
    %c10 = arith.constant 10 : index
    %c0_57 = arith.constant 0 : index
    %49 = vector.load %arg1[%c0_55, %c0_56, %c10, %c0_57] : memref<4x1x90x4xbf16, #tpu.memory_space<vmem>>, vector<1x1x72x4xbf16>
    %50 = vector.shape_cast %49 : vector<1x1x72x4xbf16> to vector<72x4xbf16>
    %c8 = arith.constant 8 : index
    %c0_58 = arith.constant 0 : index
    %c0_59 = arith.constant 0 : index
    %51 = vector.load %arg2[%c8, %c0_58, %c0_59] : memref<9x4x128xbf16, #tpu.memory_space<vmem>>, vector<1x4x128xbf16>
    %52 = vector.shape_cast %51 : vector<1x4x128xbf16> to vector<4x128xbf16>
    %cst_60 = arith.constant dense<0.000000e+00> : vector<72x128xf32>
    %53 = tpu.matmul %50, %52, %cst_60 {dimension_numbers = #tpu.dot_dimension_numbers<[1], [0], [0], [1], [0, 0, 1, 1], [], []>} : vector<72x4xbf16>, vector<4x128xbf16>, vector<72x128xf32> -> vector<72x128xf32>
    %54 = arith.addf %48, %53 : vector<72x128xf32>
    %c0_61 = arith.constant 0 : index
    %c0_62 = arith.constant 0 : index
    %55 = vector.load %arg3[%c0_61, %c0_62] : memref<1x128xf32, #tpu.memory_space<vmem>>, vector<1x128xf32>
    %56 = vector.broadcast %55 : vector<1x128xf32> to vector<72x128xf32>
    %57 = arith.addf %54, %56 : vector<72x128xf32>
    %cst_63 = arith.constant 0.000000e+00 : f32
    %58 = vector.broadcast %cst_63 : f32 to vector<72x128xf32>
    %59 = arith.maximumf %57, %58 : vector<72x128xf32>
    %60 = arith.truncf %59 : vector<72x128xf32> to vector<72x128xbf16>
    %c0_64 = arith.constant 0 : index
    %c0_65 = arith.constant 0 : index
    %c0_66 = arith.constant 0 : index
    %61 = vector.load %arg4[%c0_64, %c0_65, %c0_66] : memref<1x72x128xbf16, #tpu.memory_space<vmem>>, vector<1x72x128xbf16>
    %62 = vector.shape_cast %61 : vector<1x72x128xbf16> to vector<72x128xbf16>
    %63 = vector.shape_cast %60 : vector<72x128xbf16> to vector<1x72x128xbf16>
    tpu.vector_store %arg4[%c0_64, %c0_65, %c0_66], %63 {strides = array<i32>} : memref<1x72x128xbf16, #tpu.memory_space<vmem>>, vector<1x72x128xbf16>,
    return
  }
  func.func @transform_0(%arg0: i32) -> (i32, i32, i32, i32) {
    %c0_i32 = arith.constant 0 : i32
    %c0_i32_0 = arith.constant 0 : i32
    %c0_i32_1 = arith.constant 0 : i32
    %c0_i32_2 = arith.constant 0 : i32
    return %c0_i32, %arg0, %c0_i32_0, %c0_i32_1 : i32, i32, i32, i32
  }
  func.func @transform_1(%arg0: i32) -> (i32, i32, i32) {
    %c0_i32 = arith.constant 0 : i32
    %c0_i32_0 = arith.constant 0 : i32
    %c0_i32_1 = arith.constant 0 : i32
    %c0_i32_2 = arith.constant 0 : i32
    return %c0_i32, %c0_i32_0, %c0_i32_1 : i32, i32, i32
  }
  func.func @transform_2(%arg0: i32) -> (i32, i32) {
    %c0_i32 = arith.constant 0 : i32
    %c0_i32_0 = arith.constant 0 : i32
    %c0_i32_1 = arith.constant 0 : i32
    return %c0_i32, %c0_i32_0 : i32, i32
  }
  func.func @transform_3(%arg0: i32) -> (i32, i32, i32) {
    %c0_i32 = arith.constant 0 : i32
    %c0_i32_0 = arith.constant 0 : i32
    %c0_i32_1 = arith.constant 0 : i32
    return %arg0, %c0_i32, %c0_i32_0 : i32, i32, i32
  }
}

module attributes {stable_mosaic.version = 11 : i64} {
  func.func @_fused_conv_kernel(%arg0: i32, %arg1: memref<1x1x110x8xbf16, #tpu.memory_space<vmem>>, %arg2: memref<9x8x128xbf16, #tpu.memory_space<vmem>>, %arg3: memref<1x128xf32, #tpu.memory_space<vmem>>, %arg4: memref<1x80x4xbf16, #tpu.memory_space<vmem>>, %arg5: memref<4x128xbf16, #tpu.memory_space<vmem>>, %arg6: memref<1x128xf32, #tpu.memory_space<vmem>>, %arg7: memref<1x80x128xf32, #tpu.memory_space<vmem>>) attributes {dimension_semantics = [#tpu.dimension_semantics<parallel>], iteration_bounds = array<i64: 2>, scalar_prefetch = 0 : i64, scratch_operands = 0 : i64, tpu.core_type = #tpu.core_type<tc>, window_params = [{transform_indices = @transform_0, window_bounds = array<i64: 1, 1, 110, 8>}, {pipeline_mode = #tpu.pipeline_mode<synchronous>, transform_indices = @transform_1, window_bounds = array<i64: 9, 8, 128>}, {pipeline_mode = #tpu.pipeline_mode<synchronous>, transform_indices = @transform_2, window_bounds = array<i64: 1, 128>}, {transform_indices = @transform_3, window_bounds = array<i64: 1, 80, 4>}, {pipeline_mode = #tpu.pipeline_mode<synchronous>, transform_indices = @transform_4, window_bounds = array<i64: 4, 128>}, {pipeline_mode = #tpu.pipeline_mode<synchronous>, transform_indices = @transform_5, window_bounds = array<i64: 1, 128>}, {transform_indices = @transform_6, window_bounds = array<i64: 1, 80, 128>}]} {
    %cst = arith.constant 0.000000e+00 : f32
    %0 = vector.broadcast %cst : f32 to vector<80x128xf32>
    %c0 = arith.constant 0 : index
    %c0_0 = arith.constant 0 : index
    %c0_1 = arith.constant 0 : index
    %c0_2 = arith.constant 0 : index
    %1 = vector.load %arg1[%c0, %c0_0, %c0_1, %c0_2] : memref<1x1x110x8xbf16, #tpu.memory_space<vmem>>, vector<1x1x80x8xbf16>
    %2 = vector.shape_cast %1 : vector<1x1x80x8xbf16> to vector<80x8xbf16>
    %c0_3 = arith.constant 0 : index
    %c0_4 = arith.constant 0 : index
    %c0_5 = arith.constant 0 : index
    %3 = vector.load %arg2[%c0_3, %c0_4, %c0_5] : memref<9x8x128xbf16, #tpu.memory_space<vmem>>, vector<1x8x128xbf16>
    %4 = vector.shape_cast %3 : vector<1x8x128xbf16> to vector<8x128xbf16>
    %cst_6 = arith.constant dense<0.000000e+00> : vector<80x128xf32>
    %5 = tpu.matmul %2, %4, %cst_6 {dimension_numbers = #tpu.dot_dimension_numbers<[1], [0], [0], [1], [0, 0, 1, 1], [], []>} : vector<80x8xbf16>, vector<8x128xbf16>, vector<80x128xf32> -> vector<80x128xf32>
    %6 = arith.addf %0, %5 : vector<80x128xf32>
    %c0_7 = arith.constant 0 : index
    %c0_8 = arith.constant 0 : index
    %c1 = arith.constant 1 : index
    %c0_9 = arith.constant 0 : index
    %7 = vector.load %arg1[%c0_7, %c0_8, %c1, %c0_9] : memref<1x1x110x8xbf16, #tpu.memory_space<vmem>>, vector<1x1x80x8xbf16>
    %8 = vector.shape_cast %7 : vector<1x1x80x8xbf16> to vector<80x8xbf16>
    %c1_10 = arith.constant 1 : index
    %c0_11 = arith.constant 0 : index
    %c0_12 = arith.constant 0 : index
    %9 = vector.load %arg2[%c1_10, %c0_11, %c0_12] : memref<9x8x128xbf16, #tpu.memory_space<vmem>>, vector<1x8x128xbf16>
    %10 = vector.shape_cast %9 : vector<1x8x128xbf16> to vector<8x128xbf16>
    %cst_13 = arith.constant dense<0.000000e+00> : vector<80x128xf32>
    %11 = tpu.matmul %8, %10, %cst_13 {dimension_numbers = #tpu.dot_dimension_numbers<[1], [0], [0], [1], [0, 0, 1, 1], [], []>} : vector<80x8xbf16>, vector<8x128xbf16>, vector<80x128xf32> -> vector<80x128xf32>
    %12 = arith.addf %6, %11 : vector<80x128xf32>
    %c0_14 = arith.constant 0 : index
    %c0_15 = arith.constant 0 : index
    %c2 = arith.constant 2 : index
    %c0_16 = arith.constant 0 : index
    %13 = vector.load %arg1[%c0_14, %c0_15, %c2, %c0_16] : memref<1x1x110x8xbf16, #tpu.memory_space<vmem>>, vector<1x1x80x8xbf16>
    %14 = vector.shape_cast %13 : vector<1x1x80x8xbf16> to vector<80x8xbf16>
    %c2_17 = arith.constant 2 : index
    %c0_18 = arith.constant 0 : index
    %c0_19 = arith.constant 0 : index
    %15 = vector.load %arg2[%c2_17, %c0_18, %c0_19] : memref<9x8x128xbf16, #tpu.memory_space<vmem>>, vector<1x8x128xbf16>
    %16 = vector.shape_cast %15 : vector<1x8x128xbf16> to vector<8x128xbf16>
    %cst_20 = arith.constant dense<0.000000e+00> : vector<80x128xf32>
    %17 = tpu.matmul %14, %16, %cst_20 {dimension_numbers = #tpu.dot_dimension_numbers<[1], [0], [0], [1], [0, 0, 1, 1], [], []>} : vector<80x8xbf16>, vector<8x128xbf16>, vector<80x128xf32> -> vector<80x128xf32>
    %18 = arith.addf %12, %17 : vector<80x128xf32>
    %c0_21 = arith.constant 0 : index
    %c0_22 = arith.constant 0 : index
    %c10 = arith.constant 10 : index
    %c0_23 = arith.constant 0 : index
    %19 = vector.load %arg1[%c0_21, %c0_22, %c10, %c0_23] : memref<1x1x110x8xbf16, #tpu.memory_space<vmem>>, vector<1x1x80x8xbf16>
    %20 = vector.shape_cast %19 : vector<1x1x80x8xbf16> to vector<80x8xbf16>
    %c3 = arith.constant 3 : index
    %c0_24 = arith.constant 0 : index
    %c0_25 = arith.constant 0 : index
    %21 = vector.load %arg2[%c3, %c0_24, %c0_25] : memref<9x8x128xbf16, #tpu.memory_space<vmem>>, vector<1x8x128xbf16>
    %22 = vector.shape_cast %21 : vector<1x8x128xbf16> to vector<8x128xbf16>
    %cst_26 = arith.constant dense<0.000000e+00> : vector<80x128xf32>
    %23 = tpu.matmul %20, %22, %cst_26 {dimension_numbers = #tpu.dot_dimension_numbers<[1], [0], [0], [1], [0, 0, 1, 1], [], []>} : vector<80x8xbf16>, vector<8x128xbf16>, vector<80x128xf32> -> vector<80x128xf32>
    %24 = arith.addf %18, %23 : vector<80x128xf32>
    %c0_27 = arith.constant 0 : index
    %c0_28 = arith.constant 0 : index
    %c11 = arith.constant 11 : index
    %c0_29 = arith.constant 0 : index
    %25 = vector.load %arg1[%c0_27, %c0_28, %c11, %c0_29] : memref<1x1x110x8xbf16, #tpu.memory_space<vmem>>, vector<1x1x80x8xbf16>
    %26 = vector.shape_cast %25 : vector<1x1x80x8xbf16> to vector<80x8xbf16>
    %c4 = arith.constant 4 : index
    %c0_30 = arith.constant 0 : index
    %c0_31 = arith.constant 0 : index
    %27 = vector.load %arg2[%c4, %c0_30, %c0_31] : memref<9x8x128xbf16, #tpu.memory_space<vmem>>, vector<1x8x128xbf16>
    %28 = vector.shape_cast %27 : vector<1x8x128xbf16> to vector<8x128xbf16>
    %cst_32 = arith.constant dense<0.000000e+00> : vector<80x128xf32>
    %29 = tpu.matmul %26, %28, %cst_32 {dimension_numbers = #tpu.dot_dimension_numbers<[1], [0], [0], [1], [0, 0, 1, 1], [], []>} : vector<80x8xbf16>, vector<8x128xbf16>, vector<80x128xf32> -> vector<80x128xf32>
    %30 = arith.addf %24, %29 : vector<80x128xf32>
    %c0_33 = arith.constant 0 : index
    %c0_34 = arith.constant 0 : index
    %c12 = arith.constant 12 : index
    %c0_35 = arith.constant 0 : index
    %31 = vector.load %arg1[%c0_33, %c0_34, %c12, %c0_35] : memref<1x1x110x8xbf16, #tpu.memory_space<vmem>>, vector<1x1x80x8xbf16>
    %32 = vector.shape_cast %31 : vector<1x1x80x8xbf16> to vector<80x8xbf16>
    %c5 = arith.constant 5 : index
    %c0_36 = arith.constant 0 : index
    %c0_37 = arith.constant 0 : index
    %33 = vector.load %arg2[%c5, %c0_36, %c0_37] : memref<9x8x128xbf16, #tpu.memory_space<vmem>>, vector<1x8x128xbf16>
    %34 = vector.shape_cast %33 : vector<1x8x128xbf16> to vector<8x128xbf16>
    %cst_38 = arith.constant dense<0.000000e+00> : vector<80x128xf32>
    %35 = tpu.matmul %32, %34, %cst_38 {dimension_numbers = #tpu.dot_dimension_numbers<[1], [0], [0], [1], [0, 0, 1, 1], [], []>} : vector<80x8xbf16>, vector<8x128xbf16>, vector<80x128xf32> -> vector<80x128xf32>
    %36 = arith.addf %30, %35 : vector<80x128xf32>
    %c0_39 = arith.constant 0 : index
    %c0_40 = arith.constant 0 : index
    %c20 = arith.constant 20 : index
    %c0_41 = arith.constant 0 : index
    %37 = vector.load %arg1[%c0_39, %c0_40, %c20, %c0_41] : memref<1x1x110x8xbf16, #tpu.memory_space<vmem>>, vector<1x1x80x8xbf16>
    %38 = vector.shape_cast %37 : vector<1x1x80x8xbf16> to vector<80x8xbf16>
    %c6 = arith.constant 6 : index
    %c0_42 = arith.constant 0 : index
    %c0_43 = arith.constant 0 : index
    %39 = vector.load %arg2[%c6, %c0_42, %c0_43] : memref<9x8x128xbf16, #tpu.memory_space<vmem>>, vector<1x8x128xbf16>
    %40 = vector.shape_cast %39 : vector<1x8x128xbf16> to vector<8x128xbf16>
    %cst_44 = arith.constant dense<0.000000e+00> : vector<80x128xf32>
    %41 = tpu.matmul %38, %40, %cst_44 {dimension_numbers = #tpu.dot_dimension_numbers<[1], [0], [0], [1], [0, 0, 1, 1], [], []>} : vector<80x8xbf16>, vector<8x128xbf16>, vector<80x128xf32> -> vector<80x128xf32>
    %42 = arith.addf %36, %41 : vector<80x128xf32>
    %c0_45 = arith.constant 0 : index
    %c0_46 = arith.constant 0 : index
    %c21 = arith.constant 21 : index
    %c0_47 = arith.constant 0 : index
    %43 = vector.load %arg1[%c0_45, %c0_46, %c21, %c0_47] : memref<1x1x110x8xbf16, #tpu.memory_space<vmem>>, vector<1x1x80x8xbf16>
    %44 = vector.shape_cast %43 : vector<1x1x80x8xbf16> to vector<80x8xbf16>
    %c7 = arith.constant 7 : index
    %c0_48 = arith.constant 0 : index
    %c0_49 = arith.constant 0 : index
    %45 = vector.load %arg2[%c7, %c0_48, %c0_49] : memref<9x8x128xbf16, #tpu.memory_space<vmem>>, vector<1x8x128xbf16>
    %46 = vector.shape_cast %45 : vector<1x8x128xbf16> to vector<8x128xbf16>
    %cst_50 = arith.constant dense<0.000000e+00> : vector<80x128xf32>
    %47 = tpu.matmul %44, %46, %cst_50 {dimension_numbers = #tpu.dot_dimension_numbers<[1], [0], [0], [1], [0, 0, 1, 1], [], []>} : vector<80x8xbf16>, vector<8x128xbf16>, vector<80x128xf32> -> vector<80x128xf32>
    %48 = arith.addf %42, %47 : vector<80x128xf32>
    %c0_51 = arith.constant 0 : index
    %c0_52 = arith.constant 0 : index
    %c22 = arith.constant 22 : index
    %c0_53 = arith.constant 0 : index
    %49 = vector.load %arg1[%c0_51, %c0_52, %c22, %c0_53] : memref<1x1x110x8xbf16, #tpu.memory_space<vmem>>, vector<1x1x80x8xbf16>
    %50 = vector.shape_cast %49 : vector<1x1x80x8xbf16> to vector<80x8xbf16>
    %c8 = arith.constant 8 : index
    %c0_54 = arith.constant 0 : index
    %c0_55 = arith.constant 0 : index
    %51 = vector.load %arg2[%c8, %c0_54, %c0_55] : memref<9x8x128xbf16, #tpu.memory_space<vmem>>, vector<1x8x128xbf16>
    %52 = vector.shape_cast %51 : vector<1x8x128xbf16> to vector<8x128xbf16>
    %cst_56 = arith.constant dense<0.000000e+00> : vector<80x128xf32>
    %53 = tpu.matmul %50, %52, %cst_56 {dimension_numbers = #tpu.dot_dimension_numbers<[1], [0], [0], [1], [0, 0, 1, 1], [], []>} : vector<80x8xbf16>, vector<8x128xbf16>, vector<80x128xf32> -> vector<80x128xf32>
    %54 = arith.addf %48, %53 : vector<80x128xf32>
    %c0_57 = arith.constant 0 : index
    %c0_58 = arith.constant 0 : index
    %55 = vector.load %arg3[%c0_57, %c0_58] : memref<1x128xf32, #tpu.memory_space<vmem>>, vector<1x128xf32>
    %56 = vector.broadcast %55 : vector<1x128xf32> to vector<80x128xf32>
    %57 = arith.addf %54, %56 : vector<80x128xf32>
    %c0_59 = arith.constant 0 : index
    %c0_60 = arith.constant 0 : index
    %c0_61 = arith.constant 0 : index
    %58 = vector.load %arg4[%c0_59, %c0_60, %c0_61] : memref<1x80x4xbf16, #tpu.memory_space<vmem>>, vector<1x80x4xbf16>
    %59 = vector.shape_cast %58 : vector<1x80x4xbf16> to vector<80x4xbf16>
    %c0_62 = arith.constant 0 : index
    %c0_63 = arith.constant 0 : index
    %60 = vector.load %arg5[%c0_62, %c0_63] : memref<4x128xbf16, #tpu.memory_space<vmem>>, vector<4x128xbf16>
    %cst_64 = arith.constant dense<0.000000e+00> : vector<80x128xf32>
    %61 = tpu.matmul %59, %60, %cst_64 {dimension_numbers = #tpu.dot_dimension_numbers<[1], [0], [0], [1], [0, 0, 1, 1], [], []>} : vector<80x4xbf16>, vector<4x128xbf16>, vector<80x128xf32> -> vector<80x128xf32>
    %62 = arith.addf %57, %61 : vector<80x128xf32>
    %c0_65 = arith.constant 0 : index
    %c0_66 = arith.constant 0 : index
    %63 = vector.load %arg6[%c0_65, %c0_66] : memref<1x128xf32, #tpu.memory_space<vmem>>, vector<1x128xf32>
    %64 = vector.broadcast %63 : vector<1x128xf32> to vector<80x128xf32>
    %65 = arith.addf %62, %64 : vector<80x128xf32>
    %cst_67 = arith.constant 0.000000e+00 : f32
    %66 = vector.broadcast %cst_67 : f32 to vector<80x128xf32>
    %67 = arith.maximumf %65, %66 : vector<80x128xf32>
    %c0_68 = arith.constant 0 : index
    %c0_69 = arith.constant 0 : index
    %c0_70 = arith.constant 0 : index
    %68 = vector.load %arg7[%c0_68, %c0_69, %c0_70] : memref<1x80x128xf32, #tpu.memory_space<vmem>>, vector<1x80x128xf32>
    %69 = vector.shape_cast %68 : vector<1x80x128xf32> to vector<80x128xf32>
    %70 = vector.shape_cast %67 : vector<80x128xf32> to vector<1x80x128xf32>
    tpu.vector_store %arg7[%c0_68, %c0_69, %c0_70], %70 {strides = array<i32>} : memref<1x80x128xf32, #tpu.memory_space<vmem>>, vector<1x80x128xf32>,
    return
  }
  func.func @transform_0(%arg0: i32) -> (i32, i32, i32, i32) {
    %c0_i32 = arith.constant 0 : i32
    %c0_i32_0 = arith.constant 0 : i32
    %c0_i32_1 = arith.constant 0 : i32
    %c0_i32_2 = arith.constant 0 : i32
    return %c0_i32, %arg0, %c0_i32_0, %c0_i32_1 : i32, i32, i32, i32
  }
  func.func @transform_1(%arg0: i32) -> (i32, i32, i32) {
    %c0_i32 = arith.constant 0 : i32
    %c0_i32_0 = arith.constant 0 : i32
    %c0_i32_1 = arith.constant 0 : i32
    %c0_i32_2 = arith.constant 0 : i32
    return %c0_i32, %c0_i32_0, %c0_i32_1 : i32, i32, i32
  }
  func.func @transform_2(%arg0: i32) -> (i32, i32) {
    %c0_i32 = arith.constant 0 : i32
    %c0_i32_0 = arith.constant 0 : i32
    %c0_i32_1 = arith.constant 0 : i32
    return %c0_i32, %c0_i32_0 : i32, i32
  }
  func.func @transform_3(%arg0: i32) -> (i32, i32, i32) {
    %c0_i32 = arith.constant 0 : i32
    %c0_i32_0 = arith.constant 0 : i32
    %c0_i32_1 = arith.constant 0 : i32
    return %arg0, %c0_i32, %c0_i32_0 : i32, i32, i32
  }
  func.func @transform_4(%arg0: i32) -> (i32, i32) {
    %c0_i32 = arith.constant 0 : i32
    %c0_i32_0 = arith.constant 0 : i32
    %c0_i32_1 = arith.constant 0 : i32
    return %c0_i32, %c0_i32_0 : i32, i32
  }
  func.func @transform_5(%arg0: i32) -> (i32, i32) {
    %c0_i32 = arith.constant 0 : i32
    %c0_i32_0 = arith.constant 0 : i32
    %c0_i32_1 = arith.constant 0 : i32
    return %c0_i32, %c0_i32_0 : i32, i32
  }
  func.func @transform_6(%arg0: i32) -> (i32, i32, i32) {
    %c0_i32 = arith.constant 0 : i32
    %c0_i32_0 = arith.constant 0 : i32
    %c0_i32_1 = arith.constant 0 : i32
    return %arg0, %c0_i32, %c0_i32_0 : i32, i32, i32
  }
}

</mosaic_0001>

<llo_original>
// kernel: basic_block_forward.2
$region0: #{basic_block_forward.2}
  #allocation0 [shape = 'u32[]', space=smem, size = 0x4, offset = 0x4, fixed_abs, tag = 'smem constant byte address 0x4 - core index']
  #allocation1 [shape = 'u32[144,128]{1,0:T(1,128)}', space=vmem, size = 0x12000, scoped, tag = 'internal scratch']
  %s0 = inlined_call_operand.vmem [shape: bf16[4,2,90,4], index: 0, kind: input, shape index: {}]
  %s1 = inlined_call_operand.vmem [shape: bf16[9,4,128], index: 1, kind: input, shape index: {}]
  %s2 = inlined_call_operand.vmem [shape: f32[1,128], index: 2, kind: input, shape index: {}]
  %s3 = inlined_call_operand.vmem [shape: bf16[2,72,128], index: 3, kind: output, shape index: {}]
  %s4 = sld [smem:[#allocation0]]
  $region86: #{basic_block_forward.2} parent=0
    _
  %s6 = ssub.s32 1, %s4
  %s7 = scalar_select 0, %s6, %s4
  $region1: #{basic_block_forward.2} parent=0
    #allocation2 [shape = 'u8[196608]{0}', space=vmem, size = 0x30000, scoped, tag = 'input window, operand 0']
    loop: start=0, step=1, limit=4
    $region2: #{basic_block_forward.2} parent=1 // loop_pre_header
      _
    $region3: #{basic_block_forward.2} parent=1 // loop_header
      %s9 = sphi 0, %s13
      %p10 = scmp.ge.s32.totalorder %s9, 4
      %s19 = sphi 0, %s21
      %s22 = sphi 0, %s19
      %s23 = sphi 0, %s22
      %s39 = sphi 0, %s23
      %s43 = sphi 0, %s43
      %s45 = sphi 0, %s43
      %s46 = sphi 0, %s45
      %s60 = sphi 0, %s46
      %s64 = sphi 0, %s64
      %s66 = sphi 0, %s64
      %s67 = sphi 0, %s66
      %s81 = sphi 0, %s67
      %s87 = sphi 0, %s89
      %s90 = sphi 0, %s87
      %s91 = sphi 0, %s90
      %s107 = sphi 0, %s91
    $region4: #{basic_block_forward.2} parent=1 // loop_header_branch
      %12 = sbr.rel (%p10) target = $region8
    $region5: #{basic_block_forward.2} parent=1 // loop_body
      %s14 = ssub.s32 %s9, 1
      %s15 = ssub.s32 %s9, 2
      %s16 = sadd.s32 %s9, 1
      %s17 = ssub.s32 %s9, %s16
      %p18 = scmp.eq.s32.totalorder %s17, 0
      %s20 = sadd.s32 %s19, 1
      %s21 = scalar_select %p18, %s19, %s20
      %p24 = pneg %p18
      %p25 = scmp.eq.s32.totalorder %s9, 1
      %p26 = por %p24, %p25
      %p27 = scmp.ne.s32.totalorder %s19, %s22
      %p28 = scmp.eq.s32.totalorder %s9, 0
      %p29 = por %p27, %p28
      %p30 = scmp.ne.s32.totalorder %s19, %s22
      %p31 = scmp.eq.s32.totalorder %s14, 1
      %p32 = por %p30, %p31
      %p33 = scmp.ne.s32.totalorder %s22, %s23
      %p34 = scmp.eq.s32.totalorder %s14, 0
      %p35 = por %p33, %p34
      %p36 = scmp.ne.s32.totalorder %s22, %s23
      %p37 = scmp.eq.s32.totalorder %s15, 1
      %p38 = por %p36, %p37
      %p40 = scmp.ne.s32.totalorder %s23, %s39
      %p41 = scmp.eq.s32.totalorder %s15, 0
      %p42 = por %p40, %p41
      %s44 = sadd.s32 %s43, 1
      %p47 = scmp.eq.s32.totalorder %s9, 1
      %p48 = scmp.ne.s32.totalorder %s43, %s45
      %p49 = scmp.eq.s32.totalorder %s9, 0
      %p50 = por %p48, %p49
      %p51 = scmp.ne.s32.totalorder %s43, %s45
      %p52 = scmp.eq.s32.totalorder %s14, 1
      %p53 = por %p51, %p52
      %p54 = scmp.ne.s32.totalorder %s45, %s46
      %p55 = scmp.eq.s32.totalorder %s14, 0
      %p56 = por %p54, %p55
      %p57 = scmp.ne.s32.totalorder %s45, %s46
      %p58 = scmp.eq.s32.totalorder %s15, 1
      %p59 = por %p57, %p58
      %p61 = scmp.ne.s32.totalorder %s46, %s60
      %p62 = scmp.eq.s32.totalorder %s15, 0
      %p63 = por %p61, %p62
      %s65 = sadd.s32 %s64, 1
      %p68 = scmp.eq.s32.totalorder %s9, 1
      %p69 = scmp.ne.s32.totalorder %s64, %s66
      %p70 = scmp.eq.s32.totalorder %s9, 0
      %p71 = por %p69, %p70
      %p72 = scmp.ne.s32.totalorder %s64, %s66
      %p73 = scmp.eq.s32.totalorder %s14, 1
      %p74 = por %p72, %p73
      %p75 = scmp.ne.s32.totalorder %s66, %s67
      %p76 = scmp.eq.s32.totalorder %s14, 0
      %p77 = por %p75, %p76
      %p78 = scmp.ne.s32.totalorder %s66, %s67
      %p79 = scmp.eq.s32.totalorder %s15, 1
      %p80 = por %p78, %p79
      %p82 = scmp.ne.s32.totalorder %s67, %s81
      %p83 = scmp.eq.s32.totalorder %s15, 0
      %p84 = por %p82, %p83
      %s85 = ssub.s32 %s9, %s16
      %p86 = scmp.eq.s32.totalorder %s85, 0
      %s88 = sadd.s32 %s87, 1
      %s89 = scalar_select %p86, %s87, %s88
      %p92 = pneg %p86
      %p93 = scmp.eq.s32.totalorder %s9, 1
      %p94 = por %p92, %p93
      %p95 = scmp.ne.s32.totalorder %s87, %s90
      %p96 = scmp.eq.s32.totalorder %s9, 0
      %p97 = por %p95, %p96
      %p98 = scmp.ne.s32.totalorder %s87, %s90
      %p99 = scmp.eq.s32.totalorder %s14, 1
      %p100 = por %p98, %p99
      %p101 = scmp.ne.s32.totalorder %s90, %s91
      %p102 = scmp.eq.s32.totalorder %s14, 0
      %p103 = por %p101, %p102
      %p104 = scmp.ne.s32.totalorder %s90, %s91
      %p105 = scmp.eq.s32.totalorder %s15, 1
      %p106 = por %p104, %p105
      %p108 = scmp.ne.s32.totalorder %s91, %s107
      %p109 = scmp.eq.s32.totalorder %s15, 0
      %p110 = por %p108, %p109
      %p111 = scmp.le.s32.totalorder 1, %s9
      %p112 = scmp.lt.s32.totalorder %s9, 3
      %p113 = pnand %p111, %p112
      %p114 = pneg %p113
      // Predicated region
      $region9: #{basic_block_forward.2} parent=5 // pred_check
        _
      $region10: #{basic_block_forward.2} parent=5 // pred_check_branch
        %116 = sbr.rel (%p113) target = $region12
      $region11: #{basic_block_forward.2} parent=5 // pred_region
        %s117 = ssub.s32 %s9, 1
        // Predicated region
        $region13: #{basic_block_forward.2} parent=11 // pred_check
          %p118 = pneg %p56
        $region14: #{basic_block_forward.2} parent=11 // pred_check_branch
          %120 = sbr.rel (%p118) target = $region16
        $region15: #{basic_block_forward.2} parent=11 // pred_region
          _
        $region16: #{basic_block_forward.2} parent=11 // pred_fallthru
          _
        // Predicated region
        $region17: #{basic_block_forward.2} parent=11 // pred_check
          %p121 = pneg %p77
        $region18: #{basic_block_forward.2} parent=11 // pred_check_branch
          %123 = sbr.rel (%p121) target = $region20
        $region19: #{basic_block_forward.2} parent=11 // pred_region
          _
        $region20: #{basic_block_forward.2} parent=11 // pred_fallthru
          _
      $region12: #{basic_block_forward.2} parent=5 // pred_fallthru
        _
      %p124 = scmp.lt.s32.totalorder %s9, 2
      // Predicated region
      $region21: #{basic_block_forward.2} parent=5 // pred_check
        %p125 = pneg %p124
      $region22: #{basic_block_forward.2} parent=5 // pred_check_branch
        %127 = sbr.rel (%p125) target = $region24
      $region23: #{basic_block_forward.2} parent=5 // pred_region
        // Predicated region
        $region25: #{basic_block_forward.2} parent=23 // pred_check
          %p128 = pneg %p29
        $region26: #{basic_block_forward.2} parent=23 // pred_check_branch
          %130 = sbr.rel (%p128) target = $region28
        $region27: #{basic_block_forward.2} parent=23 // pred_region
          %s131 = sand.u32 %s19, 1
          %s132 = sand.u32 %s19, 1
          %s133 = smul.addr %s132, 192
          %s134 = scalar_lea.vmem [#allocation2], %s133
          %s135 = smul.addr %s9, 12
          %s136 = smul.addr %s135, 4
          %s137 = scalar_lea.vmem %s0, %s136
          // Predicated region
          $region29: #{basic_block_forward.2} parent=27 // pred_check
            _
          $region30: #{basic_block_forward.2} parent=27 // pred_check_branch
            %139 = sbr.rel (0) target = $region32
          $region31: #{basic_block_forward.2} parent=27 // pred_region
            // Predicated region
            $region33: #{basic_block_forward.2} parent=31 // pred_check
              _
            $region34: #{basic_block_forward.2} parent=31 // pred_check_branch
              %141 = sbr.rel target = $region36
            $region35: #{basic_block_forward.2} parent=31 // pred_region
              // Predicated region
              $region48: #{basic_block_forward.2} parent=35 // pred_check
                _
              $region49: #{basic_block_forward.2} parent=35 // pred_check_branch
                %250 = sbr.rel (0) target = $region51
              $region50: #{basic_block_forward.2} parent=35 // pred_region
                loop: start=0, step=1, limit=1
                $region52: #{basic_block_forward.2} parent=50 // loop_pre_header
                  _
                $region53: #{basic_block_forward.2} parent=50 // loop_header
                  %s252 = sphi 0, %s256
                  %p253 = scmp.ge.s32.totalorder %s252, 1
                  %s257 = sphi %s137, %s137
                  %s258 = sphi %s134, %s134
                $region54: #{basic_block_forward.2} parent=50 // loop_header_branch
                  %255 = sbr.rel (%p253) target = $region58
                $region55: #{basic_block_forward.2} parent=50 // loop_body
                  _
                $region56: #{basic_block_forward.2} parent=50 // loop_footer
                  %s256 = sadd.s32 1, %s252
                $region57: #{basic_block_forward.2} parent=50 // loop_footer_branch
                  %251 = sbr.rel target = $region53
                $region58: #{basic_block_forward.2} parent=50 // loop_exit
                  _
                loop: start=0, step=1, limit=1
                $region59: #{basic_block_forward.2} parent=50 // loop_pre_header
                  _
                $region60: #{basic_block_forward.2} parent=50 // loop_header
                  %s261 = sphi 0, %s265
                  %p262 = scmp.ge.s32.totalorder %s261, 1
                  %s266 = sphi %s137, %s137
                  %s267 = sphi %s134, %s134
                $region61: #{basic_block_forward.2} parent=50 // loop_header_branch
                  %264 = sbr.rel (%p262) target = $region65
                $region62: #{basic_block_forward.2} parent=50 // loop_body
                  %v268 = vld [vmem:[%s266] sm:$0xf]
                  %269 = vst [vmem:[%s267] sm:$0xf] %v268
                  %v270 = vld [vmem:[%s266 + $0x4] sm:$0xf]
                  %271 = vst [vmem:[%s267 + $0x4] sm:$0xf] %v270
                  %v272 = vld [vmem:[%s266 + $0x8] sm:$0xf]
                  %273 = vst [vmem:[%s267 + $0x8] sm:$0xf] %v272
                  %v274 = vld [vmem:[%s266 + $0xc] sm:$0xf]
                  %275 = vst [vmem:[%s267 + $0xc] sm:$0xf] %v274
                  %v276 = vld [vmem:[%s266 + $0x10] sm:$0xf]
                  %277 = vst [vmem:[%s267 + $0x10] sm:$0xf] %v276
                  %v278 = vld [vmem:[%s266 + $0x14] sm:$0xf]
                  %279 = vst [vmem:[%s267 + $0x14] sm:$0xf] %v278
                  %v280 = vld [vmem:[%s266 + $0x18] sm:$0xf]
                  %281 = vst [vmem:[%s267 + $0x18] sm:$0xf] %v280
                  %v282 = vld [vmem:[%s266 + $0x1c] sm:$0xf]
                  %283 = vst [vmem:[%s267 + $0x1c] sm:$0xf] %v282
                  %v284 = vld [vmem:[%s266 + $0x20] sm:$0xf]
                  %285 = vst [vmem:[%s267 + $0x20] sm:$0xf] %v284
                  %v286 = vld [vmem:[%s266 + $0x24] sm:$0xf]
                  %287 = vst [vmem:[%s267 + $0x24] sm:$0xf] %v286
                  %v288 = vld [vmem:[%s266 + $0x28] sm:$0xf]
                  %289 = vst [vmem:[%s267 + $0x28] sm:$0xf] %v288
                  %v290 = vld [vmem:[%s266 + $0x2c] sm:$0xf]
                  %291 = vst [vmem:[%s267 + $0x2c] sm:$0xf] %v290
                  %v292 = vld [vmem:[%s266 + $0x60] sm:$0xf]
                  %293 = vst [vmem:[%s267 + $0x30] sm:$0xf] %v292
                  %v294 = vld [vmem:[%s266 + $0x64] sm:$0xf]
                  %295 = vst [vmem:[%s267 + $0x34] sm:$0xf] %v294
                  %v296 = vld [vmem:[%s266 + $0x68] sm:$0xf]
                  %297 = vst [vmem:[%s267 + $0x38] sm:$0xf] %v296
                  %v298 = vld [vmem:[%s266 + $0x6c] sm:$0xf]
                  %299 = vst [vmem:[%s267 + $0x3c] sm:$0xf] %v298
                  %v300 = vld [vmem:[%s266 + $0x70] sm:$0xf]
                  %301 = vst [vmem:[%s267 + $0x40] sm:$0xf] %v300
                  %v302 = vld [vmem:[%s266 + $0x74] sm:$0xf]
                  %303 = vst [vmem:[%s267 + $0x44] sm:$0xf] %v302
                  %v304 = vld [vmem:[%s266 + $0x78] sm:$0xf]
                  %305 = vst [vmem:[%s267 + $0x48] sm:$0xf] %v304
                  %v306 = vld [vmem:[%s266 + $0x7c] sm:$0xf]
                  %307 = vst [vmem:[%s267 + $0x4c] sm:$0xf] %v306
                  %v308 = vld [vmem:[%s266 + $0x80] sm:$0xf]
                  %309 = vst [vmem:[%s267 + $0x50] sm:$0xf] %v308
                  %v310 = vld [vmem:[%s266 + $0x84] sm:$0xf]
                  %311 = vst [vmem:[%s267 + $0x54] sm:$0xf] %v310
                  %v312 = vld [vmem:[%s266 + $0x88] sm:$0xf]
                  %313 = vst [vmem:[%s267 + $0x58] sm:$0xf] %v312
                  %v314 = vld [vmem:[%s266 + $0x8c] sm:$0xf]
                  %315 = vst [vmem:[%s267 + $0x5c] sm:$0xf] %v314
                  %v316 = vld [vmem:[%s266 + $0xc0] sm:$0xf]
                  %317 = vst [vmem:[%s267 + $0x60] sm:$0xf] %v316
                  %v318 = vld [vmem:[%s266 + $0xc4] sm:$0xf]
                  %319 = vst [vmem:[%s267 + $0x64] sm:$0xf] %v318
                  %v320 = vld [vmem:[%s266 + $0xc8] sm:$0xf]
                  %321 = vst [vmem:[%s267 + $0x68] sm:$0xf] %v320
                  %v322 = vld [vmem:[%s266 + $0xcc] sm:$0xf]
                  %323 = vst [vmem:[%s267 + $0x6c] sm:$0xf] %v322
                  %v324 = vld [vmem:[%s266 + $0xd0] sm:$0xf]
                  %325 = vst [vmem:[%s267 + $0x70] sm:$0xf] %v324
                  %v326 = vld [vmem:[%s266 + $0xd4] sm:$0xf]
                  %327 = vst [vmem:[%s267 + $0x74] sm:$0xf] %v326
                  %v328 = vld [vmem:[%s266 + $0xd8] sm:$0xf]
                  %329 = vst [vmem:[%s267 + $0x78] sm:$0xf] %v328
                  %v330 = vld [vmem:[%s266 + $0xdc] sm:$0xf]
                  %331 = vst [vmem:[%s267 + $0x7c] sm:$0xf] %v330
                  %v332 = vld [vmem:[%s266 + $0xe0] sm:$0xf]
                  %333 = vst [vmem:[%s267 + $0x80] sm:$0xf] %v332
                  %v334 = vld [vmem:[%s266 + $0xe4] sm:$0xf]
                  %335 = vst [vmem:[%s267 + $0x84] sm:$0xf] %v334
                  %v336 = vld [vmem:[%s266 + $0xe8] sm:$0xf]
                  %337 = vst [vmem:[%s267 + $0x88] sm:$0xf] %v336
                  %v338 = vld [vmem:[%s266 + $0xec] sm:$0xf]
                  %339 = vst [vmem:[%s267 + $0x8c] sm:$0xf] %v338
                  %v340 = vld [vmem:[%s266 + $0x120] sm:$0xf]
                  %341 = vst [vmem:[%s267 + $0x90] sm:$0xf] %v340
                  %v342 = vld [vmem:[%s266 + $0x124] sm:$0xf]
                  %343 = vst [vmem:[%s267 + $0x94] sm:$0xf] %v342
                  %v344 = vld [vmem:[%s266 + $0x128] sm:$0xf]
                  %345 = vst [vmem:[%s267 + $0x98] sm:$0xf] %v344
                  %v346 = vld [vmem:[%s266 + $0x12c] sm:$0xf]
                  %347 = vst [vmem:[%s267 + $0x9c] sm:$0xf] %v346
                  %v348 = vld [vmem:[%s266 + $0x130] sm:$0xf]
                  %349 = vst [vmem:[%s267 + $0xa0] sm:$0xf] %v348
                  %v350 = vld [vmem:[%s266 + $0x134] sm:$0xf]
                  %351 = vst [vmem:[%s267 + $0xa4] sm:$0xf] %v350
                  %v352 = vld [vmem:[%s266 + $0x138] sm:$0xf]
                  %353 = vst [vmem:[%s267 + $0xa8] sm:$0xf] %v352
                  %v354 = vld [vmem:[%s266 + $0x13c] sm:$0xf]
                  %355 = vst [vmem:[%s267 + $0xac] sm:$0xf] %v354
                  %v356 = vld [vmem:[%s266 + $0x140] sm:$0xf]
                  %357 = vst [vmem:[%s267 + $0xb0] sm:$0xf] %v356
                  %v358 = vld [vmem:[%s266 + $0x144] sm:$0xf]
                  %359 = vst [vmem:[%s267 + $0xb4] sm:$0xf] %v358
                  %v360 = vld [vmem:[%s266 + $0x148] sm:$0xf]
                  %361 = vst [vmem:[%s267 + $0xb8] sm:$0xf] %v360
                  %v362 = vld [vmem:[%s266 + $0x14c] sm:$0xf]
                  %363 = vst [vmem:[%s267 + $0xbc] sm:$0xf] %v362
                $region63: #{basic_block_forward.2} parent=50 // loop_footer
                  %s265 = sadd.s32 1, %s261
                $region64: #{basic_block_forward.2} parent=50 // loop_footer_branch
                  %260 = sbr.rel target = $region60
                $region65: #{basic_block_forward.2} parent=50 // loop_exit
                  _
              $region51: #{basic_block_forward.2} parent=35 // pred_fallthru
                _
            $region36: #{basic_block_forward.2} parent=31 // pred_fallthru
              _
            // Predicated region
            $region37: #{basic_block_forward.2} parent=31 // pred_check
              _
            $region38: #{basic_block_forward.2} parent=31 // pred_check_branch
              %143 = sbr.rel (0) target = $region40
            $region39: #{basic_block_forward.2} parent=31 // pred_region
              loop: start=0, step=1, limit=1
              $region41: #{basic_block_forward.2} parent=39 // loop_pre_header
                _
              $region42: #{basic_block_forward.2} parent=39 // loop_header
                %s146 = sphi 0, %s150
                %p147 = scmp.ge.s32.totalorder %s146, 1
                %s151 = sphi %s137, %s137
                %s152 = sphi %s134, %s134
              $region43: #{basic_block_forward.2} parent=39 // loop_header_branch
                %149 = sbr.rel (%p147) target = $region47
              $region44: #{basic_block_forward.2} parent=39 // loop_body
                %v153 = vld [vmem:[%s151] sm:$0xf]
                %154 = vst [vmem:[%s152] sm:$0xf] %v153
                %v155 = vld [vmem:[%s151 + $0x4] sm:$0xf]
                %156 = vst [vmem:[%s152 + $0x4] sm:$0xf] %v155
                %v157 = vld [vmem:[%s151 + $0x8] sm:$0xf]
                %158 = vst [vmem:[%s152 + $0x8] sm:$0xf] %v157
                %v159 = vld [vmem:[%s151 + $0xc] sm:$0xf]
                %160 = vst [vmem:[%s152 + $0xc] sm:$0xf] %v159
                %v161 = vld [vmem:[%s151 + $0x10] sm:$0xf]
                %162 = vst [vmem:[%s152 + $0x10] sm:$0xf] %v161
                %v163 = vld [vmem:[%s151 + $0x14] sm:$0xf]
                %164 = vst [vmem:[%s152 + $0x14] sm:$0xf] %v163
                %v165 = vld [vmem:[%s151 + $0x18] sm:$0xf]
                %166 = vst [vmem:[%s152 + $0x18] sm:$0xf] %v165
                %v167 = vld [vmem:[%s151 + $0x1c] sm:$0xf]
                %168 = vst [vmem:[%s152 + $0x1c] sm:$0xf] %v167
                %v169 = vld [vmem:[%s151 + $0x20] sm:$0xf]
                %170 = vst [vmem:[%s152 + $0x20] sm:$0xf] %v169
                %v171 = vld [vmem:[%s151 + $0x24] sm:$0xf]
                %172 = vst [vmem:[%s152 + $0x24] sm:$0xf] %v171
                %v173 = vld [vmem:[%s151 + $0x28] sm:$0xf]
                %174 = vst [vmem:[%s152 + $0x28] sm:$0xf] %v173
                %v175 = vld [vmem:[%s151 + $0x2c] sm:$0xf]
                %176 = vst [vmem:[%s152 + $0x2c] sm:$0xf] %v175
                %v177 = vld [vmem:[%s151 + $0x60] sm:$0xf]
                %178 = vst [vmem:[%s152 + $0x30] sm:$0xf] %v177
                %v179 = vld [vmem:[%s151 + $0x64] sm:$0xf]
                %180 = vst [vmem:[%s152 + $0x34] sm:$0xf] %v179
                %v181 = vld [vmem:[%s151 + $0x68] sm:$0xf]
                %182 = vst [vmem:[%s152 + $0x38] sm:$0xf] %v181
                %v183 = vld [vmem:[%s151 + $0x6c] sm:$0xf]
                %184 = vst [vmem:[%s152 + $0x3c] sm:$0xf] %v183
                %v185 = vld [vmem:[%s151 + $0x70] sm:$0xf]
                %186 = vst [vmem:[%s152 + $0x40] sm:$0xf] %v185
                %v187 = vld [vmem:[%s151 + $0x74] sm:$0xf]
                %188 = vst [vmem:[%s152 + $0x44] sm:$0xf] %v187
                %v189 = vld [vmem:[%s151 + $0x78] sm:$0xf]
                %190 = vst [vmem:[%s152 + $0x48] sm:$0xf] %v189
                %v191 = vld [vmem:[%s151 + $0x7c] sm:$0xf]
                %192 = vst [vmem:[%s152 + $0x4c] sm:$0xf] %v191
                %v193 = vld [vmem:[%s151 + $0x80] sm:$0xf]
                %194 = vst [vmem:[%s152 + $0x50] sm:$0xf] %v193
                %v195 = vld [vmem:[%s151 + $0x84] sm:$0xf]
                %196 = vst [vmem:[%s152 + $0x54] sm:$0xf] %v195
                %v197 = vld [vmem:[%s151 + $0x88] sm:$0xf]
                %198 = vst [vmem:[%s152 + $0x58] sm:$0xf] %v197
                %v199 = vld [vmem:[%s151 + $0x8c] sm:$0xf]
                %200 = vst [vmem:[%s152 + $0x5c] sm:$0xf] %v199
                %v201 = vld [vmem:[%s151 + $0xc0] sm:$0xf]
                %202 = vst [vmem:[%s152 + $0x60] sm:$0xf] %v201
                %v203 = vld [vmem:[%s151 + $0xc4] sm:$0xf]
                %204 = vst [vmem:[%s152 + $0x64] sm:$0xf] %v203
                %v205 = vld [vmem:[%s151 + $0xc8] sm:$0xf]
                %206 = vst [vmem:[%s152 + $0x68] sm:$0xf] %v205
                %v207 = vld [vmem:[%s151 + $0xcc] sm:$0xf]
                %208 = vst [vmem:[%s152 + $0x6c] sm:$0xf] %v207
                %v209 = vld [vmem:[%s151 + $0xd0] sm:$0xf]
                %210 = vst [vmem:[%s152 + $0x70] sm:$0xf] %v209
                %v211 = vld [vmem:[%s151 + $0xd4] sm:$0xf]
                %212 = vst [vmem:[%s152 + $0x74] sm:$0xf] %v211
                %v213 = vld [vmem:[%s151 + $0xd8] sm:$0xf]
                %214 = vst [vmem:[%s152 + $0x78] sm:$0xf] %v213
                %v215 = vld [vmem:[%s151 + $0xdc] sm:$0xf]
                %216 = vst [vmem:[%s152 + $0x7c] sm:$0xf] %v215
                %v217 = vld [vmem:[%s151 + $0xe0] sm:$0xf]
                %218 = vst [vmem:[%s152 + $0x80] sm:$0xf] %v217
                %v219 = vld [vmem:[%s151 + $0xe4] sm:$0xf]
                %220 = vst [vmem:[%s152 + $0x84] sm:$0xf] %v219
                %v221 = vld [vmem:[%s151 + $0xe8] sm:$0xf]
                %222 = vst [vmem:[%s152 + $0x88] sm:$0xf] %v221
                %v223 = vld [vmem:[%s151 + $0xec] sm:$0xf]
                %224 = vst [vmem:[%s152 + $0x8c] sm:$0xf] %v223
                %v225 = vld [vmem:[%s151 + $0x120] sm:$0xf]
                %226 = vst [vmem:[%s152 + $0x90] sm:$0xf] %v225
                %v227 = vld [vmem:[%s151 + $0x124] sm:$0xf]
                %228 = vst [vmem:[%s152 + $0x94] sm:$0xf] %v227
                %v229 = vld [vmem:[%s151 + $0x128] sm:$0xf]
                %230 = vst [vmem:[%s152 + $0x98] sm:$0xf] %v229
                %v231 = vld [vmem:[%s151 + $0x12c] sm:$0xf]
                %232 = vst [vmem:[%s152 + $0x9c] sm:$0xf] %v231
                %v233 = vld [vmem:[%s151 + $0x130] sm:$0xf]
                %234 = vst [vmem:[%s152 + $0xa0] sm:$0xf] %v233
                %v235 = vld [vmem:[%s151 + $0x134] sm:$0xf]
                %236 = vst [vmem:[%s152 + $0xa4] sm:$0xf] %v235
                %v237 = vld [vmem:[%s151 + $0x138] sm:$0xf]
                %238 = vst [vmem:[%s152 + $0xa8] sm:$0xf] %v237
                %v239 = vld [vmem:[%s151 + $0x13c] sm:$0xf]
                %240 = vst [vmem:[%s152 + $0xac] sm:$0xf] %v239
                %v241 = vld [vmem:[%s151 + $0x140] sm:$0xf]
                %242 = vst [vmem:[%s152 + $0xb0] sm:$0xf] %v241
                %v243 = vld [vmem:[%s151 + $0x144] sm:$0xf]
                %244 = vst [vmem:[%s152 + $0xb4] sm:$0xf] %v243
                %v245 = vld [vmem:[%s151 + $0x148] sm:$0xf]
                %246 = vst [vmem:[%s152 + $0xb8] sm:$0xf] %v245
                %v247 = vld [vmem:[%s151 + $0x14c] sm:$0xf]
                %248 = vst [vmem:[%s152 + $0xbc] sm:$0xf] %v247
              $region45: #{basic_block_forward.2} parent=39 // loop_footer
                %s150 = sadd.s32 1, %s146
              $region46: #{basic_block_forward.2} parent=39 // loop_footer_branch
                %145 = sbr.rel target = $region42
              $region47: #{basic_block_forward.2} parent=39 // loop_exit
                _
            $region40: #{basic_block_forward.2} parent=31 // pred_fallthru
              _
          $region32: #{basic_block_forward.2} parent=27 // pred_fallthru
            _
          %364 = vnop
        $region28: #{basic_block_forward.2} parent=23 // pred_fallthru
          _
      $region24: #{basic_block_forward.2} parent=5 // pred_fallthru
        _
      %p365 = scmp.le.s32.totalorder 1, %s9
      %p366 = scmp.lt.s32.totalorder %s9, 3
      %p367 = pnand %p365, %p366
      %p368 = pneg %p367
      // Predicated region
      $region66: #{basic_block_forward.2} parent=5 // pred_check
        _
      $region67: #{basic_block_forward.2} parent=5 // pred_check_branch
        %370 = sbr.rel (%p367) target = $region69
      $region68: #{basic_block_forward.2} parent=5 // pred_region
        %s371 = ssub.s32 %s9, 1
        %s372 = sand.u32 %s22, 1
        %s373 = sand.u32 %s22, 1
        %s374 = smul.addr %s373, 192
        %s375 = scalar_lea.vmem [#allocation2], %s374
        // Predicated region
        $region70: #{basic_block_forward.2} parent=68 // pred_check
          %p376 = pneg %p35
        $region71: #{basic_block_forward.2} parent=68 // pred_check_branch
          %378 = sbr.rel (%p376) target = $region73
        $region72: #{basic_block_forward.2} parent=68 // pred_region
          _
        $region73: #{basic_block_forward.2} parent=68 // pred_fallthru
          _
        %s379 = sand.u32 %s22, 1
        %s380 = sand.u32 %s22, 1
        %s381 = smul.addr %s380, 192
        %s382 = scalar_lea.vmem [#allocation2], %s381
        %p383 = pneg %p35
        %p384 = pneg %p32
        %p385 = pneg %p56
        %p386 = pneg %p53
        %p387 = pneg %p77
        %p388 = pneg %p74
        %p389 = pneg %p103
        %p390 = pneg %p100
        %p391 = scmp.lt.s32.totalorder %s14, 1
        %s392 = scalar_select %p391, %s14, 1
        %s393 = smul.addr %s392, 9
        %s394 = smul.addr %s393, 4
        %s395 = scalar_lea.vmem %s3, %s394
        %p396 = scmp.lt.s32.totalorder %s14, 1
        %s397 = scalar_select %p396, %s14, 1
        %s398 = smul.addr %s397, 9
        %s399 = smul.addr %s398, 4
        %s400 = scalar_lea.vmem %s3, %s399
        %v402 = vld [vmem:[%s375] sm:$0xf]
        %v403 = vld [vmem:[%s375 + $0x4] sm:$0xf]
        %v404 = vld [vmem:[%s375 + $0x8] sm:$0xf]
        %v405 = vld [vmem:[%s375 + $0xc] sm:$0xf]
        %v406 = vld [vmem:[%s375 + $0x10] sm:$0xf]
        %v407 = vld [vmem:[%s375 + $0x14] sm:$0xf]
        %v408 = vld [vmem:[%s375 + $0x18] sm:$0xf]
        %v409 = vld [vmem:[%s375 + $0x1c] sm:$0xf]
        %v410 = vld [vmem:[%s375 + $0x20] sm:$0xf]
        %v411 = vld [vmem:[%s1] sm:$0x3]
        %s412 = scalar_lea.vmem %s375, 48 [#allocation2]
        %v413 = vld [vmem:[%s412] sm:$0xf]
        %v414 = vld [vmem:[%s412 + $0x4] sm:$0xf]
        %v415 = vld [vmem:[%s412 + $0x8] sm:$0xf]
        %v416 = vld [vmem:[%s412 + $0xc] sm:$0xf]
        %v417 = vld [vmem:[%s412 + $0x10] sm:$0xf]
        %v418 = vld [vmem:[%s412 + $0x14] sm:$0xf]
        %v419 = vld [vmem:[%s412 + $0x18] sm:$0xf]
        %v420 = vld [vmem:[%s412 + $0x1c] sm:$0xf]
        %v421 = vld [vmem:[%s412 + $0x20] sm:$0xf]
        %s422 = scalar_lea.vmem %s1, 2
        %v423 = vld [vmem:[%s422] sm:$0x3]
        %v433 = vunpack.c.l.b16 %v413
        %v434 = vunpack.c.l.b16 %v414
        %v435 = vunpack.c.l.b16 %v415
        %v436 = vunpack.c.l.b16 %v416
        %v437 = vunpack.c.l.b16 %v417
        %v438 = vunpack.c.l.b16 %v418
        %v439 = vunpack.c.l.b16 %v419
        %v440 = vunpack.c.l.b16 %v420
        %v441 = vunpack.c.l.b16 %v421
        %v442 = vpack.c.b16 %v434, %v433
        %v443 = vpack.c.b16 %v436, %v435
        %v444 = vpack.c.b16 %v438, %v437
        %v445 = vpack.c.b16 %v440, %v439
        %v446 = vpack.c.b16 %v441, %v441
        %vm447 = vcmask 31744
        %v449 = vsel %vm447, %v442, 0
        %v452 = vsel %vm447, %v443, 0
        %v455 = vsel %vm447, %v444, 0
        %v458 = vsel %vm447, %v445, 0
        %v461 = vsel %vm447, %v446, 0
        %vm463 = vcmask 1041408
        %v465 = vsel %vm463, %v423, 0
        %467 = vmatprep.subr.bf16.mxu0 0
        %468 = vmatpush1.bf16.msra.mxu0 %v465
        %469 = vmatprep.subr.bf16.mxu0 0
        %470 = vmatpush1.bf16.msra.mxu0 0
        %471 = vmatprep.subr.bf16.mxu0 0
        %472 = vmatpush1.bf16.msra.mxu0 0
        %473 = vmatprep.subr.bf16.mxu0 0
        %474 = vmatpush1.bf16.msra.mxu0 0
        %475 = vmatprep.subr.bf16.mxu0 0
        %476 = vmatpush1.bf16.msra.mxu0 0
        %477 = vmatprep.subr.bf16.mxu0 0
        %478 = vmatpush1.bf16.msra.mxu0 0
        %479 = vmatprep.subr.bf16.mxu0 0
        %480 = vmatpush1.bf16.msra.mxu0 0
        %481 = vmatprep.subr.bf16.mxu0 0
        %482 = vmatpush1.bf16.msra.mxu0 0
        %483 = vmatprep.subr.bf16.mxu0 0
        %484 = vmatpush1.bf16.msra.mxu0 0
        %485 = vmatprep.subr.bf16.mxu0 0
        %486 = vmatpush1.bf16.msra.mxu0 0
        %487 = vmatprep.subr.bf16.mxu0 0
        %488 = vmatpush1.bf16.msra.mxu0 0
        %489 = vmatprep.subr.bf16.mxu0 0
        %490 = vmatpush1.bf16.msra.mxu0 0
        %491 = vmatprep.subr.bf16.mxu0 0
        %492 = vmatpush1.bf16.msra.mxu0 0
        %493 = vmatprep.subr.bf16.mxu0 0
        %494 = vmatpush1.bf16.msra.mxu0 0
        %495 = vmatprep.subr.bf16.mxu0 0
        %496 = vmatpush1.bf16.msra.mxu0 0
        %497 = vmatprep.subr.bf16.mxu0 0
        %498 = vmatpush1.bf16.msra.mxu0 0
        %499 = vmatprep.mubr.bf16.mxu0 0
        %500 = vmatmul.mubr.bf16.gmra.mrb[0].mxu0 %v449
        %v501 = vpop.f32.mrb[0].mxu0
        %v502 = vadd.f32 0.0, %v501
        %v503 = vpop.f32.mrb[0].mxu0
        %v504 = vpop.f32.mrb[0].mxu0
        %v505 = vadd.f32 0.0, %v504
        %v506 = vpop.f32.mrb[0].mxu0
        %507 = vmatprep.mubr.bf16.mxu0 0
        %508 = vmatmul.mubr.bf16.gmra.mrb[0].mxu0 %v452
        %v509 = vpop.f32.mrb[0].mxu0
        %v510 = vadd.f32 0.0, %v509
        %v511 = vpop.f32.mrb[0].mxu0
        %v512 = vpop.f32.mrb[0].mxu0
        %v513 = vadd.f32 0.0, %v512
        %v514 = vpop.f32.mrb[0].mxu0
        %515 = vmatprep.mubr.bf16.mxu0 0
        %516 = vmatmul.mubr.bf16.gmra.mrb[0].mxu0 %v455
        %v517 = vpop.f32.mrb[0].mxu0
        %v518 = vadd.f32 0.0, %v517
        %v519 = vpop.f32.mrb[0].mxu0
        %v520 = vpop.f32.mrb[0].mxu0
        %v521 = vadd.f32 0.0, %v520
        %v522 = vpop.f32.mrb[0].mxu0
        %523 = vmatprep.mubr.bf16.mxu0 0
        %524 = vmatmul.mubr.bf16.gmra.mrb[0].mxu0 %v458
        %v525 = vpop.f32.mrb[0].mxu0
        %v526 = vadd.f32 0.0, %v525
        %v527 = vpop.f32.mrb[0].mxu0
        %v528 = vpop.f32.mrb[0].mxu0
        %v529 = vadd.f32 0.0, %v528
        %v530 = vpop.f32.mrb[0].mxu0
        %531 = vmatprep.mubr.bf16.mxu0 0
        %532 = vmatmul.mubr.bf16.gmra.mrb[0].mxu0 %v461
        %v533 = vpop.f32.mrb[0].mxu0
        %v534 = vadd.f32 0.0, %v533
        %v535 = vpop.f32.mrb[0].mxu0
        %v536 = vpop.f32.mrb[0].mxu0
        %v537 = vpop.f32.mrb[0].mxu0
        %538 = vdwg.mxu0
        %v548 = vunpack.c.l.b16 %v402
        %v549 = vunpack.c.l.b16 %v403
        %v550 = vunpack.c.l.b16 %v404
        %v551 = vunpack.c.l.b16 %v405
        %v552 = vunpack.c.l.b16 %v406
        %v553 = vunpack.c.l.b16 %v407
        %v554 = vunpack.c.l.b16 %v408
        %v555 = vunpack.c.l.b16 %v409
        %v556 = vunpack.c.l.b16 %v410
        %v557 = vpack.c.b16 %v549, %v548
        %v558 = vpack.c.b16 %v551, %v550
        %v559 = vpack.c.b16 %v553, %v552
        %v560 = vpack.c.b16 %v555, %v554
        %v561 = vpack.c.b16 %v556, %v556
        %v563 = vsel %vm447, %v557, 0
        %v566 = vsel %vm447, %v558, 0
        %v569 = vsel %vm447, %v559, 0
        %v572 = vsel %vm447, %v560, 0
        %v575 = vsel %vm447, %v561, 0
        %v578 = vsel %vm463, %v411, 0
        %580 = vmatprep.subr.bf16.mxu0 0
        %581 = vmatpush1.bf16.msra.mxu0 %v578
        %582 = vmatprep.subr.bf16.mxu0 0
        %583 = vmatpush1.bf16.msra.mxu0 0
        %584 = vmatprep.subr.bf16.mxu0 0
        %585 = vmatpush1.bf16.msra.mxu0 0
        %586 = vmatprep.subr.bf16.mxu0 0
        %587 = vmatpush1.bf16.msra.mxu0 0
        %588 = vmatprep.subr.bf16.mxu0 0
        %589 = vmatpush1.bf16.msra.mxu0 0
        %590 = vmatprep.subr.bf16.mxu0 0
        %591 = vmatpush1.bf16.msra.mxu0 0
        %592 = vmatprep.subr.bf16.mxu0 0
        %593 = vmatpush1.bf16.msra.mxu0 0
        %594 = vmatprep.subr.bf16.mxu0 0
        %595 = vmatpush1.bf16.msra.mxu0 0
        %596 = vmatprep.subr.bf16.mxu0 0
        %597 = vmatpush1.bf16.msra.mxu0 0
        %598 = vmatprep.subr.bf16.mxu0 0
        %599 = vmatpush1.bf16.msra.mxu0 0
        %600 = vmatprep.subr.bf16.mxu0 0
        %601 = vmatpush1.bf16.msra.mxu0 0
        %602 = vmatprep.subr.bf16.mxu0 0
        %603 = vmatpush1.bf16.msra.mxu0 0
        %604 = vmatprep.subr.bf16.mxu0 0
        %605 = vmatpush1.bf16.msra.mxu0 0
        %606 = vmatprep.subr.bf16.mxu0 0
        %607 = vmatpush1.bf16.msra.mxu0 0
        %608 = vmatprep.subr.bf16.mxu0 0
        %609 = vmatpush1.bf16.msra.mxu0 0
        %610 = vmatprep.subr.bf16.mxu0 0
        %611 = vmatpush1.bf16.msra.mxu0 0
        %612 = vmatprep.mubr.bf16.mxu0 0
        %613 = vmatmul.mubr.bf16.gmra.mrb[0].mxu0 %v563
        %v614 = vpop.f32.mrb[0].mxu0
        %v615 = vadd.f32 %v502, %v614
        %v616 = vpop.f32.mrb[0].mxu0
        %v617 = vpop.f32.mrb[0].mxu0
        %v618 = vadd.f32 %v505, %v617
        %v619 = vpop.f32.mrb[0].mxu0
        %620 = vmatprep.mubr.bf16.mxu0 0
        %621 = vmatmul.mubr.bf16.gmra.mrb[0].mxu0 %v566
        %v622 = vpop.f32.mrb[0].mxu0
        %v623 = vadd.f32 %v510, %v622
        %v624 = vpop.f32.mrb[0].mxu0
        %v625 = vpop.f32.mrb[0].mxu0
        %v626 = vadd.f32 %v513, %v625
        %v627 = vpop.f32.mrb[0].mxu0
        %628 = vmatprep.mubr.bf16.mxu0 0
        %629 = vmatmul.mubr.bf16.gmra.mrb[0].mxu0 %v569
        %v630 = vpop.f32.mrb[0].mxu0
        %v631 = vadd.f32 %v518, %v630
        %v632 = vpop.f32.mrb[0].mxu0
        %v633 = vpop.f32.mrb[0].mxu0
        %v634 = vadd.f32 %v521, %v633
        %v635 = vpop.f32.mrb[0].mxu0
        %636 = vmatprep.mubr.bf16.mxu0 0
        %637 = vmatmul.mubr.bf16.gmra.mrb[0].mxu0 %v572
        %v638 = vpop.f32.mrb[0].mxu0
        %v639 = vadd.f32 %v526, %v638
        %v640 = vpop.f32.mrb[0].mxu0
        %v641 = vpop.f32.mrb[0].mxu0
        %v642 = vadd.f32 %v529, %v641
        %v643 = vpop.f32.mrb[0].mxu0
        %644 = vmatprep.mubr.bf16.mxu0 0
        %645 = vmatmul.mubr.bf16.gmra.mrb[0].mxu0 %v575
        %v646 = vpop.f32.mrb[0].mxu0
        %v647 = vadd.f32 %v534, %v646
        %v648 = vpop.f32.mrb[0].mxu0
        %v649 = vpop.f32.mrb[0].mxu0
        %v650 = vpop.f32.mrb[0].mxu0
        %651 = vdwg.mxu0
        %v652 = vld [vmem:[%s375] sm:$0xf]
        %v653 = vld [vmem:[%s375 + $0x4] sm:$0xf]
        %v654 = vld [vmem:[%s375 + $0x8] sm:$0xf]
        %v655 = vld [vmem:[%s375 + $0xc] sm:$0xf]
        %v656 = vld [vmem:[%s375 + $0x10] sm:$0xf]
        %v657 = vld [vmem:[%s375 + $0x14] sm:$0xf]
        %v658 = vld [vmem:[%s375 + $0x18] sm:$0xf]
        %v659 = vld [vmem:[%s375 + $0x1c] sm:$0xf]
        %v660 = vld [vmem:[%s375 + $0x20] sm:$0xf]
        %v661 = vld [vmem:[%s375 + $0x24] sm:$0x1]
        %s662 = scalar_lea.vmem %s1, 4
        %v663 = vld [vmem:[%s662] sm:$0x3]
        %v674 = vunpack.c.l.b16 %v652
        %v675 = vunpack.c.l.b16 %v653
        %v676 = vunpack.c.l.b16 %v654
        %v677 = vunpack.c.l.b16 %v655
        %v678 = vunpack.c.l.b16 %v656
        %v679 = vunpack.c.l.b16 %v657
        %v680 = vunpack.c.l.b16 %v658
        %v681 = vunpack.c.l.b16 %v659
        %v682 = vunpack.c.l.b16 %v660
        %v683 = vunpack.c.l.b16 %v661
        %v684 = vpack.c.b16 %v675, %v674
        %v685 = vpack.c.b16 %v677, %v676
        %v686 = vpack.c.b16 %v679, %v678
        %v687 = vpack.c.b16 %v681, %v680
        %v688 = vpack.c.b16 %v683, %v682
        %vm689 = vsmask.f32 7424
        %v691 = vshrl.u32 %v684, 16
        %v693 = vshll.u32 %v684, 16
        %v695 = vrot.slane %v693, 1
        %v696 = vor.u32 %v691, %v695
        %v698 = vshll.u32 %v685, 16
        %v700 = vrot.slane %v698, 1
        %v701 = vsel %vm689, %v696, %v700
        %v702 = vshrl.u32 %v685, 16
        %v704 = vor.u32 %v702, %v700
        %v706 = vshll.u32 %v686, 16
        %v708 = vrot.slane %v706, 1
        %v709 = vsel %vm689, %v704, %v708
        %v710 = vshrl.u32 %v686, 16
        %v712 = vor.u32 %v710, %v708
        %v714 = vshll.u32 %v687, 16
        %v716 = vrot.slane %v714, 1
        %v717 = vsel %vm689, %v712, %v716
        %v718 = vshrl.u32 %v687, 16
        %v720 = vor.u32 %v718, %v716
        %v722 = vshll.u32 %v688, 16
        %v724 = vrot.slane %v722, 1
        %v725 = vsel %vm689, %v720, %v724
        %v726 = vshrl.u32 %v688, 16
        %v728 = vor.u32 %v726, %v724
        %v730 = vsel %vm447, %v701, 0
        %v733 = vsel %vm447, %v709, 0
        %v736 = vsel %vm447, %v717, 0
        %v739 = vsel %vm447, %v725, 0
        %v742 = vsel %vm447, %v728, 0
        %v745 = vsel %vm463, %v663, 0
        %747 = vmatprep.subr.bf16.mxu0 0
        %748 = vmatpush1.bf16.msra.mxu0 %v745
        %749 = vmatprep.subr.bf16.mxu0 0
        %750 = vmatpush1.bf16.msra.mxu0 0
        %751 = vmatprep.subr.bf16.mxu0 0
        %752 = vmatpush1.bf16.msra.mxu0 0
        %753 = vmatprep.subr.bf16.mxu0 0
        %754 = vmatpush1.bf16.msra.mxu0 0
        %755 = vmatprep.subr.bf16.mxu0 0
        %756 = vmatpush1.bf16.msra.mxu0 0
        %757 = vmatprep.subr.bf16.mxu0 0
        %758 = vmatpush1.bf16.msra.mxu0 0
        %759 = vmatprep.subr.bf16.mxu0 0
        %760 = vmatpush1.bf16.msra.mxu0 0
        %761 = vmatprep.subr.bf16.mxu0 0
        %762 = vmatpush1.bf16.msra.mxu0 0
        %763 = vmatprep.subr.bf16.mxu0 0
        %764 = vmatpush1.bf16.msra.mxu0 0
        %765 = vmatprep.subr.bf16.mxu0 0
        %766 = vmatpush1.bf16.msra.mxu0 0
        %767 = vmatprep.subr.bf16.mxu0 0
        %768 = vmatpush1.bf16.msra.mxu0 0
        %769 = vmatprep.subr.bf16.mxu0 0
        %770 = vmatpush1.bf16.msra.mxu0 0
        %771 = vmatprep.subr.bf16.mxu0 0
        %772 = vmatpush1.bf16.msra.mxu0 0
        %773 = vmatprep.subr.bf16.mxu0 0
        %774 = vmatpush1.bf16.msra.mxu0 0
        %775 = vmatprep.subr.bf16.mxu0 0
        %776 = vmatpush1.bf16.msra.mxu0 0
        %777 = vmatprep.subr.bf16.mxu0 0
        %778 = vmatpush1.bf16.msra.mxu0 0
        %779 = vmatprep.mubr.bf16.mxu0 0
        %780 = vmatmul.mubr.bf16.gmra.mrb[0].mxu0 %v730
        %v781 = vpop.f32.mrb[0].mxu0
        %v782 = vadd.f32 0.0, %v781
        %v783 = vpop.f32.mrb[0].mxu0
        %v784 = vpop.f32.mrb[0].mxu0
        %v785 = vadd.f32 0.0, %v784
        %v786 = vpop.f32.mrb[0].mxu0
        %787 = vmatprep.mubr.bf16.mxu0 0
        %788 = vmatmul.mubr.bf16.gmra.mrb[0].mxu0 %v733
        %v789 = vpop.f32.mrb[0].mxu0
        %v790 = vadd.f32 0.0, %v789
        %v791 = vpop.f32.mrb[0].mxu0
        %v792 = vpop.f32.mrb[0].mxu0
        %v793 = vadd.f32 0.0, %v792
        %v794 = vpop.f32.mrb[0].mxu0
        %795 = vmatprep.mubr.bf16.mxu0 0
        %796 = vmatmul.mubr.bf16.gmra.mrb[0].mxu0 %v736
        %v797 = vpop.f32.mrb[0].mxu0
        %v798 = vadd.f32 0.0, %v797
        %v799 = vpop.f32.mrb[0].mxu0
        %v800 = vpop.f32.mrb[0].mxu0
        %v801 = vadd.f32 0.0, %v800
        %v802 = vpop.f32.mrb[0].mxu0
        %803 = vmatprep.mubr.bf16.mxu0 0
        %804 = vmatmul.mubr.bf16.gmra.mrb[0].mxu0 %v739
        %v805 = vpop.f32.mrb[0].mxu0
        %v806 = vadd.f32 0.0, %v805
        %v807 = vpop.f32.mrb[0].mxu0
        %v808 = vpop.f32.mrb[0].mxu0
        %v809 = vadd.f32 0.0, %v808
        %v810 = vpop.f32.mrb[0].mxu0
        %811 = vmatprep.mubr.bf16.mxu0 0
        %812 = vmatmul.mubr.bf16.gmra.mrb[0].mxu0 %v742
        %v813 = vpop.f32.mrb[0].mxu0
        %v814 = vadd.f32 0.0, %v813
        %v815 = vpop.f32.mrb[0].mxu0
        %v816 = vpop.f32.mrb[0].mxu0
        %v817 = vpop.f32.mrb[0].mxu0
        %818 = vdwg.mxu0
        %v819 = vadd.f32 %v615, %v782
        %v820 = vadd.f32 %v618, %v785
        %v821 = vadd.f32 %v623, %v790
        %v822 = vadd.f32 %v626, %v793
        %v823 = vadd.f32 %v631, %v798
        %v824 = vadd.f32 %v634, %v801
        %v825 = vadd.f32 %v639, %v806
        %v826 = vadd.f32 %v642, %v809
        %v827 = vadd.f32 %v647, %v814
        %s828 = scalar_lea.vmem %s375, 96 [#allocation2]
        %v829 = vld [vmem:[%s828] sm:$0xf]
        %v830 = vld [vmem:[%s828 + $0x4] sm:$0xf]
        %v831 = vld [vmem:[%s828 + $0x8] sm:$0xf]
        %v832 = vld [vmem:[%s828 + $0xc] sm:$0xf]
        %v833 = vld [vmem:[%s828 + $0x10] sm:$0xf]
        %v834 = vld [vmem:[%s828 + $0x14] sm:$0xf]
        %v835 = vld [vmem:[%s828 + $0x18] sm:$0xf]
        %v836 = vld [vmem:[%s828 + $0x1c] sm:$0xf]
        %v837 = vld [vmem:[%s828 + $0x20] sm:$0xf]
        %s838 = scalar_lea.vmem %s1, 6
        %v839 = vld [vmem:[%s838] sm:$0x3]
        %v849 = vunpack.c.l.b16 %v829
        %v850 = vunpack.c.l.b16 %v830
        %v851 = vunpack.c.l.b16 %v831
        %v852 = vunpack.c.l.b16 %v832
        %v853 = vunpack.c.l.b16 %v833
        %v854 = vunpack.c.l.b16 %v834
        %v855 = vunpack.c.l.b16 %v835
        %v856 = vunpack.c.l.b16 %v836
        %v857 = vunpack.c.l.b16 %v837
        %v858 = vpack.c.b16 %v850, %v849
        %v859 = vpack.c.b16 %v852, %v851
        %v860 = vpack.c.b16 %v854, %v853
        %v861 = vpack.c.b16 %v856, %v855
        %v862 = vpack.c.b16 %v857, %v857
        %v864 = vsel %vm447, %v858, 0
        %v867 = vsel %vm447, %v859, 0
        %v870 = vsel %vm447, %v860, 0
        %v873 = vsel %vm447, %v861, 0
        %v876 = vsel %vm447, %v862, 0
        %v879 = vsel %vm463, %v839, 0
        %881 = vmatprep.subr.bf16.mxu0 0
        %882 = vmatpush1.bf16.msra.mxu0 %v879
        %883 = vmatprep.subr.bf16.mxu0 0
        %884 = vmatpush1.bf16.msra.mxu0 0
        %885 = vmatprep.subr.bf16.mxu0 0
        %886 = vmatpush1.bf16.msra.mxu0 0
        %887 = vmatprep.subr.bf16.mxu0 0
        %888 = vmatpush1.bf16.msra.mxu0 0
        %889 = vmatprep.subr.bf16.mxu0 0
        %890 = vmatpush1.bf16.msra.mxu0 0
        %891 = vmatprep.subr.bf16.mxu0 0
        %892 = vmatpush1.bf16.msra.mxu0 0
        %893 = vmatprep.subr.bf16.mxu0 0
        %894 = vmatpush1.bf16.msra.mxu0 0
        %895 = vmatprep.subr.bf16.mxu0 0
        %896 = vmatpush1.bf16.msra.mxu0 0
        %897 = vmatprep.subr.bf16.mxu0 0
        %898 = vmatpush1.bf16.msra.mxu0 0
        %899 = vmatprep.subr.bf16.mxu0 0
        %900 = vmatpush1.bf16.msra.mxu0 0
        %901 = vmatprep.subr.bf16.mxu0 0
        %902 = vmatpush1.bf16.msra.mxu0 0
        %903 = vmatprep.subr.bf16.mxu0 0
        %904 = vmatpush1.bf16.msra.mxu0 0
        %905 = vmatprep.subr.bf16.mxu0 0
        %906 = vmatpush1.bf16.msra.mxu0 0
        %907 = vmatprep.subr.bf16.mxu0 0
        %908 = vmatpush1.bf16.msra.mxu0 0
        %909 = vmatprep.subr.bf16.mxu0 0
        %910 = vmatpush1.bf16.msra.mxu0 0
        %911 = vmatprep.subr.bf16.mxu0 0
        %912 = vmatpush1.bf16.msra.mxu0 0
        %913 = vmatprep.mubr.bf16.mxu0 0
        %914 = vmatmul.mubr.bf16.gmra.mrb[0].mxu0 %v864
        %v915 = vpop.f32.mrb[0].mxu0
        %v916 = vadd.f32 0.0, %v915
        %v917 = vpop.f32.mrb[0].mxu0
        %v918 = vpop.f32.mrb[0].mxu0
        %v919 = vadd.f32 0.0, %v918
        %v920 = vpop.f32.mrb[0].mxu0
        %921 = vmatprep.mubr.bf16.mxu0 0
        %922 = vmatmul.mubr.bf16.gmra.mrb[0].mxu0 %v867
        %v923 = vpop.f32.mrb[0].mxu0
        %v924 = vadd.f32 0.0, %v923
        %v925 = vpop.f32.mrb[0].mxu0
        %v926 = vpop.f32.mrb[0].mxu0
        %v927 = vadd.f32 0.0, %v926
        %v928 = vpop.f32.mrb[0].mxu0
        %929 = vmatprep.mubr.bf16.mxu0 0
        %930 = vmatmul.mubr.bf16.gmra.mrb[0].mxu0 %v870
        %v931 = vpop.f32.mrb[0].mxu0
        %v932 = vadd.f32 0.0, %v931
        %v933 = vpop.f32.mrb[0].mxu0
        %v934 = vpop.f32.mrb[0].mxu0
        %v935 = vadd.f32 0.0, %v934
        %v936 = vpop.f32.mrb[0].mxu0
        %937 = vmatprep.mubr.bf16.mxu0 0
        %938 = vmatmul.mubr.bf16.gmra.mrb[0].mxu0 %v873
        %v939 = vpop.f32.mrb[0].mxu0
        %v940 = vadd.f32 0.0, %v939
        %v941 = vpop.f32.mrb[0].mxu0
        %v942 = vpop.f32.mrb[0].mxu0
        %v943 = vadd.f32 0.0, %v942
        %v944 = vpop.f32.mrb[0].mxu0
        %945 = vmatprep.mubr.bf16.mxu0 0
        %946 = vmatmul.mubr.bf16.gmra.mrb[0].mxu0 %v876
        %v947 = vpop.f32.mrb[0].mxu0
        %v948 = vadd.f32 0.0, %v947
        %v949 = vpop.f32.mrb[0].mxu0
        %v950 = vpop.f32.mrb[0].mxu0
        %v951 = vpop.f32.mrb[0].mxu0
        %952 = vdwg.mxu0
        %v953 = vadd.f32 %v819, %v916
        %v954 = vadd.f32 %v820, %v919
        %v955 = vadd.f32 %v821, %v924
        %v956 = vadd.f32 %v822, %v927
        %v957 = vadd.f32 %v823, %v932
        %v958 = vadd.f32 %v824, %v935
        %v959 = vadd.f32 %v825, %v940
        %v960 = vadd.f32 %v826, %v943
        %v961 = vadd.f32 %v827, %v948
        %s962 = scalar_lea.vmem %s375, 144 [#allocation2]
        %v963 = vld [vmem:[%s962] sm:$0xf]
        %v964 = vld [vmem:[%s962 + $0x4] sm:$0xf]
        %v965 = vld [vmem:[%s962 + $0x8] sm:$0xf]
        %v966 = vld [vmem:[%s962 + $0xc] sm:$0xf]
        %v967 = vld [vmem:[%s962 + $0x10] sm:$0xf]
        %v968 = vld [vmem:[%s962 + $0x14] sm:$0xf]
        %v969 = vld [vmem:[%s962 + $0x18] sm:$0xf]
        %v970 = vld [vmem:[%s962 + $0x1c] sm:$0xf]
        %v971 = vld [vmem:[%s962 + $0x20] sm:$0xf]
        %s972 = scalar_lea.vmem %s1, 8
        %v973 = vld [vmem:[%s972] sm:$0x3]
        %v983 = vunpack.c.l.b16 %v963
        %v984 = vunpack.c.l.b16 %v964
        %v985 = vunpack.c.l.b16 %v965
        %v986 = vunpack.c.l.b16 %v966
        %v987 = vunpack.c.l.b16 %v967
        %v988 = vunpack.c.l.b16 %v968
        %v989 = vunpack.c.l.b16 %v969
        %v990 = vunpack.c.l.b16 %v970
        %v991 = vunpack.c.l.b16 %v971
        %v992 = vpack.c.b16 %v984, %v983
        %v993 = vpack.c.b16 %v986, %v985
        %v994 = vpack.c.b16 %v988, %v987
        %v995 = vpack.c.b16 %v990, %v989
        %v996 = vpack.c.b16 %v991, %v991
        %v998 = vsel %vm447, %v992, 0
        %v1001 = vsel %vm447, %v993, 0
        %v1004 = vsel %vm447, %v994, 0
        %v1007 = vsel %vm447, %v995, 0
        %v1010 = vsel %vm447, %v996, 0
        %v1013 = vsel %vm463, %v973, 0
        %1015 = vmatprep.subr.bf16.mxu0 0
        %1016 = vmatpush1.bf16.msra.mxu0 %v1013
        %1017 = vmatprep.subr.bf16.mxu0 0
        %1018 = vmatpush1.bf16.msra.mxu0 0
        %1019 = vmatprep.subr.bf16.mxu0 0
        %1020 = vmatpush1.bf16.msra.mxu0 0
        %1021 = vmatprep.subr.bf16.mxu0 0
        %1022 = vmatpush1.bf16.msra.mxu0 0
        %1023 = vmatprep.subr.bf16.mxu0 0
        %1024 = vmatpush1.bf16.msra.mxu0 0
        %1025 = vmatprep.subr.bf16.mxu0 0
        %1026 = vmatpush1.bf16.msra.mxu0 0
        %1027 = vmatprep.subr.bf16.mxu0 0
        %1028 = vmatpush1.bf16.msra.mxu0 0
        %1029 = vmatprep.subr.bf16.mxu0 0
        %1030 = vmatpush1.bf16.msra.mxu0 0
        %1031 = vmatprep.subr.bf16.mxu0 0
        %1032 = vmatpush1.bf16.msra.mxu0 0
        %1033 = vmatprep.subr.bf16.mxu0 0
        %1034 = vmatpush1.bf16.msra.mxu0 0
        %1035 = vmatprep.subr.bf16.mxu0 0
        %1036 = vmatpush1.bf16.msra.mxu0 0
        %1037 = vmatprep.subr.bf16.mxu0 0
        %1038 = vmatpush1.bf16.msra.mxu0 0
        %1039 = vmatprep.subr.bf16.mxu0 0
        %1040 = vmatpush1.bf16.msra.mxu0 0
        %1041 = vmatprep.subr.bf16.mxu0 0
        %1042 = vmatpush1.bf16.msra.mxu0 0
        %1043 = vmatprep.subr.bf16.mxu0 0
        %1044 = vmatpush1.bf16.msra.mxu0 0
        %1045 = vmatprep.subr.bf16.mxu0 0
        %1046 = vmatpush1.bf16.msra.mxu0 0
        %1047 = vmatprep.mubr.bf16.mxu0 0
        %1048 = vmatmul.mubr.bf16.gmra.mrb[0].mxu0 %v998
        %v1049 = vpop.f32.mrb[0].mxu0
        %v1050 = vadd.f32 0.0, %v1049
        %v1051 = vpop.f32.mrb[0].mxu0
        %v1052 = vpop.f32.mrb[0].mxu0
        %v1053 = vadd.f32 0.0, %v1052
        %v1054 = vpop.f32.mrb[0].mxu0
        %1055 = vmatprep.mubr.bf16.mxu0 0
        %1056 = vmatmul.mubr.bf16.gmra.mrb[0].mxu0 %v1001
        %v1057 = vpop.f32.mrb[0].mxu0
        %v1058 = vadd.f32 0.0, %v1057
        %v1059 = vpop.f32.mrb[0].mxu0
        %v1060 = vpop.f32.mrb[0].mxu0
        %v1061 = vadd.f32 0.0, %v1060
        %v1062 = vpop.f32.mrb[0].mxu0
        %1063 = vmatprep.mubr.bf16.mxu0 0
        %1064 = vmatmul.mubr.bf16.gmra.mrb[0].mxu0 %v1004
        %v1065 = vpop.f32.mrb[0].mxu0
        %v1066 = vadd.f32 0.0, %v1065
        %v1067 = vpop.f32.mrb[0].mxu0
        %v1068 = vpop.f32.mrb[0].mxu0
        %v1069 = vadd.f32 0.0, %v1068
        %v1070 = vpop.f32.mrb[0].mxu0
        %1071 = vmatprep.mubr.bf16.mxu0 0
        %1072 = vmatmul.mubr.bf16.gmra.mrb[0].mxu0 %v1007
        %v1073 = vpop.f32.mrb[0].mxu0
        %v1074 = vadd.f32 0.0, %v1073
        %v1075 = vpop.f32.mrb[0].mxu0
        %v1076 = vpop.f32.mrb[0].mxu0
        %v1077 = vadd.f32 0.0, %v1076
        %v1078 = vpop.f32.mrb[0].mxu0
        %1079 = vmatprep.mubr.bf16.mxu0 0
        %1080 = vmatmul.mubr.bf16.gmra.mrb[0].mxu0 %v1010
        %v1081 = vpop.f32.mrb[0].mxu0
        %v1082 = vadd.f32 0.0, %v1081
        %v1083 = vpop.f32.mrb[0].mxu0
        %v1084 = vpop.f32.mrb[0].mxu0
        %v1085 = vpop.f32.mrb[0].mxu0
        %1086 = vdwg.mxu0
        %v1087 = vadd.f32 %v953, %v1050
        %v1088 = vadd.f32 %v954, %v1053
        %v1089 = vadd.f32 %v955, %v1058
        %v1090 = vadd.f32 %v956, %v1061
        %v1091 = vadd.f32 %v957, %v1066
        %v1092 = vadd.f32 %v958, %v1069
        %v1093 = vadd.f32 %v959, %v1074
        %v1094 = vadd.f32 %v960, %v1077
        %v1095 = vadd.f32 %v961, %v1082
        %v1096 = vld [vmem:[%s828] sm:$0xf]
        %v1097 = vld [vmem:[%s828 + $0x4] sm:$0xf]
        %v1098 = vld [vmem:[%s828 + $0x8] sm:$0xf]
        %v1099 = vld [vmem:[%s828 + $0xc] sm:$0xf]
        %v1100 = vld [vmem:[%s828 + $0x10] sm:$0xf]
        %v1101 = vld [vmem:[%s828 + $0x14] sm:$0xf]
        %v1102 = vld [vmem:[%s828 + $0x18] sm:$0xf]
        %v1103 = vld [vmem:[%s828 + $0x1c] sm:$0xf]
        %v1104 = vld [vmem:[%s828 + $0x20] sm:$0xf]
        %v1105 = vld [vmem:[%s828 + $0x24] sm:$0x1]
        %s1106 = scalar_lea.vmem %s1, 10
        %v1107 = vld [vmem:[%s1106] sm:$0x3]
        %v1118 = vunpack.c.l.b16 %v1096
        %v1119 = vunpack.c.l.b16 %v1097
        %v1120 = vunpack.c.l.b16 %v1098
        %v1121 = vunpack.c.l.b16 %v1099
        %v1122 = vunpack.c.l.b16 %v1100
        %v1123 = vunpack.c.l.b16 %v1101
        %v1124 = vunpack.c.l.b16 %v1102
        %v1125 = vunpack.c.l.b16 %v1103
        %v1126 = vunpack.c.l.b16 %v1104
        %v1127 = vunpack.c.l.b16 %v1105
        %v1128 = vpack.c.b16 %v1119, %v1118
        %v1129 = vpack.c.b16 %v1121, %v1120
        %v1130 = vpack.c.b16 %v1123, %v1122
        %v1131 = vpack.c.b16 %v1125, %v1124
        %v1132 = vpack.c.b16 %v1127, %v1126
        %v1134 = vshrl.u32 %v1128, 16
        %v1136 = vshll.u32 %v1128, 16
        %v1138 = vrot.slane %v1136, 1
        %v1139 = vor.u32 %v1134, %v1138
        %v1141 = vshll.u32 %v1129, 16
        %v1143 = vrot.slane %v1141, 1
        %v1144 = vsel %vm689, %v1139, %v1143
        %v1145 = vshrl.u32 %v1129, 16
        %v1147 = vor.u32 %v1145, %v1143
        %v1149 = vshll.u32 %v1130, 16
        %v1151 = vrot.slane %v1149, 1
        %v1152 = vsel %vm689, %v1147, %v1151
        %v1153 = vshrl.u32 %v1130, 16
        %v1155 = vor.u32 %v1153, %v1151
        %v1157 = vshll.u32 %v1131, 16
        %v1159 = vrot.slane %v1157, 1
        %v1160 = vsel %vm689, %v1155, %v1159
        %v1161 = vshrl.u32 %v1131, 16
        %v1163 = vor.u32 %v1161, %v1159
        %v1165 = vshll.u32 %v1132, 16
        %v1167 = vrot.slane %v1165, 1
        %v1168 = vsel %vm689, %v1163, %v1167
        %v1169 = vshrl.u32 %v1132, 16
        %v1171 = vor.u32 %v1169, %v1167
        %v1173 = vsel %vm447, %v1144, 0
        %v1176 = vsel %vm447, %v1152, 0
        %v1179 = vsel %vm447, %v1160, 0
        %v1182 = vsel %vm447, %v1168, 0
        %v1185 = vsel %vm447, %v1171, 0
        %v1188 = vsel %vm463, %v1107, 0
        %1190 = vmatprep.subr.bf16.mxu0 0
        %1191 = vmatpush1.bf16.msra.mxu0 %v1188
        %1192 = vmatprep.subr.bf16.mxu0 0
        %1193 = vmatpush1.bf16.msra.mxu0 0
        %1194 = vmatprep.subr.bf16.mxu0 0
        %1195 = vmatpush1.bf16.msra.mxu0 0
        %1196 = vmatprep.subr.bf16.mxu0 0
        %1197 = vmatpush1.bf16.msra.mxu0 0
        %1198 = vmatprep.subr.bf16.mxu0 0
        %1199 = vmatpush1.bf16.msra.mxu0 0
        %1200 = vmatprep.subr.bf16.mxu0 0
        %1201 = vmatpush1.bf16.msra.mxu0 0
        %1202 = vmatprep.subr.bf16.mxu0 0
        %1203 = vmatpush1.bf16.msra.mxu0 0
        %1204 = vmatprep.subr.bf16.mxu0 0
        %1205 = vmatpush1.bf16.msra.mxu0 0
        %1206 = vmatprep.subr.bf16.mxu0 0
        %1207 = vmatpush1.bf16.msra.mxu0 0
        %1208 = vmatprep.subr.bf16.mxu0 0
        %1209 = vmatpush1.bf16.msra.mxu0 0
        %1210 = vmatprep.subr.bf16.mxu0 0
        %1211 = vmatpush1.bf16.msra.mxu0 0
        %1212 = vmatprep.subr.bf16.mxu0 0
        %1213 = vmatpush1.bf16.msra.mxu0 0
        %1214 = vmatprep.subr.bf16.mxu0 0
        %1215 = vmatpush1.bf16.msra.mxu0 0
        %1216 = vmatprep.subr.bf16.mxu0 0
        %1217 = vmatpush1.bf16.msra.mxu0 0
        %1218 = vmatprep.subr.bf16.mxu0 0
        %1219 = vmatpush1.bf16.msra.mxu0 0
        %1220 = vmatprep.subr.bf16.mxu0 0
        %1221 = vmatpush1.bf16.msra.mxu0 0
        %1222 = vmatprep.mubr.bf16.mxu0 0
        %1223 = vmatmul.mubr.bf16.gmra.mrb[0].mxu0 %v1173
        %v1224 = vpop.f32.mrb[0].mxu0
        %v1225 = vadd.f32 0.0, %v1224
        %v1226 = vpop.f32.mrb[0].mxu0
        %v1227 = vpop.f32.mrb[0].mxu0
        %v1228 = vadd.f32 0.0, %v1227
        %v1229 = vpop.f32.mrb[0].mxu0
        %1230 = vmatprep.mubr.bf16.mxu0 0
        %1231 = vmatmul.mubr.bf16.gmra.mrb[0].mxu0 %v1176
        %v1232 = vpop.f32.mrb[0].mxu0
        %v1233 = vadd.f32 0.0, %v1232
        %v1234 = vpop.f32.mrb[0].mxu0
        %v1235 = vpop.f32.mrb[0].mxu0
        %v1236 = vadd.f32 0.0, %v1235
        %v1237 = vpop.f32.mrb[0].mxu0
        %1238 = vmatprep.mubr.bf16.mxu0 0
        %1239 = vmatmul.mubr.bf16.gmra.mrb[0].mxu0 %v1179
        %v1240 = vpop.f32.mrb[0].mxu0
        %v1241 = vadd.f32 0.0, %v1240
        %v1242 = vpop.f32.mrb[0].mxu0
        %v1243 = vpop.f32.mrb[0].mxu0
        %v1244 = vadd.f32 0.0, %v1243
        %v1245 = vpop.f32.mrb[0].mxu0
        %1246 = vmatprep.mubr.bf16.mxu0 0
        %1247 = vmatmul.mubr.bf16.gmra.mrb[0].mxu0 %v1182
        %v1248 = vpop.f32.mrb[0].mxu0
        %v1249 = vadd.f32 0.0, %v1248
        %v1250 = vpop.f32.mrb[0].mxu0
        %v1251 = vpop.f32.mrb[0].mxu0
        %v1252 = vadd.f32 0.0, %v1251
        %v1253 = vpop.f32.mrb[0].mxu0
        %1254 = vmatprep.mubr.bf16.mxu0 0
        %1255 = vmatmul.mubr.bf16.gmra.mrb[0].mxu0 %v1185
        %v1256 = vpop.f32.mrb[0].mxu0
        %v1257 = vadd.f32 0.0, %v1256
        %v1258 = vpop.f32.mrb[0].mxu0
        %v1259 = vpop.f32.mrb[0].mxu0
        %v1260 = vpop.f32.mrb[0].mxu0
        %1261 = vdwg.mxu0
        %v1262 = vadd.f32 %v1087, %v1225
        %v1263 = vadd.f32 %v1088, %v1228
        %v1264 = vadd.f32 %v1089, %v1233
        %v1265 = vadd.f32 %v1090, %v1236
        %v1266 = vadd.f32 %v1091, %v1241
        %v1267 = vadd.f32 %v1092, %v1244
        %v1268 = vadd.f32 %v1093, %v1249
        %v1269 = vadd.f32 %v1094, %v1252
        %v1270 = vadd.f32 %v1095, %v1257
        %v1271 = vld [vmem:[%s375 + $0x4] sm:$0xf]
        %v1272 = vld [vmem:[%s375 + $0x8] sm:$0xf]
        %v1273 = vld [vmem:[%s375 + $0xc] sm:$0xf]
        %v1274 = vld [vmem:[%s375 + $0x10] sm:$0xf]
        %v1275 = vld [vmem:[%s375 + $0x14] sm:$0xf]
        %v1276 = vld [vmem:[%s375 + $0x18] sm:$0xf]
        %v1277 = vld [vmem:[%s375 + $0x1c] sm:$0xf]
        %v1278 = vld [vmem:[%s375 + $0x20] sm:$0xf]
        %v1279 = vld [vmem:[%s375 + $0x24] sm:$0xf]
        %v1280 = vld [vmem:[%s375 + $0x28] sm:$0x1]
        %s1281 = scalar_lea.vmem %s1, 12
        %v1282 = vld [vmem:[%s1281] sm:$0x3]
        %v1293 = vunpack.c.l.b16 %v1271
        %v1294 = vunpack.c.l.b16 %v1272
        %v1295 = vunpack.c.l.b16 %v1273
        %v1296 = vunpack.c.l.b16 %v1274
        %v1297 = vunpack.c.l.b16 %v1275
        %v1298 = vunpack.c.l.b16 %v1276
        %v1299 = vunpack.c.l.b16 %v1277
        %v1300 = vunpack.c.l.b16 %v1278
        %v1301 = vunpack.c.l.b16 %v1279
        %v1302 = vunpack.c.l.b16 %v1280
        %v1303 = vpack.c.b16 %v1294, %v1293
        %v1304 = vpack.c.b16 %v1296, %v1295
        %v1305 = vpack.c.b16 %v1298, %v1297
        %v1306 = vpack.c.b16 %v1300, %v1299
        %v1307 = vpack.c.b16 %v1302, %v1301
        %v1309 = vshrl.u32 %v1303, 16
        %v1311 = vshll.u32 %v1303, 16
        %v1313 = vrot.slane %v1311, 1
        %v1314 = vor.u32 %v1309, %v1313
        %v1316 = vshll.u32 %v1304, 16
        %v1318 = vrot.slane %v1316, 1
        %v1319 = vsel %vm689, %v1314, %v1318
        %v1320 = vshrl.u32 %v1304, 16
        %v1322 = vor.u32 %v1320, %v1318
        %v1324 = vshll.u32 %v1305, 16
        %v1326 = vrot.slane %v1324, 1
        %v1327 = vsel %vm689, %v1322, %v1326
        %v1328 = vshrl.u32 %v1305, 16
        %v1330 = vor.u32 %v1328, %v1326
        %v1332 = vshll.u32 %v1306, 16
        %v1334 = vrot.slane %v1332, 1
        %v1335 = vsel %vm689, %v1330, %v1334
        %v1336 = vshrl.u32 %v1306, 16
        %v1338 = vor.u32 %v1336, %v1334
        %v1340 = vshll.u32 %v1307, 16
        %v1342 = vrot.slane %v1340, 1
        %v1343 = vsel %vm689, %v1338, %v1342
        %v1344 = vshrl.u32 %v1307, 16
        %v1346 = vor.u32 %v1344, %v1342
        %v1348 = vsel %vm447, %v1319, 0
        %v1351 = vsel %vm447, %v1327, 0
        %v1354 = vsel %vm447, %v1335, 0
        %v1357 = vsel %vm447, %v1343, 0
        %v1360 = vsel %vm447, %v1346, 0
        %v1363 = vsel %vm463, %v1282, 0
        %1365 = vmatprep.subr.bf16.mxu0 0
        %1366 = vmatpush1.bf16.msra.mxu0 %v1363
        %1367 = vmatprep.subr.bf16.mxu0 0
        %1368 = vmatpush1.bf16.msra.mxu0 0
        %1369 = vmatprep.subr.bf16.mxu0 0
        %1370 = vmatpush1.bf16.msra.mxu0 0
        %1371 = vmatprep.subr.bf16.mxu0 0
        %1372 = vmatpush1.bf16.msra.mxu0 0
        %1373 = vmatprep.subr.bf16.mxu0 0
        %1374 = vmatpush1.bf16.msra.mxu0 0
        %1375 = vmatprep.subr.bf16.mxu0 0
        %1376 = vmatpush1.bf16.msra.mxu0 0
        %1377 = vmatprep.subr.bf16.mxu0 0
        %1378 = vmatpush1.bf16.msra.mxu0 0
        %1379 = vmatprep.subr.bf16.mxu0 0
        %1380 = vmatpush1.bf16.msra.mxu0 0
        %1381 = vmatprep.subr.bf16.mxu0 0
        %1382 = vmatpush1.bf16.msra.mxu0 0
        %1383 = vmatprep.subr.bf16.mxu0 0
        %1384 = vmatpush1.bf16.msra.mxu0 0
        %1385 = vmatprep.subr.bf16.mxu0 0
        %1386 = vmatpush1.bf16.msra.mxu0 0
        %1387 = vmatprep.subr.bf16.mxu0 0
        %1388 = vmatpush1.bf16.msra.mxu0 0
        %1389 = vmatprep.subr.bf16.mxu0 0
        %1390 = vmatpush1.bf16.msra.mxu0 0
        %1391 = vmatprep.subr.bf16.mxu0 0
        %1392 = vmatpush1.bf16.msra.mxu0 0
        %1393 = vmatprep.subr.bf16.mxu0 0
        %1394 = vmatpush1.bf16.msra.mxu0 0
        %1395 = vmatprep.subr.bf16.mxu0 0
        %1396 = vmatpush1.bf16.msra.mxu0 0
        %1397 = vmatprep.mubr.bf16.mxu0 0
        %1398 = vmatmul.mubr.bf16.gmra.mrb[0].mxu0 %v1348
        %v1399 = vpop.f32.mrb[0].mxu0
        %v1400 = vadd.f32 0.0, %v1399
        %v1401 = vpop.f32.mrb[0].mxu0
        %v1402 = vpop.f32.mrb[0].mxu0
        %v1403 = vadd.f32 0.0, %v1402
        %v1404 = vpop.f32.mrb[0].mxu0
        %1405 = vmatprep.mubr.bf16.mxu0 0
        %1406 = vmatmul.mubr.bf16.gmra.mrb[0].mxu0 %v1351
        %v1407 = vpop.f32.mrb[0].mxu0
        %v1408 = vadd.f32 0.0, %v1407
        %v1409 = vpop.f32.mrb[0].mxu0
        %v1410 = vpop.f32.mrb[0].mxu0
        %v1411 = vadd.f32 0.0, %v1410
        %v1412 = vpop.f32.mrb[0].mxu0
        %1413 = vmatprep.mubr.bf16.mxu0 0
        %1414 = vmatmul.mubr.bf16.gmra.mrb[0].mxu0 %v1354
        %v1415 = vpop.f32.mrb[0].mxu0
        %v1416 = vadd.f32 0.0, %v1415
        %v1417 = vpop.f32.mrb[0].mxu0
        %v1418 = vpop.f32.mrb[0].mxu0
        %v1419 = vadd.f32 0.0, %v1418
        %v1420 = vpop.f32.mrb[0].mxu0
        %1421 = vmatprep.mubr.bf16.mxu0 0
        %1422 = vmatmul.mubr.bf16.gmra.mrb[0].mxu0 %v1357
        %v1423 = vpop.f32.mrb[0].mxu0
        %v1424 = vadd.f32 0.0, %v1423
        %v1425 = vpop.f32.mrb[0].mxu0
        %v1426 = vpop.f32.mrb[0].mxu0
        %v1427 = vadd.f32 0.0, %v1426
        %v1428 = vpop.f32.mrb[0].mxu0
        %1429 = vmatprep.mubr.bf16.mxu0 0
        %1430 = vmatmul.mubr.bf16.gmra.mrb[0].mxu0 %v1360
        %v1431 = vpop.f32.mrb[0].mxu0
        %v1432 = vadd.f32 0.0, %v1431
        %v1433 = vpop.f32.mrb[0].mxu0
        %v1434 = vpop.f32.mrb[0].mxu0
        %v1435 = vpop.f32.mrb[0].mxu0
        %1436 = vdwg.mxu0
        %v1437 = vadd.f32 %v1262, %v1400
        %v1438 = vadd.f32 %v1263, %v1403
        %v1439 = vadd.f32 %v1264, %v1408
        %v1440 = vadd.f32 %v1265, %v1411
        %v1441 = vadd.f32 %v1266, %v1416
        %v1442 = vadd.f32 %v1267, %v1419
        %v1443 = vadd.f32 %v1268, %v1424
        %v1444 = vadd.f32 %v1269, %v1427
        %v1445 = vadd.f32 %v1270, %v1432
        %v1446 = vld [vmem:[%s412 + $0x4] sm:$0xf]
        %v1447 = vld [vmem:[%s412 + $0x8] sm:$0xf]
        %v1448 = vld [vmem:[%s412 + $0xc] sm:$0xf]
        %v1449 = vld [vmem:[%s412 + $0x10] sm:$0xf]
        %v1450 = vld [vmem:[%s412 + $0x14] sm:$0xf]
        %v1451 = vld [vmem:[%s412 + $0x18] sm:$0xf]
        %v1452 = vld [vmem:[%s412 + $0x1c] sm:$0xf]
        %v1453 = vld [vmem:[%s412 + $0x20] sm:$0xf]
        %v1454 = vld [vmem:[%s412 + $0x24] sm:$0xf]
        %v1455 = vld [vmem:[%s412 + $0x28] sm:$0x1]
        %s1456 = scalar_lea.vmem %s1, 14
        %v1457 = vld [vmem:[%s1456] sm:$0x3]
        %v1468 = vunpack.c.l.b16 %v1446
        %v1469 = vunpack.c.l.b16 %v1447
        %v1470 = vunpack.c.l.b16 %v1448
        %v1471 = vunpack.c.l.b16 %v1449
        %v1472 = vunpack.c.l.b16 %v1450
        %v1473 = vunpack.c.l.b16 %v1451
        %v1474 = vunpack.c.l.b16 %v1452
        %v1475 = vunpack.c.l.b16 %v1453
        %v1476 = vunpack.c.l.b16 %v1454
        %v1477 = vunpack.c.l.b16 %v1455
        %v1478 = vpack.c.b16 %v1469, %v1468
        %v1479 = vpack.c.b16 %v1471, %v1470
        %v1480 = vpack.c.b16 %v1473, %v1472
        %v1481 = vpack.c.b16 %v1475, %v1474
        %v1482 = vpack.c.b16 %v1477, %v1476
        %v1484 = vshrl.u32 %v1478, 16
        %v1486 = vshll.u32 %v1478, 16
        %v1488 = vrot.slane %v1486, 1
        %v1489 = vor.u32 %v1484, %v1488
        %v1491 = vshll.u32 %v1479, 16
        %v1493 = vrot.slane %v1491, 1
        %v1494 = vsel %vm689, %v1489, %v1493
        %v1495 = vshrl.u32 %v1479, 16
        %v1497 = vor.u32 %v1495, %v1493
        %v1499 = vshll.u32 %v1480, 16
        %v1501 = vrot.slane %v1499, 1
        %v1502 = vsel %vm689, %v1497, %v1501
        %v1503 = vshrl.u32 %v1480, 16
        %v1505 = vor.u32 %v1503, %v1501
        %v1507 = vshll.u32 %v1481, 16
        %v1509 = vrot.slane %v1507, 1
        %v1510 = vsel %vm689, %v1505, %v1509
        %v1511 = vshrl.u32 %v1481, 16
        %v1513 = vor.u32 %v1511, %v1509
        %v1515 = vshll.u32 %v1482, 16
        %v1517 = vrot.slane %v1515, 1
        %v1518 = vsel %vm689, %v1513, %v1517
        %v1519 = vshrl.u32 %v1482, 16
        %v1521 = vor.u32 %v1519, %v1517
        %v1523 = vsel %vm447, %v1494, 0
        %v1526 = vsel %vm447, %v1502, 0
        %v1529 = vsel %vm447, %v1510, 0
        %v1532 = vsel %vm447, %v1518, 0
        %v1535 = vsel %vm447, %v1521, 0
        %v1538 = vsel %vm463, %v1457, 0
        %1540 = vmatprep.subr.bf16.mxu0 0
        %1541 = vmatpush1.bf16.msra.mxu0 %v1538
        %1542 = vmatprep.subr.bf16.mxu0 0
        %1543 = vmatpush1.bf16.msra.mxu0 0
        %1544 = vmatprep.subr.bf16.mxu0 0
        %1545 = vmatpush1.bf16.msra.mxu0 0
        %1546 = vmatprep.subr.bf16.mxu0 0
        %1547 = vmatpush1.bf16.msra.mxu0 0
        %1548 = vmatprep.subr.bf16.mxu0 0
        %1549 = vmatpush1.bf16.msra.mxu0 0
        %1550 = vmatprep.subr.bf16.mxu0 0
        %1551 = vmatpush1.bf16.msra.mxu0 0
        %1552 = vmatprep.subr.bf16.mxu0 0
        %1553 = vmatpush1.bf16.msra.mxu0 0
        %1554 = vmatprep.subr.bf16.mxu0 0
        %1555 = vmatpush1.bf16.msra.mxu0 0
        %1556 = vmatprep.subr.bf16.mxu0 0
        %1557 = vmatpush1.bf16.msra.mxu0 0
        %1558 = vmatprep.subr.bf16.mxu0 0
        %1559 = vmatpush1.bf16.msra.mxu0 0
        %1560 = vmatprep.subr.bf16.mxu0 0
        %1561 = vmatpush1.bf16.msra.mxu0 0
        %1562 = vmatprep.subr.bf16.mxu0 0
        %1563 = vmatpush1.bf16.msra.mxu0 0
        %1564 = vmatprep.subr.bf16.mxu0 0
        %1565 = vmatpush1.bf16.msra.mxu0 0
        %1566 = vmatprep.subr.bf16.mxu0 0
        %1567 = vmatpush1.bf16.msra.mxu0 0
        %1568 = vmatprep.subr.bf16.mxu0 0
        %1569 = vmatpush1.bf16.msra.mxu0 0
        %1570 = vmatprep.subr.bf16.mxu0 0
        %1571 = vmatpush1.bf16.msra.mxu0 0
        %1572 = vmatprep.mubr.bf16.mxu0 0
        %1573 = vmatmul.mubr.bf16.gmra.mrb[0].mxu0 %v1523
        %v1574 = vpop.f32.mrb[0].mxu0
        %v1575 = vadd.f32 0.0, %v1574
        %v1576 = vpop.f32.mrb[0].mxu0
        %v1577 = vpop.f32.mrb[0].mxu0
        %v1578 = vadd.f32 0.0, %v1577
        %v1579 = vpop.f32.mrb[0].mxu0
        %1580 = vmatprep.mubr.bf16.mxu0 0
        %1581 = vmatmul.mubr.bf16.gmra.mrb[0].mxu0 %v1526
        %v1582 = vpop.f32.mrb[0].mxu0
        %v1583 = vadd.f32 0.0, %v1582
        %v1584 = vpop.f32.mrb[0].mxu0
        %v1585 = vpop.f32.mrb[0].mxu0
        %v1586 = vadd.f32 0.0, %v1585
        %v1587 = vpop.f32.mrb[0].mxu0
        %1588 = vmatprep.mubr.bf16.mxu0 0
        %1589 = vmatmul.mubr.bf16.gmra.mrb[0].mxu0 %v1529
        %v1590 = vpop.f32.mrb[0].mxu0
        %v1591 = vadd.f32 0.0, %v1590
        %v1592 = vpop.f32.mrb[0].mxu0
        %v1593 = vpop.f32.mrb[0].mxu0
        %v1594 = vadd.f32 0.0, %v1593
        %v1595 = vpop.f32.mrb[0].mxu0
        %1596 = vmatprep.mubr.bf16.mxu0 0
        %1597 = vmatmul.mubr.bf16.gmra.mrb[0].mxu0 %v1532
        %v1598 = vpop.f32.mrb[0].mxu0
        %v1599 = vadd.f32 0.0, %v1598
        %v1600 = vpop.f32.mrb[0].mxu0
        %v1601 = vpop.f32.mrb[0].mxu0
        %v1602 = vadd.f32 0.0, %v1601
        %v1603 = vpop.f32.mrb[0].mxu0
        %1604 = vmatprep.mubr.bf16.mxu0 0
        %1605 = vmatmul.mubr.bf16.gmra.mrb[0].mxu0 %v1535
        %v1606 = vpop.f32.mrb[0].mxu0
        %v1607 = vadd.f32 0.0, %v1606
        %v1608 = vpop.f32.mrb[0].mxu0
        %v1609 = vpop.f32.mrb[0].mxu0
        %v1610 = vpop.f32.mrb[0].mxu0
        %1611 = vdwg.mxu0
        %v1612 = vadd.f32 %v1437, %v1575
        %v1613 = vadd.f32 %v1438, %v1578
        %v1614 = vadd.f32 %v1439, %v1583
        %v1615 = vadd.f32 %v1440, %v1586
        %v1616 = vadd.f32 %v1441, %v1591
        %v1617 = vadd.f32 %v1442, %v1594
        %v1618 = vadd.f32 %v1443, %v1599
        %v1619 = vadd.f32 %v1444, %v1602
        %v1620 = vadd.f32 %v1445, %v1607
        %v1621 = vld [vmem:[%s375 + $0x4] sm:$0xe]
        %s1622 = scalar_lea.vmem %s1, 16
        %v1623 = vld [vmem:[%s1622] sm:$0x3]
        %v1625 = vunpack.c.l.b16 %v1621
        %v1626 = vpack.c.b16 %v1294, %v1625
        %vm1627 = vcmask 1046528
        %v1628 = vrot.slane %v1626, 1
        %v1629 = vrot.slane %v1304, 1
        %v1630 = vsel %vm1627, %v1628, %v1629
        %v1631 = vrot.slane %v1305, 1
        %v1632 = vsel %vm1627, %v1629, %v1631
        %v1633 = vrot.slane %v1306, 1
        %v1634 = vsel %vm1627, %v1631, %v1633
        %v1635 = vrot.slane %v1307, 1
        %v1636 = vsel %vm1627, %v1633, %v1635
        %v1638 = vsel %vm447, %v1630, 0
        %v1641 = vsel %vm447, %v1632, 0
        %v1644 = vsel %vm447, %v1634, 0
        %v1647 = vsel %vm447, %v1636, 0
        %v1650 = vsel %vm447, %v1635, 0
        %v1653 = vsel %vm463, %v1623, 0
        %1655 = vmatprep.subr.bf16.mxu0 0
        %1656 = vmatpush1.bf16.msra.mxu0 %v1653
        %1657 = vmatprep.subr.bf16.mxu0 0
        %1658 = vmatpush1.bf16.msra.mxu0 0
        %1659 = vmatprep.subr.bf16.mxu0 0
        %1660 = vmatpush1.bf16.msra.mxu0 0
        %1661 = vmatprep.subr.bf16.mxu0 0
        %1662 = vmatpush1.bf16.msra.mxu0 0
        %1663 = vmatprep.subr.bf16.mxu0 0
        %1664 = vmatpush1.bf16.msra.mxu0 0
        %1665 = vmatprep.subr.bf16.mxu0 0
        %1666 = vmatpush1.bf16.msra.mxu0 0
        %1667 = vmatprep.subr.bf16.mxu0 0
        %1668 = vmatpush1.bf16.msra.mxu0 0
        %1669 = vmatprep.subr.bf16.mxu0 0
        %1670 = vmatpush1.bf16.msra.mxu0 0
        %1671 = vmatprep.subr.bf16.mxu0 0
        %1672 = vmatpush1.bf16.msra.mxu0 0
        %1673 = vmatprep.subr.bf16.mxu0 0
        %1674 = vmatpush1.bf16.msra.mxu0 0
        %1675 = vmatprep.subr.bf16.mxu0 0
        %1676 = vmatpush1.bf16.msra.mxu0 0
        %1677 = vmatprep.subr.bf16.mxu0 0
        %1678 = vmatpush1.bf16.msra.mxu0 0
        %1679 = vmatprep.subr.bf16.mxu0 0
        %1680 = vmatpush1.bf16.msra.mxu0 0
        %1681 = vmatprep.subr.bf16.mxu0 0
        %1682 = vmatpush1.bf16.msra.mxu0 0
        %1683 = vmatprep.subr.bf16.mxu0 0
        %1684 = vmatpush1.bf16.msra.mxu0 0
        %1685 = vmatprep.subr.bf16.mxu0 0
        %1686 = vmatpush1.bf16.msra.mxu0 0
        %1687 = vmatprep.mubr.bf16.mxu0 0
        %1688 = vmatmul.mubr.bf16.gmra.mrb[0].mxu0 %v1638
        %v1689 = vpop.f32.mrb[0].mxu0
        %v1690 = vadd.f32 0.0, %v1689
        %v1691 = vpop.f32.mrb[0].mxu0
        %v1692 = vpop.f32.mrb[0].mxu0
        %v1693 = vadd.f32 0.0, %v1692
        %v1694 = vpop.f32.mrb[0].mxu0
        %1695 = vmatprep.mubr.bf16.mxu0 0
        %1696 = vmatmul.mubr.bf16.gmra.mrb[0].mxu0 %v1641
        %v1697 = vpop.f32.mrb[0].mxu0
        %v1698 = vadd.f32 0.0, %v1697
        %v1699 = vpop.f32.mrb[0].mxu0
        %v1700 = vpop.f32.mrb[0].mxu0
        %v1701 = vadd.f32 0.0, %v1700
        %v1702 = vpop.f32.mrb[0].mxu0
        %1703 = vmatprep.mubr.bf16.mxu0 0
        %1704 = vmatmul.mubr.bf16.gmra.mrb[0].mxu0 %v1644
        %v1705 = vpop.f32.mrb[0].mxu0
        %v1706 = vadd.f32 0.0, %v1705
        %v1707 = vpop.f32.mrb[0].mxu0
        %v1708 = vpop.f32.mrb[0].mxu0
        %v1709 = vadd.f32 0.0, %v1708
        %v1710 = vpop.f32.mrb[0].mxu0
        %1711 = vmatprep.mubr.bf16.mxu0 0
        %1712 = vmatmul.mubr.bf16.gmra.mrb[0].mxu0 %v1647
        %v1713 = vpop.f32.mrb[0].mxu0
        %v1714 = vadd.f32 0.0, %v1713
        %v1715 = vpop.f32.mrb[0].mxu0
        %v1716 = vpop.f32.mrb[0].mxu0
        %v1717 = vadd.f32 0.0, %v1716
        %v1718 = vpop.f32.mrb[0].mxu0
        %1719 = vmatprep.mubr.bf16.mxu0 0
        %1720 = vmatmul.mubr.bf16.gmra.mrb[0].mxu0 %v1650
        %v1721 = vpop.f32.mrb[0].mxu0
        %v1722 = vadd.f32 0.0, %v1721
        %v1723 = vpop.f32.mrb[0].mxu0
        %v1724 = vpop.f32.mrb[0].mxu0
        %v1725 = vpop.f32.mrb[0].mxu0
        %1726 = vdwg.mxu0
        %v1727 = vadd.f32 %v1612, %v1690
        %v1728 = vadd.f32 %v1613, %v1693
        %v1729 = vadd.f32 %v1614, %v1698
        %v1730 = vadd.f32 %v1615, %v1701
        %v1731 = vadd.f32 %v1616, %v1706
        %v1732 = vadd.f32 %v1617, %v1709
        %v1733 = vadd.f32 %v1618, %v1714
        %v1734 = vadd.f32 %v1619, %v1717
        %v1735 = vadd.f32 %v1620, %v1722
        %v1736 = vld [vmem:[%s2] sm:$0x1]
        %v1738 = vlaneseq
        %v1739 = vshrl.u32 %v1738, 7
        %v1740 = vsub.s32 0, %v1739
        %v1741 = vrot.slane %v1736, %v1740
        %v1743 = vadd.f32 %v1727, %v1741
        %v1744 = vadd.f32 %v1728, %v1741
        %v1745 = vadd.f32 %v1729, %v1741
        %v1746 = vadd.f32 %v1730, %v1741
        %v1747 = vadd.f32 %v1731, %v1741
        %v1748 = vadd.f32 %v1732, %v1741
        %v1749 = vadd.f32 %v1733, %v1741
        %v1750 = vadd.f32 %v1734, %v1741
        %v1751 = vadd.f32 %v1735, %v1741
        %v1752 = vmax.f32 %v1743, 0.0
        %v1753 = vmax.f32 %v1744, 0.0
        %v1754 = vmax.f32 %v1745, 0.0
        %v1755 = vmax.f32 %v1746, 0.0
        %v1756 = vmax.f32 %v1747, 0.0
        %v1757 = vmax.f32 %v1748, 0.0
        %v1758 = vmax.f32 %v1749, 0.0
        %v1759 = vmax.f32 %v1750, 0.0
        %v1760 = vmax.f32 %v1751, 0.0
        %v1761 = vpack.c.bf16 %v1753, %v1752
        %v1762 = vpack.c.bf16 %v1755, %v1754
        %v1763 = vpack.c.bf16 %v1757, %v1756
        %v1764 = vpack.c.bf16 %v1759, %v1758
        %v1765 = vpack.c.bf16 %v1760, %v1760
        %v1771 = vunpack.c.l.b16 %v1761
        %v1772 = vunpack.c.h.b16 %v1761
        %v1773 = vunpack.c.l.b16 %v1762
        %v1774 = vunpack.c.h.b16 %v1762
        %v1775 = vunpack.c.l.b16 %v1763
        %v1776 = vunpack.c.h.b16 %v1763
        %v1777 = vunpack.c.l.b16 %v1764
        %v1778 = vunpack.c.h.b16 %v1764
        %v1779 = vunpack.c.l.b16 %v1765
        %v1780 = vpack.c.b16 %v1771, %v1771
        %v1781 = vpack.c.b16 %v1772, %v1772
        %v1782 = vpack.c.b16 %v1773, %v1773
        %v1783 = vpack.c.b16 %v1774, %v1774
        %v1784 = vpack.c.b16 %v1775, %v1775
        %v1785 = vpack.c.b16 %v1776, %v1776
        %v1786 = vpack.c.b16 %v1777, %v1777
        %v1787 = vpack.c.b16 %v1778, %v1778
        %v1788 = vpack.c.b16 %v1779, %v1779
        %1798 = vst [vmem:[%s400] sm:$0xf] %v1780
        %1799 = vst [vmem:[%s400 + $0x4] sm:$0xf] %v1781
        %1800 = vst [vmem:[%s400 + $0x8] sm:$0xf] %v1782
        %1801 = vst [vmem:[%s400 + $0xc] sm:$0xf] %v1783
        %1802 = vst [vmem:[%s400 + $0x10] sm:$0xf] %v1784
        %1803 = vst [vmem:[%s400 + $0x14] sm:$0xf] %v1785
        %1804 = vst [vmem:[%s400 + $0x18] sm:$0xf] %v1786
        %1805 = vst [vmem:[%s400 + $0x1c] sm:$0xf] %v1787
        %1806 = vst [vmem:[%s400 + $0x20] sm:$0xf] %v1788
        %p1807 = scmp.lt.s32.totalorder %s14, 1
        %s1808 = scalar_select %p1807, %s14, 1
        %s1809 = smul.addr %s1808, 9
        %s1810 = smul.addr %s1809, 4
        %s1811 = scalar_lea.vmem %s3, %s1810
        // Predicated region
        $region74: #{basic_block_forward.2} parent=68 // pred_check
          %p1812 = pneg %p100
        $region75: #{basic_block_forward.2} parent=68 // pred_check_branch
          %1814 = sbr.rel (%p1812) target = $region77
        $region76: #{basic_block_forward.2} parent=68 // pred_region
          _
        $region77: #{basic_block_forward.2} parent=68 // pred_fallthru
          _
      $region69: #{basic_block_forward.2} parent=5 // pred_fallthru
        _
      %p1815 = scmp.le.s32.totalorder 2, %s9
      // Predicated region
      $region78: #{basic_block_forward.2} parent=5 // pred_check
        %p1816 = pneg %p1815
      $region79: #{basic_block_forward.2} parent=5 // pred_check_branch
        %1818 = sbr.rel (%p1816) target = $region81
      $region80: #{basic_block_forward.2} parent=5 // pred_region
        %s1819 = ssub.s32 %s9, 2
        // Predicated region
        $region82: #{basic_block_forward.2} parent=80 // pred_check
          %p1820 = pneg %p106
        $region83: #{basic_block_forward.2} parent=80 // pred_check_branch
          %1822 = sbr.rel (%p1820) target = $region85
        $region84: #{basic_block_forward.2} parent=80 // pred_region
          %p1823 = scmp.lt.s32.totalorder %s15, 1
          %s1824 = scalar_select %p1823, %s15, 1
          %s1825 = smul.addr %s1824, 9
          %s1826 = smul.addr %s1825, 4
          %s1827 = scalar_lea.vmem %s3, %s1826
        $region85: #{basic_block_forward.2} parent=80 // pred_fallthru
          _
      $region81: #{basic_block_forward.2} parent=5 // pred_fallthru
        _
    $region6: #{basic_block_forward.2} parent=1 // loop_footer
      %s13 = sadd.s32 1, %s9
    $region7: #{basic_block_forward.2} parent=1 // loop_footer_branch
      %8 = sbr.rel target = $region3
    $region8: #{basic_block_forward.2} parent=1 // loop_exit
      _

// kernel: basic_block_forward.3
$region0: #{basic_block_forward.3}
  #allocation0 [shape = 'u32[]', space=smem, size = 0x4, offset = 0x4, fixed_abs, tag = 'smem constant byte address 0x4 - core index']
  #allocation1 [shape = 'u32[144,128]{1,0:T(1,128)}', space=vmem, size = 0x12000, scoped, tag = 'internal scratch']
  %s0 = inlined_call_operand.vmem [shape: bf16[1,2,110,8], index: 0, kind: input, shape index: {}]
  %s1 = inlined_call_operand.vmem [shape: bf16[9,8,128], index: 1, kind: input, shape index: {}]
  %s2 = inlined_call_operand.vmem [shape: f32[1,128], index: 2, kind: input, shape index: {}]
  %s3 = inlined_call_operand.vmem [shape: bf16[2,80,4], index: 3, kind: input, shape index: {}]
  %s4 = inlined_call_operand.vmem [shape: bf16[4,128], index: 4, kind: input, shape index: {}]
  %s5 = inlined_call_operand.vmem [shape: f32[1,128], index: 5, kind: input, shape index: {}]
  %s6 = inlined_call_operand.vmem [shape: f32[2,80,128], index: 6, kind: output, shape index: {}]
  %s7 = sld [smem:[#allocation0]]
  $region57: #{basic_block_forward.3} parent=0
    _
  %s9 = ssub.s32 1, %s7
  %s10 = scalar_select 0, %s9, %s7
  loop: start=0, step=1, limit=4
  $region2: #{basic_block_forward.3} parent=0 // loop_pre_header
    _
  $region3: #{basic_block_forward.3} parent=0 // loop_header
    %s12 = sphi 0, %s16
    %p13 = scmp.ge.s32.totalorder %s12, 4
    %s22 = sphi 0, %s24
    %s25 = sphi 0, %s22
    %s26 = sphi 0, %s25
    %s42 = sphi 0, %s26
    %s46 = sphi 0, %s46
    %s48 = sphi 0, %s46
    %s49 = sphi 0, %s48
    %s63 = sphi 0, %s49
    %s67 = sphi 0, %s67
    %s69 = sphi 0, %s67
    %s70 = sphi 0, %s69
    %s84 = sphi 0, %s70
    %s90 = sphi 0, %s92
    %s93 = sphi 0, %s90
    %s94 = sphi 0, %s93
    %s110 = sphi 0, %s94
    %s114 = sphi 0, %s114
    %s116 = sphi 0, %s114
    %s117 = sphi 0, %s116
    %s131 = sphi 0, %s117
    %s135 = sphi 0, %s135
    %s137 = sphi 0, %s135
    %s138 = sphi 0, %s137
    %s152 = sphi 0, %s138
    %s158 = sphi 0, %s160
    %s161 = sphi 0, %s158
    %s162 = sphi 0, %s161
    %s178 = sphi 0, %s162
  $region4: #{basic_block_forward.3} parent=0 // loop_header_branch
    %15 = sbr.rel (%p13) target = $region8
  $region5: #{basic_block_forward.3} parent=0 // loop_body
    %s17 = ssub.s32 %s12, 1
    %s18 = ssub.s32 %s12, 2
    %s19 = sadd.s32 %s12, 1
    %s20 = ssub.s32 %s12, %s19
    %p21 = scmp.eq.s32.totalorder %s20, 0
    %s23 = sadd.s32 %s22, 1
    %s24 = scalar_select %p21, %s22, %s23
    %p27 = pneg %p21
    %p28 = scmp.eq.s32.totalorder %s12, 1
    %p29 = por %p27, %p28
    %p30 = scmp.ne.s32.totalorder %s22, %s25
    %p31 = scmp.eq.s32.totalorder %s12, 0
    %p32 = por %p30, %p31
    %p33 = scmp.ne.s32.totalorder %s22, %s25
    %p34 = scmp.eq.s32.totalorder %s17, 1
    %p35 = por %p33, %p34
    %p36 = scmp.ne.s32.totalorder %s25, %s26
    %p37 = scmp.eq.s32.totalorder %s17, 0
    %p38 = por %p36, %p37
    %p39 = scmp.ne.s32.totalorder %s25, %s26
    %p40 = scmp.eq.s32.totalorder %s18, 1
    %p41 = por %p39, %p40
    %p43 = scmp.ne.s32.totalorder %s26, %s42
    %p44 = scmp.eq.s32.totalorder %s18, 0
    %p45 = por %p43, %p44
    %s47 = sadd.s32 %s46, 1
    %p50 = scmp.eq.s32.totalorder %s12, 1
    %p51 = scmp.ne.s32.totalorder %s46, %s48
    %p52 = scmp.eq.s32.totalorder %s12, 0
    %p53 = por %p51, %p52
    %p54 = scmp.ne.s32.totalorder %s46, %s48
    %p55 = scmp.eq.s32.totalorder %s17, 1
    %p56 = por %p54, %p55
    %p57 = scmp.ne.s32.totalorder %s48, %s49
    %p58 = scmp.eq.s32.totalorder %s17, 0
    %p59 = por %p57, %p58
    %p60 = scmp.ne.s32.totalorder %s48, %s49
    %p61 = scmp.eq.s32.totalorder %s18, 1
    %p62 = por %p60, %p61
    %p64 = scmp.ne.s32.totalorder %s49, %s63
    %p65 = scmp.eq.s32.totalorder %s18, 0
    %p66 = por %p64, %p65
    %s68 = sadd.s32 %s67, 1
    %p71 = scmp.eq.s32.totalorder %s12, 1
    %p72 = scmp.ne.s32.totalorder %s67, %s69
    %p73 = scmp.eq.s32.totalorder %s12, 0
    %p74 = por %p72, %p73
    %p75 = scmp.ne.s32.totalorder %s67, %s69
    %p76 = scmp.eq.s32.totalorder %s17, 1
    %p77 = por %p75, %p76
    %p78 = scmp.ne.s32.totalorder %s69, %s70
    %p79 = scmp.eq.s32.totalorder %s17, 0
    %p80 = por %p78, %p79
    %p81 = scmp.ne.s32.totalorder %s69, %s70
    %p82 = scmp.eq.s32.totalorder %s18, 1
    %p83 = por %p81, %p82
    %p85 = scmp.ne.s32.totalorder %s70, %s84
    %p86 = scmp.eq.s32.totalorder %s18, 0
    %p87 = por %p85, %p86
    %s88 = ssub.s32 %s12, %s19
    %p89 = scmp.eq.s32.totalorder %s88, 0
    %s91 = sadd.s32 %s90, 1
    %s92 = scalar_select %p89, %s90, %s91
    %p95 = pneg %p89
    %p96 = scmp.eq.s32.totalorder %s12, 1
    %p97 = por %p95, %p96
    %p98 = scmp.ne.s32.totalorder %s90, %s93
    %p99 = scmp.eq.s32.totalorder %s12, 0
    %p100 = por %p98, %p99
    %p101 = scmp.ne.s32.totalorder %s90, %s93
    %p102 = scmp.eq.s32.totalorder %s17, 1
    %p103 = por %p101, %p102
    %p104 = scmp.ne.s32.totalorder %s93, %s94
    %p105 = scmp.eq.s32.totalorder %s17, 0
    %p106 = por %p104, %p105
    %p107 = scmp.ne.s32.totalorder %s93, %s94
    %p108 = scmp.eq.s32.totalorder %s18, 1
    %p109 = por %p107, %p108
    %p111 = scmp.ne.s32.totalorder %s94, %s110
    %p112 = scmp.eq.s32.totalorder %s18, 0
    %p113 = por %p111, %p112
    %s115 = sadd.s32 %s114, 1
    %p118 = scmp.eq.s32.totalorder %s12, 1
    %p119 = scmp.ne.s32.totalorder %s114, %s116
    %p120 = scmp.eq.s32.totalorder %s12, 0
    %p121 = por %p119, %p120
    %p122 = scmp.ne.s32.totalorder %s114, %s116
    %p123 = scmp.eq.s32.totalorder %s17, 1
    %p124 = por %p122, %p123
    %p125 = scmp.ne.s32.totalorder %s116, %s117
    %p126 = scmp.eq.s32.totalorder %s17, 0
    %p127 = por %p125, %p126
    %p128 = scmp.ne.s32.totalorder %s116, %s117
    %p129 = scmp.eq.s32.totalorder %s18, 1
    %p130 = por %p128, %p129
    %p132 = scmp.ne.s32.totalorder %s117, %s131
    %p133 = scmp.eq.s32.totalorder %s18, 0
    %p134 = por %p132, %p133
    %s136 = sadd.s32 %s135, 1
    %p139 = scmp.eq.s32.totalorder %s12, 1
    %p140 = scmp.ne.s32.totalorder %s135, %s137
    %p141 = scmp.eq.s32.totalorder %s12, 0
    %p142 = por %p140, %p141
    %p143 = scmp.ne.s32.totalorder %s135, %s137
    %p144 = scmp.eq.s32.totalorder %s17, 1
    %p145 = por %p143, %p144
    %p146 = scmp.ne.s32.totalorder %s137, %s138
    %p147 = scmp.eq.s32.totalorder %s17, 0
    %p148 = por %p146, %p147
    %p149 = scmp.ne.s32.totalorder %s137, %s138
    %p150 = scmp.eq.s32.totalorder %s18, 1
    %p151 = por %p149, %p150
    %p153 = scmp.ne.s32.totalorder %s138, %s152
    %p154 = scmp.eq.s32.totalorder %s18, 0
    %p155 = por %p153, %p154
    %s156 = ssub.s32 %s12, %s19
    %p157 = scmp.eq.s32.totalorder %s156, 0
    %s159 = sadd.s32 %s158, 1
    %s160 = scalar_select %p157, %s158, %s159
    %p163 = pneg %p157
    %p164 = scmp.eq.s32.totalorder %s12, 1
    %p165 = por %p163, %p164
    %p166 = scmp.ne.s32.totalorder %s158, %s161
    %p167 = scmp.eq.s32.totalorder %s12, 0
    %p168 = por %p166, %p167
    %p169 = scmp.ne.s32.totalorder %s158, %s161
    %p170 = scmp.eq.s32.totalorder %s17, 1
    %p171 = por %p169, %p170
    %p172 = scmp.ne.s32.totalorder %s161, %s162
    %p173 = scmp.eq.s32.totalorder %s17, 0
    %p174 = por %p172, %p173
    %p175 = scmp.ne.s32.totalorder %s161, %s162
    %p176 = scmp.eq.s32.totalorder %s18, 1
    %p177 = por %p175, %p176
    %p179 = scmp.ne.s32.totalorder %s162, %s178
    %p180 = scmp.eq.s32.totalorder %s18, 0
    %p181 = por %p179, %p180
    %p182 = scmp.le.s32.totalorder 1, %s12
    %p183 = scmp.lt.s32.totalorder %s12, 3
    %p184 = pnand %p182, %p183
    %p185 = pneg %p184
    // Predicated region
    $region9: #{basic_block_forward.3} parent=5 // pred_check
      _
    $region10: #{basic_block_forward.3} parent=5 // pred_check_branch
      %187 = sbr.rel (%p184) target = $region12
    $region11: #{basic_block_forward.3} parent=5 // pred_region
      %s188 = ssub.s32 %s12, 1
      // Predicated region
      $region13: #{basic_block_forward.3} parent=11 // pred_check
        %p189 = pneg %p59
      $region14: #{basic_block_forward.3} parent=11 // pred_check_branch
        %191 = sbr.rel (%p189) target = $region16
      $region15: #{basic_block_forward.3} parent=11 // pred_region
        _
      $region16: #{basic_block_forward.3} parent=11 // pred_fallthru
        _
      // Predicated region
      $region17: #{basic_block_forward.3} parent=11 // pred_check
        %p192 = pneg %p80
      $region18: #{basic_block_forward.3} parent=11 // pred_check_branch
        %194 = sbr.rel (%p192) target = $region20
      $region19: #{basic_block_forward.3} parent=11 // pred_region
        _
      $region20: #{basic_block_forward.3} parent=11 // pred_fallthru
        _
      // Predicated region
      $region21: #{basic_block_forward.3} parent=11 // pred_check
        %p195 = pneg %p127
      $region22: #{basic_block_forward.3} parent=11 // pred_check_branch
        %197 = sbr.rel (%p195) target = $region24
      $region23: #{basic_block_forward.3} parent=11 // pred_region
        _
      $region24: #{basic_block_forward.3} parent=11 // pred_fallthru
        _
      // Predicated region
      $region25: #{basic_block_forward.3} parent=11 // pred_check
        %p198 = pneg %p148
      $region26: #{basic_block_forward.3} parent=11 // pred_check_branch
        %200 = sbr.rel (%p198) target = $region28
      $region27: #{basic_block_forward.3} parent=11 // pred_region
        _
      $region28: #{basic_block_forward.3} parent=11 // pred_fallthru
        _
    $region12: #{basic_block_forward.3} parent=5 // pred_fallthru
      _
    %p201 = scmp.lt.s32.totalorder %s12, 2
    // Predicated region
    $region29: #{basic_block_forward.3} parent=5 // pred_check
      %p202 = pneg %p201
    $region30: #{basic_block_forward.3} parent=5 // pred_check_branch
      %204 = sbr.rel (%p202) target = $region32
    $region31: #{basic_block_forward.3} parent=5 // pred_region
      // Predicated region
      $region33: #{basic_block_forward.3} parent=31 // pred_check
        %p205 = pneg %p32
      $region34: #{basic_block_forward.3} parent=31 // pred_check_branch
        %207 = sbr.rel (%p205) target = $region36
      $region35: #{basic_block_forward.3} parent=31 // pred_region
        %p208 = scmp.lt.s32.totalorder %s12, 1
        %s209 = scalar_select %p208, %s12, 1
        %s210 = smul.addr %s209, 14
        %s211 = smul.addr %s210, 4
        %s212 = scalar_lea.vmem %s0, %s211
      $region36: #{basic_block_forward.3} parent=31 // pred_fallthru
        _
      // Predicated region
      $region37: #{basic_block_forward.3} parent=31 // pred_check
        %p213 = pneg %p100
      $region38: #{basic_block_forward.3} parent=31 // pred_check_branch
        %215 = sbr.rel (%p213) target = $region40
      $region39: #{basic_block_forward.3} parent=31 // pred_region
        %p216 = scmp.lt.s32.totalorder %s12, 1
        %s217 = scalar_select %p216, %s12, 1
        %s218 = smul.addr %s217, 10
        %s219 = smul.addr %s218, 4
        %s220 = scalar_lea.vmem %s3, %s219
      $region40: #{basic_block_forward.3} parent=31 // pred_fallthru
        _
    $region32: #{basic_block_forward.3} parent=5 // pred_fallthru
      _
    %p221 = scmp.le.s32.totalorder 1, %s12
    %p222 = scmp.lt.s32.totalorder %s12, 3
    %p223 = pnand %p221, %p222
    %p224 = pneg %p223
    // Predicated region
    $region41: #{basic_block_forward.3} parent=5 // pred_check
      _
    $region42: #{basic_block_forward.3} parent=5 // pred_check_branch
      %226 = sbr.rel (%p223) target = $region44
    $region43: #{basic_block_forward.3} parent=5 // pred_region
      %s227 = ssub.s32 %s12, 1
      %p228 = scmp.lt.s32.totalorder %s17, 1
      %s229 = scalar_select %p228, %s17, 1
      %s230 = smul.addr %s229, 14
      %s231 = smul.addr %s230, 4
      %s232 = scalar_lea.vmem %s0, %s231
      %p233 = pneg %p38
      %p234 = pneg %p35
      %p235 = pneg %p59
      %p236 = pneg %p56
      %p237 = pneg %p80
      %p238 = pneg %p77
      %p239 = scmp.lt.s32.totalorder %s17, 1
      %s240 = scalar_select %p239, %s17, 1
      %s241 = smul.addr %s240, 10
      %s242 = smul.addr %s241, 4
      %s243 = scalar_lea.vmem %s3, %s242
      %p244 = pneg %p106
      %p245 = pneg %p103
      %p246 = pneg %p127
      %p247 = pneg %p124
      %p248 = pneg %p148
      %p249 = pneg %p145
      %p250 = pneg %p174
      %p251 = pneg %p171
      %p252 = scmp.lt.s32.totalorder %s17, 1
      %s253 = scalar_select %p252, %s17, 1
      %s254 = smul.addr %s253, 10
      %s255 = smul.addr %s254, 8
      %s256 = scalar_lea.vmem %s6, %s255
      %p257 = scmp.lt.s32.totalorder %s17, 1
      %s258 = scalar_select %p257, %s17, 1
      %s259 = smul.addr %s258, 14
      %s260 = smul.addr %s259, 4
      %s261 = scalar_lea.vmem %s0, %s260
      %p262 = scmp.lt.s32.totalorder %s17, 1
      %s263 = scalar_select %p262, %s17, 1
      %s264 = smul.addr %s263, 10
      %s265 = smul.addr %s264, 4
      %s266 = scalar_lea.vmem %s3, %s265
      %p267 = scmp.lt.s32.totalorder %s17, 1
      %s268 = scalar_select %p267, %s17, 1
      %s269 = smul.addr %s268, 10
      %s270 = smul.addr %s269, 8
      %s271 = scalar_lea.vmem %s6, %s270
      %v273 = vld [vmem:[%s261] sm:$0xf]
      %v274 = vld [vmem:[%s261 + $0x4] sm:$0xf]
      %v275 = vld [vmem:[%s261 + $0x8] sm:$0xf]
      %v276 = vld [vmem:[%s261 + $0xc] sm:$0xf]
      %v277 = vld [vmem:[%s261 + $0x10] sm:$0xf]
      %v278 = vld [vmem:[%s261 + $0x14] sm:$0xf]
      %v279 = vld [vmem:[%s261 + $0x18] sm:$0xf]
      %v280 = vld [vmem:[%s261 + $0x1c] sm:$0xf]
      %v281 = vld [vmem:[%s261 + $0x20] sm:$0xf]
      %v282 = vld [vmem:[%s261 + $0x24] sm:$0xf]
      %v283 = vld [vmem:[%s1] sm:$0xf]
      %v284 = vld [vmem:[%s261 + $0x28] sm:$0x1]
      %s285 = scalar_lea.vmem %s1, 4
      %v286 = vld [vmem:[%s285] sm:$0xf]
      %v298 = vunpack.c.l.b16 %v273
      %v299 = vunpack.c.l.b16 %v274
      %v300 = vunpack.c.l.b16 %v275
      %v301 = vunpack.c.l.b16 %v276
      %v302 = vunpack.c.l.b16 %v277
      %v303 = vunpack.c.l.b16 %v278
      %v304 = vunpack.c.l.b16 %v279
      %v305 = vunpack.c.l.b16 %v280
      %v306 = vunpack.c.l.b16 %v281
      %v307 = vunpack.c.l.b16 %v282
      %v308 = vunpack.c.l.b16 %v284
      %v309 = vpack.c.b16 %v299, %v298
      %v310 = vpack.c.b16 %v301, %v300
      %v311 = vpack.c.b16 %v303, %v302
      %v312 = vpack.c.b16 %v305, %v304
      %v313 = vpack.c.b16 %v307, %v306
      %v314 = vpack.c.b16 %v308, %v308
      %vm315 = vsmask.f32 7424
      %v317 = vshrl.u32 %v309, 16
      %v319 = vshll.u32 %v309, 16
      %v321 = vrot.slane %v319, 1
      %v322 = vor.u32 %v317, %v321
      %v324 = vshll.u32 %v310, 16
      %v326 = vrot.slane %v324, 1
      %v327 = vsel %vm315, %v322, %v326
      %v328 = vshrl.u32 %v310, 16
      %v330 = vor.u32 %v328, %v326
      %v332 = vshll.u32 %v311, 16
      %v334 = vrot.slane %v332, 1
      %v335 = vsel %vm315, %v330, %v334
      %v336 = vshrl.u32 %v311, 16
      %v338 = vor.u32 %v336, %v334
      %v340 = vshll.u32 %v312, 16
      %v342 = vrot.slane %v340, 1
      %v343 = vsel %vm315, %v338, %v342
      %v344 = vshrl.u32 %v312, 16
      %v346 = vor.u32 %v344, %v342
      %v348 = vshll.u32 %v313, 16
      %v350 = vrot.slane %v348, 1
      %v351 = vsel %vm315, %v346, %v350
      %v352 = vshrl.u32 %v313, 16
      %v354 = vor.u32 %v352, %v350
      %v356 = vshll.u32 %v314, 16
      %v358 = vrot.slane %v356, 1
      %v359 = vsel %vm315, %v354, %v358
      %vm360 = vcmask 64512
      %v362 = vsel %vm360, %v327, 0
      %v365 = vsel %vm360, %v335, 0
      %v368 = vsel %vm360, %v343, 0
      %v371 = vsel %vm360, %v351, 0
      %v374 = vsel %vm360, %v359, 0
      %vm376 = vcmask 1043456
      %v378 = vsel %vm376, %v286, 0
      %380 = vmatprep.subr.bf16.mxu0 0
      %381 = vmatpush1.bf16.msra.mxu0 %v378
      %382 = vmatprep.subr.bf16.mxu0 0
      %383 = vmatpush1.bf16.msra.mxu0 0
      %384 = vmatprep.subr.bf16.mxu0 0
      %385 = vmatpush1.bf16.msra.mxu0 0
      %386 = vmatprep.subr.bf16.mxu0 0
      %387 = vmatpush1.bf16.msra.mxu0 0
      %388 = vmatprep.subr.bf16.mxu0 0
      %389 = vmatpush1.bf16.msra.mxu0 0
      %390 = vmatprep.subr.bf16.mxu0 0
      %391 = vmatpush1.bf16.msra.mxu0 0
      %392 = vmatprep.subr.bf16.mxu0 0
      %393 = vmatpush1.bf16.msra.mxu0 0
      %394 = vmatprep.subr.bf16.mxu0 0
      %395 = vmatpush1.bf16.msra.mxu0 0
      %396 = vmatprep.subr.bf16.mxu0 0
      %397 = vmatpush1.bf16.msra.mxu0 0
      %398 = vmatprep.subr.bf16.mxu0 0
      %399 = vmatpush1.bf16.msra.mxu0 0
      %400 = vmatprep.subr.bf16.mxu0 0
      %401 = vmatpush1.bf16.msra.mxu0 0
      %402 = vmatprep.subr.bf16.mxu0 0
      %403 = vmatpush1.bf16.msra.mxu0 0
      %404 = vmatprep.subr.bf16.mxu0 0
      %405 = vmatpush1.bf16.msra.mxu0 0
      %406 = vmatprep.subr.bf16.mxu0 0
      %407 = vmatpush1.bf16.msra.mxu0 0
      %408 = vmatprep.subr.bf16.mxu0 0
      %409 = vmatpush1.bf16.msra.mxu0 0
      %410 = vmatprep.subr.bf16.mxu0 0
      %411 = vmatpush1.bf16.msra.mxu0 0
      %412 = vmatprep.mubr.bf16.mxu0 0
      %413 = vmatmul.mubr.bf16.gmra.mrb[0].mxu0 %v362
      %v414 = vpop.f32.mrb[0].mxu0
      %v415 = vadd.f32 0.0, %v414
      %v416 = vpop.f32.mrb[0].mxu0
      %v417 = vpop.f32.mrb[0].mxu0
      %v418 = vadd.f32 0.0, %v417
      %v419 = vpop.f32.mrb[0].mxu0
      %420 = vmatprep.mubr.bf16.mxu0 0
      %421 = vmatmul.mubr.bf16.gmra.mrb[0].mxu0 %v365
      %v422 = vpop.f32.mrb[0].mxu0
      %v423 = vadd.f32 0.0, %v422
      %v424 = vpop.f32.mrb[0].mxu0
      %v425 = vpop.f32.mrb[0].mxu0
      %v426 = vadd.f32 0.0, %v425
      %v427 = vpop.f32.mrb[0].mxu0
      %428 = vmatprep.mubr.bf16.mxu0 0
      %429 = vmatmul.mubr.bf16.gmra.mrb[0].mxu0 %v368
      %v430 = vpop.f32.mrb[0].mxu0
      %v431 = vadd.f32 0.0, %v430
      %v432 = vpop.f32.mrb[0].mxu0
      %v433 = vpop.f32.mrb[0].mxu0
      %v434 = vadd.f32 0.0, %v433
      %v435 = vpop.f32.mrb[0].mxu0
      %436 = vmatprep.mubr.bf16.mxu0 0
      %437 = vmatmul.mubr.bf16.gmra.mrb[0].mxu0 %v371
      %v438 = vpop.f32.mrb[0].mxu0
      %v439 = vadd.f32 0.0, %v438
      %v440 = vpop.f32.mrb[0].mxu0
      %v441 = vpop.f32.mrb[0].mxu0
      %v442 = vadd.f32 0.0, %v441
      %v443 = vpop.f32.mrb[0].mxu0
      %444 = vmatprep.mubr.bf16.mxu0 0
      %445 = vmatmul.mubr.bf16.gmra.mrb[0].mxu0 %v374
      %v446 = vpop.f32.mrb[0].mxu0
      %v447 = vadd.f32 0.0, %v446
      %v448 = vpop.f32.mrb[0].mxu0
      %v449 = vpop.f32.mrb[0].mxu0
      %v450 = vadd.f32 0.0, %v449
      %v451 = vpop.f32.mrb[0].mxu0
      %452 = vdwg.mxu0
      %v453 = vsel %vm360, %v309, 0
      %v455 = vsel %vm360, %v310, 0
      %v457 = vsel %vm360, %v311, 0
      %v459 = vsel %vm360, %v312, 0
      %v461 = vsel %vm360, %v313, 0
      %v464 = vsel %vm376, %v283, 0
      %466 = vmatprep.subr.bf16.mxu0 0
      %467 = vmatpush1.bf16.msra.mxu0 %v464
      %468 = vmatprep.subr.bf16.mxu0 0
      %469 = vmatpush1.bf16.msra.mxu0 0
      %470 = vmatprep.subr.bf16.mxu0 0
      %471 = vmatpush1.bf16.msra.mxu0 0
      %472 = vmatprep.subr.bf16.mxu0 0
      %473 = vmatpush1.bf16.msra.mxu0 0
      %474 = vmatprep.subr.bf16.mxu0 0
      %475 = vmatpush1.bf16.msra.mxu0 0
      %476 = vmatprep.subr.bf16.mxu0 0
      %477 = vmatpush1.bf16.msra.mxu0 0
      %478 = vmatprep.subr.bf16.mxu0 0
      %479 = vmatpush1.bf16.msra.mxu0 0
      %480 = vmatprep.subr.bf16.mxu0 0
      %481 = vmatpush1.bf16.msra.mxu0 0
      %482 = vmatprep.subr.bf16.mxu0 0
      %483 = vmatpush1.bf16.msra.mxu0 0
      %484 = vmatprep.subr.bf16.mxu0 0
      %485 = vmatpush1.bf16.msra.mxu0 0
      %486 = vmatprep.subr.bf16.mxu0 0
      %487 = vmatpush1.bf16.msra.mxu0 0
      %488 = vmatprep.subr.bf16.mxu0 0
      %489 = vmatpush1.bf16.msra.mxu0 0
      %490 = vmatprep.subr.bf16.mxu0 0
      %491 = vmatpush1.bf16.msra.mxu0 0
      %492 = vmatprep.subr.bf16.mxu0 0
      %493 = vmatpush1.bf16.msra.mxu0 0
      %494 = vmatprep.subr.bf16.mxu0 0
      %495 = vmatpush1.bf16.msra.mxu0 0
      %496 = vmatprep.subr.bf16.mxu0 0
      %497 = vmatpush1.bf16.msra.mxu0 0
      %498 = vmatprep.mubr.bf16.mxu0 0
      %499 = vmatmul.mubr.bf16.gmra.mrb[0].mxu0 %v453
      %v500 = vpop.f32.mrb[0].mxu0
      %v501 = vadd.f32 %v415, %v500
      %v502 = vpop.f32.mrb[0].mxu0
      %v503 = vpop.f32.mrb[0].mxu0
      %v504 = vadd.f32 %v418, %v503
      %v505 = vpop.f32.mrb[0].mxu0
      %506 = vmatprep.mubr.bf16.mxu0 0
      %507 = vmatmul.mubr.bf16.gmra.mrb[0].mxu0 %v455
      %v508 = vpop.f32.mrb[0].mxu0
      %v509 = vadd.f32 %v423, %v508
      %v510 = vpop.f32.mrb[0].mxu0
      %v511 = vpop.f32.mrb[0].mxu0
      %v512 = vadd.f32 %v426, %v511
      %v513 = vpop.f32.mrb[0].mxu0
      %514 = vmatprep.mubr.bf16.mxu0 0
      %515 = vmatmul.mubr.bf16.gmra.mrb[0].mxu0 %v457
      %v516 = vpop.f32.mrb[0].mxu0
      %v517 = vadd.f32 %v431, %v516
      %v518 = vpop.f32.mrb[0].mxu0
      %v519 = vpop.f32.mrb[0].mxu0
      %v520 = vadd.f32 %v434, %v519
      %v521 = vpop.f32.mrb[0].mxu0
      %522 = vmatprep.mubr.bf16.mxu0 0
      %523 = vmatmul.mubr.bf16.gmra.mrb[0].mxu0 %v459
      %v524 = vpop.f32.mrb[0].mxu0
      %v525 = vadd.f32 %v439, %v524
      %v526 = vpop.f32.mrb[0].mxu0
      %v527 = vpop.f32.mrb[0].mxu0
      %v528 = vadd.f32 %v442, %v527
      %v529 = vpop.f32.mrb[0].mxu0
      %530 = vmatprep.mubr.bf16.mxu0 0
      %531 = vmatmul.mubr.bf16.gmra.mrb[0].mxu0 %v461
      %v532 = vpop.f32.mrb[0].mxu0
      %v533 = vadd.f32 %v447, %v532
      %v534 = vpop.f32.mrb[0].mxu0
      %v535 = vpop.f32.mrb[0].mxu0
      %v536 = vadd.f32 %v450, %v535
      %v537 = vpop.f32.mrb[0].mxu0
      %538 = vdwg.mxu0
      %v539 = vld [vmem:[%s261] sm:$0xe]
      %s540 = scalar_lea.vmem %s1, 8
      %v541 = vld [vmem:[%s540] sm:$0xf]
      %v543 = vunpack.c.l.b16 %v539
      %v544 = vpack.c.b16 %v299, %v543
      %vm545 = vcmask 1046528
      %v546 = vrot.slane %v544, 1
      %v547 = vrot.slane %v310, 1
      %v548 = vsel %vm545, %v546, %v547
      %v549 = vrot.slane %v311, 1
      %v550 = vsel %vm545, %v547, %v549
      %v551 = vrot.slane %v312, 1
      %v552 = vsel %vm545, %v549, %v551
      %v553 = vrot.slane %v313, 1
      %v554 = vsel %vm545, %v551, %v553
      %v555 = vrot.slane %v314, 1
      %v556 = vsel %vm545, %v553, %v555
      %v558 = vsel %vm360, %v548, 0
      %v561 = vsel %vm360, %v550, 0
      %v564 = vsel %vm360, %v552, 0
      %v567 = vsel %vm360, %v554, 0
      %v570 = vsel %vm360, %v556, 0
      %v573 = vsel %vm376, %v541, 0
      %575 = vmatprep.subr.bf16.mxu0 0
      %576 = vmatpush1.bf16.msra.mxu0 %v573
      %577 = vmatprep.subr.bf16.mxu0 0
      %578 = vmatpush1.bf16.msra.mxu0 0
      %579 = vmatprep.subr.bf16.mxu0 0
      %580 = vmatpush1.bf16.msra.mxu0 0
      %581 = vmatprep.subr.bf16.mxu0 0
      %582 = vmatpush1.bf16.msra.mxu0 0
      %583 = vmatprep.subr.bf16.mxu0 0
      %584 = vmatpush1.bf16.msra.mxu0 0
      %585 = vmatprep.subr.bf16.mxu0 0
      %586 = vmatpush1.bf16.msra.mxu0 0
      %587 = vmatprep.subr.bf16.mxu0 0
      %588 = vmatpush1.bf16.msra.mxu0 0
      %589 = vmatprep.subr.bf16.mxu0 0
      %590 = vmatpush1.bf16.msra.mxu0 0
      %591 = vmatprep.subr.bf16.mxu0 0
      %592 = vmatpush1.bf16.msra.mxu0 0
      %593 = vmatprep.subr.bf16.mxu0 0
      %594 = vmatpush1.bf16.msra.mxu0 0
      %595 = vmatprep.subr.bf16.mxu0 0
      %596 = vmatpush1.bf16.msra.mxu0 0
      %597 = vmatprep.subr.bf16.mxu0 0
      %598 = vmatpush1.bf16.msra.mxu0 0
      %599 = vmatprep.subr.bf16.mxu0 0
      %600 = vmatpush1.bf16.msra.mxu0 0
      %601 = vmatprep.subr.bf16.mxu0 0
      %602 = vmatpush1.bf16.msra.mxu0 0
      %603 = vmatprep.subr.bf16.mxu0 0
      %604 = vmatpush1.bf16.msra.mxu0 0
      %605 = vmatprep.subr.bf16.mxu0 0
      %606 = vmatpush1.bf16.msra.mxu0 0
      %607 = vmatprep.mubr.bf16.mxu0 0
      %608 = vmatmul.mubr.bf16.gmra.mrb[0].mxu0 %v558
      %v609 = vpop.f32.mrb[0].mxu0
      %v610 = vadd.f32 0.0, %v609
      %v611 = vpop.f32.mrb[0].mxu0
      %v612 = vpop.f32.mrb[0].mxu0
      %v613 = vadd.f32 0.0, %v612
      %v614 = vpop.f32.mrb[0].mxu0
      %615 = vmatprep.mubr.bf16.mxu0 0
      %616 = vmatmul.mubr.bf16.gmra.mrb[0].mxu0 %v561
      %v617 = vpop.f32.mrb[0].mxu0
      %v618 = vadd.f32 0.0, %v617
      %v619 = vpop.f32.mrb[0].mxu0
      %v620 = vpop.f32.mrb[0].mxu0
      %v621 = vadd.f32 0.0, %v620
      %v622 = vpop.f32.mrb[0].mxu0
      %623 = vmatprep.mubr.bf16.mxu0 0
      %624 = vmatmul.mubr.bf16.gmra.mrb[0].mxu0 %v564
      %v625 = vpop.f32.mrb[0].mxu0
      %v626 = vadd.f32 0.0, %v625
      %v627 = vpop.f32.mrb[0].mxu0
      %v628 = vpop.f32.mrb[0].mxu0
      %v629 = vadd.f32 0.0, %v628
      %v630 = vpop.f32.mrb[0].mxu0
      %631 = vmatprep.mubr.bf16.mxu0 0
      %632 = vmatmul.mubr.bf16.gmra.mrb[0].mxu0 %v567
      %v633 = vpop.f32.mrb[0].mxu0
      %v634 = vadd.f32 0.0, %v633
      %v635 = vpop.f32.mrb[0].mxu0
      %v636 = vpop.f32.mrb[0].mxu0
      %v637 = vadd.f32 0.0, %v636
      %v638 = vpop.f32.mrb[0].mxu0
      %639 = vmatprep.mubr.bf16.mxu0 0
      %640 = vmatmul.mubr.bf16.gmra.mrb[0].mxu0 %v570
      %v641 = vpop.f32.mrb[0].mxu0
      %v642 = vadd.f32 0.0, %v641
      %v643 = vpop.f32.mrb[0].mxu0
      %v644 = vpop.f32.mrb[0].mxu0
      %v645 = vadd.f32 0.0, %v644
      %v646 = vpop.f32.mrb[0].mxu0
      %647 = vdwg.mxu0
      %v648 = vadd.f32 %v501, %v610
      %v649 = vadd.f32 %v504, %v613
      %v650 = vadd.f32 %v509, %v618
      %v651 = vadd.f32 %v512, %v621
      %v652 = vadd.f32 %v517, %v626
      %v653 = vadd.f32 %v520, %v629
      %v654 = vadd.f32 %v525, %v634
      %v655 = vadd.f32 %v528, %v637
      %v656 = vadd.f32 %v533, %v642
      %v657 = vadd.f32 %v536, %v645
      %v658 = vld [vmem:[%s261 + $0x4] sm:$0xe]
      %v659 = vld [vmem:[%s261 + $0x8] sm:$0xf]
      %v660 = vld [vmem:[%s261 + $0xc] sm:$0xf]
      %v661 = vld [vmem:[%s261 + $0x10] sm:$0xf]
      %v662 = vld [vmem:[%s261 + $0x14] sm:$0xf]
      %v663 = vld [vmem:[%s261 + $0x18] sm:$0xf]
      %v664 = vld [vmem:[%s261 + $0x1c] sm:$0xf]
      %v665 = vld [vmem:[%s261 + $0x20] sm:$0xf]
      %v666 = vld [vmem:[%s261 + $0x24] sm:$0xf]
      %v667 = vld [vmem:[%s261 + $0x28] sm:$0xf]
      %v668 = vld [vmem:[%s261 + $0x2c] sm:$0x1]
      %s669 = scalar_lea.vmem %s1, 12
      %v670 = vld [vmem:[%s669] sm:$0xf]
      %v682 = vunpack.c.l.b16 %v658
      %v683 = vunpack.c.l.b16 %v659
      %v684 = vunpack.c.l.b16 %v660
      %v685 = vunpack.c.l.b16 %v661
      %v686 = vunpack.c.l.b16 %v662
      %v687 = vunpack.c.l.b16 %v663
      %v688 = vunpack.c.l.b16 %v664
      %v689 = vunpack.c.l.b16 %v665
      %v690 = vunpack.c.l.b16 %v666
      %v691 = vunpack.c.l.b16 %v667
      %v692 = vunpack.c.l.b16 %v668
      %v693 = vpack.c.b16 %v683, %v682
      %v694 = vpack.c.b16 %v685, %v684
      %v695 = vpack.c.b16 %v687, %v686
      %v696 = vpack.c.b16 %v689, %v688
      %v697 = vpack.c.b16 %v691, %v690
      %v698 = vpack.c.b16 %v692, %v692
      %v699 = vrot.slane %v693, 1
      %v700 = vrot.slane %v694, 1
      %v701 = vsel %vm545, %v699, %v700
      %v702 = vrot.slane %v695, 1
      %v703 = vsel %vm545, %v700, %v702
      %v704 = vrot.slane %v696, 1
      %v705 = vsel %vm545, %v702, %v704
      %v706 = vrot.slane %v697, 1
      %v707 = vsel %vm545, %v704, %v706
      %v708 = vrot.slane %v698, 1
      %v709 = vsel %vm545, %v706, %v708
      %v711 = vsel %vm360, %v701, 0
      %v714 = vsel %vm360, %v703, 0
      %v717 = vsel %vm360, %v705, 0
      %v720 = vsel %vm360, %v707, 0
      %v723 = vsel %vm360, %v709, 0
      %v726 = vsel %vm376, %v670, 0
      %728 = vmatprep.subr.bf16.mxu0 0
      %729 = vmatpush1.bf16.msra.mxu0 %v726
      %730 = vmatprep.subr.bf16.mxu0 0
      %731 = vmatpush1.bf16.msra.mxu0 0
      %732 = vmatprep.subr.bf16.mxu0 0
      %733 = vmatpush1.bf16.msra.mxu0 0
      %734 = vmatprep.subr.bf16.mxu0 0
      %735 = vmatpush1.bf16.msra.mxu0 0
      %736 = vmatprep.subr.bf16.mxu0 0
      %737 = vmatpush1.bf16.msra.mxu0 0
      %738 = vmatprep.subr.bf16.mxu0 0
      %739 = vmatpush1.bf16.msra.mxu0 0
      %740 = vmatprep.subr.bf16.mxu0 0
      %741 = vmatpush1.bf16.msra.mxu0 0
      %742 = vmatprep.subr.bf16.mxu0 0
      %743 = vmatpush1.bf16.msra.mxu0 0
      %744 = vmatprep.subr.bf16.mxu0 0
      %745 = vmatpush1.bf16.msra.mxu0 0
      %746 = vmatprep.subr.bf16.mxu0 0
      %747 = vmatpush1.bf16.msra.mxu0 0
      %748 = vmatprep.subr.bf16.mxu0 0
      %749 = vmatpush1.bf16.msra.mxu0 0
      %750 = vmatprep.subr.bf16.mxu0 0
      %751 = vmatpush1.bf16.msra.mxu0 0
      %752 = vmatprep.subr.bf16.mxu0 0
      %753 = vmatpush1.bf16.msra.mxu0 0
      %754 = vmatprep.subr.bf16.mxu0 0
      %755 = vmatpush1.bf16.msra.mxu0 0
      %756 = vmatprep.subr.bf16.mxu0 0
      %757 = vmatpush1.bf16.msra.mxu0 0
      %758 = vmatprep.subr.bf16.mxu0 0
      %759 = vmatpush1.bf16.msra.mxu0 0
      %760 = vmatprep.mubr.bf16.mxu0 0
      %761 = vmatmul.mubr.bf16.gmra.mrb[0].mxu0 %v711
      %v762 = vpop.f32.mrb[0].mxu0
      %v763 = vadd.f32 0.0, %v762
      %v764 = vpop.f32.mrb[0].mxu0
      %v765 = vpop.f32.mrb[0].mxu0
      %v766 = vadd.f32 0.0, %v765
      %v767 = vpop.f32.mrb[0].mxu0
      %768 = vmatprep.mubr.bf16.mxu0 0
      %769 = vmatmul.mubr.bf16.gmra.mrb[0].mxu0 %v714
      %v770 = vpop.f32.mrb[0].mxu0
      %v771 = vadd.f32 0.0, %v770
      %v772 = vpop.f32.mrb[0].mxu0
      %v773 = vpop.f32.mrb[0].mxu0
      %v774 = vadd.f32 0.0, %v773
      %v775 = vpop.f32.mrb[0].mxu0
      %776 = vmatprep.mubr.bf16.mxu0 0
      %777 = vmatmul.mubr.bf16.gmra.mrb[0].mxu0 %v717
      %v778 = vpop.f32.mrb[0].mxu0
      %v779 = vadd.f32 0.0, %v778
      %v780 = vpop.f32.mrb[0].mxu0
      %v781 = vpop.f32.mrb[0].mxu0
      %v782 = vadd.f32 0.0, %v781
      %v783 = vpop.f32.mrb[0].mxu0
      %784 = vmatprep.mubr.bf16.mxu0 0
      %785 = vmatmul.mubr.bf16.gmra.mrb[0].mxu0 %v720
      %v786 = vpop.f32.mrb[0].mxu0
      %v787 = vadd.f32 0.0, %v786
      %v788 = vpop.f32.mrb[0].mxu0
      %v789 = vpop.f32.mrb[0].mxu0
      %v790 = vadd.f32 0.0, %v789
      %v791 = vpop.f32.mrb[0].mxu0
      %792 = vmatprep.mubr.bf16.mxu0 0
      %793 = vmatmul.mubr.bf16.gmra.mrb[0].mxu0 %v723
      %v794 = vpop.f32.mrb[0].mxu0
      %v795 = vadd.f32 0.0, %v794
      %v796 = vpop.f32.mrb[0].mxu0
      %v797 = vpop.f32.mrb[0].mxu0
      %v798 = vadd.f32 0.0, %v797
      %v799 = vpop.f32.mrb[0].mxu0
      %800 = vdwg.mxu0
      %v801 = vadd.f32 %v648, %v763
      %v802 = vadd.f32 %v649, %v766
      %v803 = vadd.f32 %v650, %v771
      %v804 = vadd.f32 %v651, %v774
      %v805 = vadd.f32 %v652, %v779
      %v806 = vadd.f32 %v653, %v782
      %v807 = vadd.f32 %v654, %v787
      %v808 = vadd.f32 %v655, %v790
      %v809 = vadd.f32 %v656, %v795
      %v810 = vadd.f32 %v657, %v798
      %v811 = vld [vmem:[%s261 + $0x2c] sm:$0x3]
      %s812 = scalar_lea.vmem %s1, 16
      %v813 = vld [vmem:[%s812] sm:$0xf]
      %v815 = vunpack.c.l.b16 %v811
      %v816 = vpack.c.b16 %v815, %v815
      %vm817 = vsmask.f32 6400
      %v819 = vshrl.u32 %v693, 16
      %v821 = vrot.slane %v819, 1
      %v822 = vshll.u32 %v693, 16
      %v824 = vrot.slane %v822, 2
      %v825 = vor.u32 %v821, %v824
      %v827 = vshrl.u32 %v694, 16
      %v829 = vrot.slane %v827, 1
      %v830 = vshll.u32 %v694, 16
      %v832 = vrot.slane %v830, 2
      %v833 = vor.u32 %v829, %v832
      %v834 = vsel %vm817, %v825, %v833
      %v836 = vshrl.u32 %v695, 16
      %v838 = vrot.slane %v836, 1
      %v839 = vshll.u32 %v695, 16
      %v841 = vrot.slane %v839, 2
      %v842 = vor.u32 %v838, %v841
      %v843 = vsel %vm817, %v833, %v842
      %v845 = vshrl.u32 %v696, 16
      %v847 = vrot.slane %v845, 1
      %v848 = vshll.u32 %v696, 16
      %v850 = vrot.slane %v848, 2
      %v851 = vor.u32 %v847, %v850
      %v852 = vsel %vm817, %v842, %v851
      %v854 = vshrl.u32 %v697, 16
      %v856 = vrot.slane %v854, 1
      %v857 = vshll.u32 %v697, 16
      %v859 = vrot.slane %v857, 2
      %v860 = vor.u32 %v856, %v859
      %v861 = vsel %vm817, %v851, %v860
      %v863 = vshrl.u32 %v816, 16
      %v865 = vrot.slane %v863, 1
      %v866 = vshll.u32 %v816, 16
      %v868 = vrot.slane %v866, 2
      %v869 = vor.u32 %v865, %v868
      %v870 = vsel %vm817, %v860, %v869
      %v872 = vsel %vm360, %v834, 0
      %v875 = vsel %vm360, %v843, 0
      %v878 = vsel %vm360, %v852, 0
      %v881 = vsel %vm360, %v861, 0
      %v884 = vsel %vm360, %v870, 0
      %v887 = vsel %vm376, %v813, 0
      %889 = vmatprep.subr.bf16.mxu0 0
      %890 = vmatpush1.bf16.msra.mxu0 %v887
      %891 = vmatprep.subr.bf16.mxu0 0
      %892 = vmatpush1.bf16.msra.mxu0 0
      %893 = vmatprep.subr.bf16.mxu0 0
      %894 = vmatpush1.bf16.msra.mxu0 0
      %895 = vmatprep.subr.bf16.mxu0 0
      %896 = vmatpush1.bf16.msra.mxu0 0
      %897 = vmatprep.subr.bf16.mxu0 0
      %898 = vmatpush1.bf16.msra.mxu0 0
      %899 = vmatprep.subr.bf16.mxu0 0
      %900 = vmatpush1.bf16.msra.mxu0 0
      %901 = vmatprep.subr.bf16.mxu0 0
      %902 = vmatpush1.bf16.msra.mxu0 0
      %903 = vmatprep.subr.bf16.mxu0 0
      %904 = vmatpush1.bf16.msra.mxu0 0
      %905 = vmatprep.subr.bf16.mxu0 0
      %906 = vmatpush1.bf16.msra.mxu0 0
      %907 = vmatprep.subr.bf16.mxu0 0
      %908 = vmatpush1.bf16.msra.mxu0 0
      %909 = vmatprep.subr.bf16.mxu0 0
      %910 = vmatpush1.bf16.msra.mxu0 0
      %911 = vmatprep.subr.bf16.mxu0 0
      %912 = vmatpush1.bf16.msra.mxu0 0
      %913 = vmatprep.subr.bf16.mxu0 0
      %914 = vmatpush1.bf16.msra.mxu0 0
      %915 = vmatprep.subr.bf16.mxu0 0
      %916 = vmatpush1.bf16.msra.mxu0 0
      %917 = vmatprep.subr.bf16.mxu0 0
      %918 = vmatpush1.bf16.msra.mxu0 0
      %919 = vmatprep.subr.bf16.mxu0 0
      %920 = vmatpush1.bf16.msra.mxu0 0
      %921 = vmatprep.mubr.bf16.mxu0 0
      %922 = vmatmul.mubr.bf16.gmra.mrb[0].mxu0 %v872
      %v923 = vpop.f32.mrb[0].mxu0
      %v924 = vadd.f32 0.0, %v923
      %v925 = vpop.f32.mrb[0].mxu0
      %v926 = vpop.f32.mrb[0].mxu0
      %v927 = vadd.f32 0.0, %v926
      %v928 = vpop.f32.mrb[0].mxu0
      %929 = vmatprep.mubr.bf16.mxu0 0
      %930 = vmatmul.mubr.bf16.gmra.mrb[0].mxu0 %v875
      %v931 = vpop.f32.mrb[0].mxu0
      %v932 = vadd.f32 0.0, %v931
      %v933 = vpop.f32.mrb[0].mxu0
      %v934 = vpop.f32.mrb[0].mxu0
      %v935 = vadd.f32 0.0, %v934
      %v936 = vpop.f32.mrb[0].mxu0
      %937 = vmatprep.mubr.bf16.mxu0 0
      %938 = vmatmul.mubr.bf16.gmra.mrb[0].mxu0 %v878
      %v939 = vpop.f32.mrb[0].mxu0
      %v940 = vadd.f32 0.0, %v939
      %v941 = vpop.f32.mrb[0].mxu0
      %v942 = vpop.f32.mrb[0].mxu0
      %v943 = vadd.f32 0.0, %v942
      %v944 = vpop.f32.mrb[0].mxu0
      %945 = vmatprep.mubr.bf16.mxu0 0
      %946 = vmatmul.mubr.bf16.gmra.mrb[0].mxu0 %v881
      %v947 = vpop.f32.mrb[0].mxu0
      %v948 = vadd.f32 0.0, %v947
      %v949 = vpop.f32.mrb[0].mxu0
      %v950 = vpop.f32.mrb[0].mxu0
      %v951 = vadd.f32 0.0, %v950
      %v952 = vpop.f32.mrb[0].mxu0
      %953 = vmatprep.mubr.bf16.mxu0 0
      %954 = vmatmul.mubr.bf16.gmra.mrb[0].mxu0 %v884
      %v955 = vpop.f32.mrb[0].mxu0
      %v956 = vadd.f32 0.0, %v955
      %v957 = vpop.f32.mrb[0].mxu0
      %v958 = vpop.f32.mrb[0].mxu0
      %v959 = vadd.f32 0.0, %v958
      %v960 = vpop.f32.mrb[0].mxu0
      %961 = vdwg.mxu0
      %v962 = vadd.f32 %v801, %v924
      %v963 = vadd.f32 %v802, %v927
      %v964 = vadd.f32 %v803, %v932
      %v965 = vadd.f32 %v804, %v935
      %v966 = vadd.f32 %v805, %v940
      %v967 = vadd.f32 %v806, %v943
      %v968 = vadd.f32 %v807, %v948
      %v969 = vadd.f32 %v808, %v951
      %v970 = vadd.f32 %v809, %v956
      %v971 = vadd.f32 %v810, %v959
      %v972 = vld [vmem:[%s261 + $0x4] sm:$0xc]
      %s973 = scalar_lea.vmem %s1, 20
      %v974 = vld [vmem:[%s973] sm:$0xf]
      %v976 = vunpack.c.l.b16 %v972
      %v977 = vpack.c.b16 %v683, %v976
      %vm978 = vcmask 1045504
      %v979 = vrot.slane %v977, 2
      %v980 = vrot.slane %v694, 2
      %v981 = vsel %vm978, %v979, %v980
      %v982 = vrot.slane %v695, 2
      %v983 = vsel %vm978, %v980, %v982
      %v984 = vrot.slane %v696, 2
      %v985 = vsel %vm978, %v982, %v984
      %v986 = vrot.slane %v697, 2
      %v987 = vsel %vm978, %v984, %v986
      %v988 = vrot.slane %v816, 2
      %v989 = vsel %vm978, %v986, %v988
      %v991 = vsel %vm360, %v981, 0
      %v994 = vsel %vm360, %v983, 0
      %v997 = vsel %vm360, %v985, 0
      %v1000 = vsel %vm360, %v987, 0
      %v1003 = vsel %vm360, %v989, 0
      %v1006 = vsel %vm376, %v974, 0
      %1008 = vmatprep.subr.bf16.mxu0 0
      %1009 = vmatpush1.bf16.msra.mxu0 %v1006
      %1010 = vmatprep.subr.bf16.mxu0 0
      %1011 = vmatpush1.bf16.msra.mxu0 0
      %1012 = vmatprep.subr.bf16.mxu0 0
      %1013 = vmatpush1.bf16.msra.mxu0 0
      %1014 = vmatprep.subr.bf16.mxu0 0
      %1015 = vmatpush1.bf16.msra.mxu0 0
      %1016 = vmatprep.subr.bf16.mxu0 0
      %1017 = vmatpush1.bf16.msra.mxu0 0
      %1018 = vmatprep.subr.bf16.mxu0 0
      %1019 = vmatpush1.bf16.msra.mxu0 0
      %1020 = vmatprep.subr.bf16.mxu0 0
      %1021 = vmatpush1.bf16.msra.mxu0 0
      %1022 = vmatprep.subr.bf16.mxu0 0
      %1023 = vmatpush1.bf16.msra.mxu0 0
      %1024 = vmatprep.subr.bf16.mxu0 0
      %1025 = vmatpush1.bf16.msra.mxu0 0
      %1026 = vmatprep.subr.bf16.mxu0 0
      %1027 = vmatpush1.bf16.msra.mxu0 0
      %1028 = vmatprep.subr.bf16.mxu0 0
      %1029 = vmatpush1.bf16.msra.mxu0 0
      %1030 = vmatprep.subr.bf16.mxu0 0
      %1031 = vmatpush1.bf16.msra.mxu0 0
      %1032 = vmatprep.subr.bf16.mxu0 0
      %1033 = vmatpush1.bf16.msra.mxu0 0
      %1034 = vmatprep.subr.bf16.mxu0 0
      %1035 = vmatpush1.bf16.msra.mxu0 0
      %1036 = vmatprep.subr.bf16.mxu0 0
      %1037 = vmatpush1.bf16.msra.mxu0 0
      %1038 = vmatprep.subr.bf16.mxu0 0
      %1039 = vmatpush1.bf16.msra.mxu0 0
      %1040 = vmatprep.mubr.bf16.mxu0 0
      %1041 = vmatmul.mubr.bf16.gmra.mrb[0].mxu0 %v991
      %v1042 = vpop.f32.mrb[0].mxu0
      %v1043 = vadd.f32 0.0, %v1042
      %v1044 = vpop.f32.mrb[0].mxu0
      %v1045 = vpop.f32.mrb[0].mxu0
      %v1046 = vadd.f32 0.0, %v1045
      %v1047 = vpop.f32.mrb[0].mxu0
      %1048 = vmatprep.mubr.bf16.mxu0 0
      %1049 = vmatmul.mubr.bf16.gmra.mrb[0].mxu0 %v994
      %v1050 = vpop.f32.mrb[0].mxu0
      %v1051 = vadd.f32 0.0, %v1050
      %v1052 = vpop.f32.mrb[0].mxu0
      %v1053 = vpop.f32.mrb[0].mxu0
      %v1054 = vadd.f32 0.0, %v1053
      %v1055 = vpop.f32.mrb[0].mxu0
      %1056 = vmatprep.mubr.bf16.mxu0 0
      %1057 = vmatmul.mubr.bf16.gmra.mrb[0].mxu0 %v997
      %v1058 = vpop.f32.mrb[0].mxu0
      %v1059 = vadd.f32 0.0, %v1058
      %v1060 = vpop.f32.mrb[0].mxu0
      %v1061 = vpop.f32.mrb[0].mxu0
      %v1062 = vadd.f32 0.0, %v1061
      %v1063 = vpop.f32.mrb[0].mxu0
      %1064 = vmatprep.mubr.bf16.mxu0 0
      %1065 = vmatmul.mubr.bf16.gmra.mrb[0].mxu0 %v1000
      %v1066 = vpop.f32.mrb[0].mxu0
      %v1067 = vadd.f32 0.0, %v1066
      %v1068 = vpop.f32.mrb[0].mxu0
      %v1069 = vpop.f32.mrb[0].mxu0
      %v1070 = vadd.f32 0.0, %v1069
      %v1071 = vpop.f32.mrb[0].mxu0
      %1072 = vmatprep.mubr.bf16.mxu0 0
      %1073 = vmatmul.mubr.bf16.gmra.mrb[0].mxu0 %v1003
      %v1074 = vpop.f32.mrb[0].mxu0
      %v1075 = vadd.f32 0.0, %v1074
      %v1076 = vpop.f32.mrb[0].mxu0
      %v1077 = vpop.f32.mrb[0].mxu0
      %v1078 = vadd.f32 0.0, %v1077
      %v1079 = vpop.f32.mrb[0].mxu0
      %1080 = vdwg.mxu0
      %v1081 = vadd.f32 %v962, %v1043
      %v1082 = vadd.f32 %v963, %v1046
      %v1083 = vadd.f32 %v964, %v1051
      %v1084 = vadd.f32 %v965, %v1054
      %v1085 = vadd.f32 %v966, %v1059
      %v1086 = vadd.f32 %v967, %v1062
      %v1087 = vadd.f32 %v968, %v1067
      %v1088 = vadd.f32 %v969, %v1070
      %v1089 = vadd.f32 %v970, %v1075
      %v1090 = vadd.f32 %v971, %v1078
      %v1091 = vld [vmem:[%s261 + $0x8] sm:$0xc]
      %v1092 = vld [vmem:[%s261 + $0xc] sm:$0xf]
      %v1093 = vld [vmem:[%s261 + $0x10] sm:$0xf]
      %v1094 = vld [vmem:[%s261 + $0x14] sm:$0xf]
      %v1095 = vld [vmem:[%s261 + $0x18] sm:$0xf]
      %v1096 = vld [vmem:[%s261 + $0x1c] sm:$0xf]
      %v1097 = vld [vmem:[%s261 + $0x20] sm:$0xf]
      %v1098 = vld [vmem:[%s261 + $0x24] sm:$0xf]
      %v1099 = vld [vmem:[%s261 + $0x28] sm:$0xf]
      %v1100 = vld [vmem:[%s261 + $0x2c] sm:$0xf]
      %v1101 = vld [vmem:[%s261 + $0x30] sm:$0x3]
      %s1102 = scalar_lea.vmem %s1, 24
      %v1103 = vld [vmem:[%s1102] sm:$0xf]
      %v1115 = vunpack.c.l.b16 %v1091
      %v1116 = vunpack.c.l.b16 %v1092
      %v1117 = vunpack.c.l.b16 %v1093
      %v1118 = vunpack.c.l.b16 %v1094
      %v1119 = vunpack.c.l.b16 %v1095
      %v1120 = vunpack.c.l.b16 %v1096
      %v1121 = vunpack.c.l.b16 %v1097
      %v1122 = vunpack.c.l.b16 %v1098
      %v1123 = vunpack.c.l.b16 %v1099
      %v1124 = vunpack.c.l.b16 %v1100
      %v1125 = vunpack.c.l.b16 %v1101
      %v1126 = vpack.c.b16 %v1116, %v1115
      %v1127 = vpack.c.b16 %v1118, %v1117
      %v1128 = vpack.c.b16 %v1120, %v1119
      %v1129 = vpack.c.b16 %v1122, %v1121
      %v1130 = vpack.c.b16 %v1124, %v1123
      %v1131 = vpack.c.b16 %v1125, %v1125
      %v1132 = vrot.slane %v1126, 2
      %v1133 = vrot.slane %v1127, 2
      %v1134 = vsel %vm978, %v1132, %v1133
      %v1135 = vrot.slane %v1128, 2
      %v1136 = vsel %vm978, %v1133, %v1135
      %v1137 = vrot.slane %v1129, 2
      %v1138 = vsel %vm978, %v1135, %v1137
      %v1139 = vrot.slane %v1130, 2
      %v1140 = vsel %vm978, %v1137, %v1139
      %v1141 = vrot.slane %v1131, 2
      %v1142 = vsel %vm978, %v1139, %v1141
      %v1144 = vsel %vm360, %v1134, 0
      %v1147 = vsel %vm360, %v1136, 0
      %v1150 = vsel %vm360, %v1138, 0
      %v1153 = vsel %vm360, %v1140, 0
      %v1156 = vsel %vm360, %v1142, 0
      %v1159 = vsel %vm376, %v1103, 0
      %1161 = vmatprep.subr.bf16.mxu0 0
      %1162 = vmatpush1.bf16.msra.mxu0 %v1159
      %1163 = vmatprep.subr.bf16.mxu0 0
      %1164 = vmatpush1.bf16.msra.mxu0 0
      %1165 = vmatprep.subr.bf16.mxu0 0
      %1166 = vmatpush1.bf16.msra.mxu0 0
      %1167 = vmatprep.subr.bf16.mxu0 0
      %1168 = vmatpush1.bf16.msra.mxu0 0
      %1169 = vmatprep.subr.bf16.mxu0 0
      %1170 = vmatpush1.bf16.msra.mxu0 0
      %1171 = vmatprep.subr.bf16.mxu0 0
      %1172 = vmatpush1.bf16.msra.mxu0 0
      %1173 = vmatprep.subr.bf16.mxu0 0
      %1174 = vmatpush1.bf16.msra.mxu0 0
      %1175 = vmatprep.subr.bf16.mxu0 0
      %1176 = vmatpush1.bf16.msra.mxu0 0
      %1177 = vmatprep.subr.bf16.mxu0 0
      %1178 = vmatpush1.bf16.msra.mxu0 0
      %1179 = vmatprep.subr.bf16.mxu0 0
      %1180 = vmatpush1.bf16.msra.mxu0 0
      %1181 = vmatprep.subr.bf16.mxu0 0
      %1182 = vmatpush1.bf16.msra.mxu0 0
      %1183 = vmatprep.subr.bf16.mxu0 0
      %1184 = vmatpush1.bf16.msra.mxu0 0
      %1185 = vmatprep.subr.bf16.mxu0 0
      %1186 = vmatpush1.bf16.msra.mxu0 0
      %1187 = vmatprep.subr.bf16.mxu0 0
      %1188 = vmatpush1.bf16.msra.mxu0 0
      %1189 = vmatprep.subr.bf16.mxu0 0
      %1190 = vmatpush1.bf16.msra.mxu0 0
      %1191 = vmatprep.subr.bf16.mxu0 0
      %1192 = vmatpush1.bf16.msra.mxu0 0
      %1193 = vmatprep.mubr.bf16.mxu0 0
      %1194 = vmatmul.mubr.bf16.gmra.mrb[0].mxu0 %v1144
      %v1195 = vpop.f32.mrb[0].mxu0
      %v1196 = vadd.f32 0.0, %v1195
      %v1197 = vpop.f32.mrb[0].mxu0
      %v1198 = vpop.f32.mrb[0].mxu0
      %v1199 = vadd.f32 0.0, %v1198
      %v1200 = vpop.f32.mrb[0].mxu0
      %1201 = vmatprep.mubr.bf16.mxu0 0
      %1202 = vmatmul.mubr.bf16.gmra.mrb[0].mxu0 %v1147
      %v1203 = vpop.f32.mrb[0].mxu0
      %v1204 = vadd.f32 0.0, %v1203
      %v1205 = vpop.f32.mrb[0].mxu0
      %v1206 = vpop.f32.mrb[0].mxu0
      %v1207 = vadd.f32 0.0, %v1206
      %v1208 = vpop.f32.mrb[0].mxu0
      %1209 = vmatprep.mubr.bf16.mxu0 0
      %1210 = vmatmul.mubr.bf16.gmra.mrb[0].mxu0 %v1150
      %v1211 = vpop.f32.mrb[0].mxu0
      %v1212 = vadd.f32 0.0, %v1211
      %v1213 = vpop.f32.mrb[0].mxu0
      %v1214 = vpop.f32.mrb[0].mxu0
      %v1215 = vadd.f32 0.0, %v1214
      %v1216 = vpop.f32.mrb[0].mxu0
      %1217 = vmatprep.mubr.bf16.mxu0 0
      %1218 = vmatmul.mubr.bf16.gmra.mrb[0].mxu0 %v1153
      %v1219 = vpop.f32.mrb[0].mxu0
      %v1220 = vadd.f32 0.0, %v1219
      %v1221 = vpop.f32.mrb[0].mxu0
      %v1222 = vpop.f32.mrb[0].mxu0
      %v1223 = vadd.f32 0.0, %v1222
      %v1224 = vpop.f32.mrb[0].mxu0
      %1225 = vmatprep.mubr.bf16.mxu0 0
      %1226 = vmatmul.mubr.bf16.gmra.mrb[0].mxu0 %v1156
      %v1227 = vpop.f32.mrb[0].mxu0
      %v1228 = vadd.f32 0.0, %v1227
      %v1229 = vpop.f32.mrb[0].mxu0
      %v1230 = vpop.f32.mrb[0].mxu0
      %v1231 = vadd.f32 0.0, %v1230
      %v1232 = vpop.f32.mrb[0].mxu0
      %1233 = vdwg.mxu0
      %v1234 = vadd.f32 %v1081, %v1196
      %v1235 = vadd.f32 %v1082, %v1199
      %v1236 = vadd.f32 %v1083, %v1204
      %v1237 = vadd.f32 %v1084, %v1207
      %v1238 = vadd.f32 %v1085, %v1212
      %v1239 = vadd.f32 %v1086, %v1215
      %v1240 = vadd.f32 %v1087, %v1220
      %v1241 = vadd.f32 %v1088, %v1223
      %v1242 = vadd.f32 %v1089, %v1228
      %v1243 = vadd.f32 %v1090, %v1231
      %v1244 = vld [vmem:[%s261 + $0x30] sm:$0x7]
      %s1245 = scalar_lea.vmem %s1, 28
      %v1246 = vld [vmem:[%s1245] sm:$0xf]
      %v1248 = vunpack.c.l.b16 %v1244
      %v1249 = vpack.c.b16 %v1248, %v1248
      %vm1250 = vsmask.f32 5376
      %v1252 = vshrl.u32 %v1126, 16
      %v1254 = vrot.slane %v1252, 2
      %v1255 = vshll.u32 %v1126, 16
      %v1257 = vrot.slane %v1255, 3
      %v1258 = vor.u32 %v1254, %v1257
      %v1260 = vshrl.u32 %v1127, 16
      %v1262 = vrot.slane %v1260, 2
      %v1263 = vshll.u32 %v1127, 16
      %v1265 = vrot.slane %v1263, 3
      %v1266 = vor.u32 %v1262, %v1265
      %v1267 = vsel %vm1250, %v1258, %v1266
      %v1269 = vshrl.u32 %v1128, 16
      %v1271 = vrot.slane %v1269, 2
      %v1272 = vshll.u32 %v1128, 16
      %v1274 = vrot.slane %v1272, 3
      %v1275 = vor.u32 %v1271, %v1274
      %v1276 = vsel %vm1250, %v1266, %v1275
      %v1278 = vshrl.u32 %v1129, 16
      %v1280 = vrot.slane %v1278, 2
      %v1281 = vshll.u32 %v1129, 16
      %v1283 = vrot.slane %v1281, 3
      %v1284 = vor.u32 %v1280, %v1283
      %v1285 = vsel %vm1250, %v1275, %v1284
      %v1287 = vshrl.u32 %v1130, 16
      %v1289 = vrot.slane %v1287, 2
      %v1290 = vshll.u32 %v1130, 16
      %v1292 = vrot.slane %v1290, 3
      %v1293 = vor.u32 %v1289, %v1292
      %v1294 = vsel %vm1250, %v1284, %v1293
      %v1296 = vshrl.u32 %v1249, 16
      %v1298 = vrot.slane %v1296, 2
      %v1299 = vshll.u32 %v1249, 16
      %v1301 = vrot.slane %v1299, 3
      %v1302 = vor.u32 %v1298, %v1301
      %v1303 = vsel %vm1250, %v1293, %v1302
      %v1305 = vsel %vm360, %v1267, 0
      %v1308 = vsel %vm360, %v1276, 0
      %v1311 = vsel %vm360, %v1285, 0
      %v1314 = vsel %vm360, %v1294, 0
      %v1317 = vsel %vm360, %v1303, 0
      %v1320 = vsel %vm376, %v1246, 0
      %1322 = vmatprep.subr.bf16.mxu0 0
      %1323 = vmatpush1.bf16.msra.mxu0 %v1320
      %1324 = vmatprep.subr.bf16.mxu0 0
      %1325 = vmatpush1.bf16.msra.mxu0 0
      %1326 = vmatprep.subr.bf16.mxu0 0
      %1327 = vmatpush1.bf16.msra.mxu0 0
      %1328 = vmatprep.subr.bf16.mxu0 0
      %1329 = vmatpush1.bf16.msra.mxu0 0
      %1330 = vmatprep.subr.bf16.mxu0 0
      %1331 = vmatpush1.bf16.msra.mxu0 0
      %1332 = vmatprep.subr.bf16.mxu0 0
      %1333 = vmatpush1.bf16.msra.mxu0 0
      %1334 = vmatprep.subr.bf16.mxu0 0
      %1335 = vmatpush1.bf16.msra.mxu0 0
      %1336 = vmatprep.subr.bf16.mxu0 0
      %1337 = vmatpush1.bf16.msra.mxu0 0
      %1338 = vmatprep.subr.bf16.mxu0 0
      %1339 = vmatpush1.bf16.msra.mxu0 0
      %1340 = vmatprep.subr.bf16.mxu0 0
      %1341 = vmatpush1.bf16.msra.mxu0 0
      %1342 = vmatprep.subr.bf16.mxu0 0
      %1343 = vmatpush1.bf16.msra.mxu0 0
      %1344 = vmatprep.subr.bf16.mxu0 0
      %1345 = vmatpush1.bf16.msra.mxu0 0
      %1346 = vmatprep.subr.bf16.mxu0 0
      %1347 = vmatpush1.bf16.msra.mxu0 0
      %1348 = vmatprep.subr.bf16.mxu0 0
      %1349 = vmatpush1.bf16.msra.mxu0 0
      %1350 = vmatprep.subr.bf16.mxu0 0
      %1351 = vmatpush1.bf16.msra.mxu0 0
      %1352 = vmatprep.subr.bf16.mxu0 0
      %1353 = vmatpush1.bf16.msra.mxu0 0
      %1354 = vmatprep.mubr.bf16.mxu0 0
      %1355 = vmatmul.mubr.bf16.gmra.mrb[0].mxu0 %v1305
      %v1356 = vpop.f32.mrb[0].mxu0
      %v1357 = vadd.f32 0.0, %v1356
      %v1358 = vpop.f32.mrb[0].mxu0
      %v1359 = vpop.f32.mrb[0].mxu0
      %v1360 = vadd.f32 0.0, %v1359
      %v1361 = vpop.f32.mrb[0].mxu0
      %1362 = vmatprep.mubr.bf16.mxu0 0
      %1363 = vmatmul.mubr.bf16.gmra.mrb[0].mxu0 %v1308
      %v1364 = vpop.f32.mrb[0].mxu0
      %v1365 = vadd.f32 0.0, %v1364
      %v1366 = vpop.f32.mrb[0].mxu0
      %v1367 = vpop.f32.mrb[0].mxu0
      %v1368 = vadd.f32 0.0, %v1367
      %v1369 = vpop.f32.mrb[0].mxu0
      %1370 = vmatprep.mubr.bf16.mxu0 0
      %1371 = vmatmul.mubr.bf16.gmra.mrb[0].mxu0 %v1311
      %v1372 = vpop.f32.mrb[0].mxu0
      %v1373 = vadd.f32 0.0, %v1372
      %v1374 = vpop.f32.mrb[0].mxu0
      %v1375 = vpop.f32.mrb[0].mxu0
      %v1376 = vadd.f32 0.0, %v1375
      %v1377 = vpop.f32.mrb[0].mxu0
      %1378 = vmatprep.mubr.bf16.mxu0 0
      %1379 = vmatmul.mubr.bf16.gmra.mrb[0].mxu0 %v1314
      %v1380 = vpop.f32.mrb[0].mxu0
      %v1381 = vadd.f32 0.0, %v1380
      %v1382 = vpop.f32.mrb[0].mxu0
      %v1383 = vpop.f32.mrb[0].mxu0
      %v1384 = vadd.f32 0.0, %v1383
      %v1385 = vpop.f32.mrb[0].mxu0
      %1386 = vmatprep.mubr.bf16.mxu0 0
      %1387 = vmatmul.mubr.bf16.gmra.mrb[0].mxu0 %v1317
      %v1388 = vpop.f32.mrb[0].mxu0
      %v1389 = vadd.f32 0.0, %v1388
      %v1390 = vpop.f32.mrb[0].mxu0
      %v1391 = vpop.f32.mrb[0].mxu0
      %v1392 = vadd.f32 0.0, %v1391
      %v1393 = vpop.f32.mrb[0].mxu0
      %1394 = vdwg.mxu0
      %v1395 = vadd.f32 %v1234, %v1357
      %v1396 = vadd.f32 %v1235, %v1360
      %v1397 = vadd.f32 %v1236, %v1365
      %v1398 = vadd.f32 %v1237, %v1368
      %v1399 = vadd.f32 %v1238, %v1373
      %v1400 = vadd.f32 %v1239, %v1376
      %v1401 = vadd.f32 %v1240, %v1381
      %v1402 = vadd.f32 %v1241, %v1384
      %v1403 = vadd.f32 %v1242, %v1389
      %v1404 = vadd.f32 %v1243, %v1392
      %v1405 = vld [vmem:[%s261 + $0x8] sm:$0x8]
      %s1406 = scalar_lea.vmem %s1, 32
      %v1407 = vld [vmem:[%s1406] sm:$0xf]
      %v1409 = vunpack.c.l.b16 %v1405
      %v1410 = vpack.c.b16 %v1116, %v1409
      %vm1411 = vcmask 1044480
      %v1412 = vrot.slane %v1410, 3
      %v1413 = vrot.slane %v1127, 3
      %v1414 = vsel %vm1411, %v1412, %v1413
      %v1415 = vrot.slane %v1128, 3
      %v1416 = vsel %vm1411, %v1413, %v1415
      %v1417 = vrot.slane %v1129, 3
      %v1418 = vsel %vm1411, %v1415, %v1417
      %v1419 = vrot.slane %v1130, 3
      %v1420 = vsel %vm1411, %v1417, %v1419
      %v1421 = vrot.slane %v1249, 3
      %v1422 = vsel %vm1411, %v1419, %v1421
      %v1424 = vsel %vm360, %v1414, 0
      %v1427 = vsel %vm360, %v1416, 0
      %v1430 = vsel %vm360, %v1418, 0
      %v1433 = vsel %vm360, %v1420, 0
      %v1436 = vsel %vm360, %v1422, 0
      %v1439 = vsel %vm376, %v1407, 0
      %1441 = vmatprep.subr.bf16.mxu0 0
      %1442 = vmatpush1.bf16.msra.mxu0 %v1439
      %1443 = vmatprep.subr.bf16.mxu0 0
      %1444 = vmatpush1.bf16.msra.mxu0 0
      %1445 = vmatprep.subr.bf16.mxu0 0
      %1446 = vmatpush1.bf16.msra.mxu0 0
      %1447 = vmatprep.subr.bf16.mxu0 0
      %1448 = vmatpush1.bf16.msra.mxu0 0
      %1449 = vmatprep.subr.bf16.mxu0 0
      %1450 = vmatpush1.bf16.msra.mxu0 0
      %1451 = vmatprep.subr.bf16.mxu0 0
      %1452 = vmatpush1.bf16.msra.mxu0 0
      %1453 = vmatprep.subr.bf16.mxu0 0
      %1454 = vmatpush1.bf16.msra.mxu0 0
      %1455 = vmatprep.subr.bf16.mxu0 0
      %1456 = vmatpush1.bf16.msra.mxu0 0
      %1457 = vmatprep.subr.bf16.mxu0 0
      %1458 = vmatpush1.bf16.msra.mxu0 0
      %1459 = vmatprep.subr.bf16.mxu0 0
      %1460 = vmatpush1.bf16.msra.mxu0 0
      %1461 = vmatprep.subr.bf16.mxu0 0
      %1462 = vmatpush1.bf16.msra.mxu0 0
      %1463 = vmatprep.subr.bf16.mxu0 0
      %1464 = vmatpush1.bf16.msra.mxu0 0
      %1465 = vmatprep.subr.bf16.mxu0 0
      %1466 = vmatpush1.bf16.msra.mxu0 0
      %1467 = vmatprep.subr.bf16.mxu0 0
      %1468 = vmatpush1.bf16.msra.mxu0 0
      %1469 = vmatprep.subr.bf16.mxu0 0
      %1470 = vmatpush1.bf16.msra.mxu0 0
      %1471 = vmatprep.subr.bf16.mxu0 0
      %1472 = vmatpush1.bf16.msra.mxu0 0
      %1473 = vmatprep.mubr.bf16.mxu0 0
      %1474 = vmatmul.mubr.bf16.gmra.mrb[0].mxu0 %v1424
      %v1475 = vpop.f32.mrb[0].mxu0
      %v1476 = vadd.f32 0.0, %v1475
      %v1477 = vpop.f32.mrb[0].mxu0
      %v1478 = vpop.f32.mrb[0].mxu0
      %v1479 = vadd.f32 0.0, %v1478
      %v1480 = vpop.f32.mrb[0].mxu0
      %1481 = vmatprep.mubr.bf16.mxu0 0
      %1482 = vmatmul.mubr.bf16.gmra.mrb[0].mxu0 %v1427
      %v1483 = vpop.f32.mrb[0].mxu0
      %v1484 = vadd.f32 0.0, %v1483
      %v1485 = vpop.f32.mrb[0].mxu0
      %v1486 = vpop.f32.mrb[0].mxu0
      %v1487 = vadd.f32 0.0, %v1486
      %v1488 = vpop.f32.mrb[0].mxu0
      %1489 = vmatprep.mubr.bf16.mxu0 0
      %1490 = vmatmul.mubr.bf16.gmra.mrb[0].mxu0 %v1430
      %v1491 = vpop.f32.mrb[0].mxu0
      %v1492 = vadd.f32 0.0, %v1491
      %v1493 = vpop.f32.mrb[0].mxu0
      %v1494 = vpop.f32.mrb[0].mxu0
      %v1495 = vadd.f32 0.0, %v1494
      %v1496 = vpop.f32.mrb[0].mxu0
      %1497 = vmatprep.mubr.bf16.mxu0 0
      %1498 = vmatmul.mubr.bf16.gmra.mrb[0].mxu0 %v1433
      %v1499 = vpop.f32.mrb[0].mxu0
      %v1500 = vadd.f32 0.0, %v1499
      %v1501 = vpop.f32.mrb[0].mxu0
      %v1502 = vpop.f32.mrb[0].mxu0
      %v1503 = vadd.f32 0.0, %v1502
      %v1504 = vpop.f32.mrb[0].mxu0
      %1505 = vmatprep.mubr.bf16.mxu0 0
      %1506 = vmatmul.mubr.bf16.gmra.mrb[0].mxu0 %v1436
      %v1507 = vpop.f32.mrb[0].mxu0
      %v1508 = vadd.f32 0.0, %v1507
      %v1509 = vpop.f32.mrb[0].mxu0
      %v1510 = vpop.f32.mrb[0].mxu0
      %v1511 = vadd.f32 0.0, %v1510
      %v1512 = vpop.f32.mrb[0].mxu0
      %1513 = vdwg.mxu0
      %v1514 = vadd.f32 %v1395, %v1476
      %v1515 = vadd.f32 %v1396, %v1479
      %v1516 = vadd.f32 %v1397, %v1484
      %v1517 = vadd.f32 %v1398, %v1487
      %v1518 = vadd.f32 %v1399, %v1492
      %v1519 = vadd.f32 %v1400, %v1495
      %v1520 = vadd.f32 %v1401, %v1500
      %v1521 = vadd.f32 %v1402, %v1503
      %v1522 = vadd.f32 %v1403, %v1508
      %v1523 = vadd.f32 %v1404, %v1511
      %v1524 = vld [vmem:[%s2] sm:$0x1]
      %v1526 = vlaneseq
      %v1527 = vshrl.u32 %v1526, 7
      %v1528 = vsub.s32 0, %v1527
      %v1529 = vrot.slane %v1524, %v1528
      %v1531 = vadd.f32 %v1514, %v1529
      %v1532 = vadd.f32 %v1515, %v1529
      %v1533 = vadd.f32 %v1516, %v1529
      %v1534 = vadd.f32 %v1517, %v1529
      %v1535 = vadd.f32 %v1518, %v1529
      %v1536 = vadd.f32 %v1519, %v1529
      %v1537 = vadd.f32 %v1520, %v1529
      %v1538 = vadd.f32 %v1521, %v1529
      %v1539 = vadd.f32 %v1522, %v1529
      %v1540 = vadd.f32 %v1523, %v1529
      %v1541 = vld [vmem:[%s266] sm:$0xf]
      %v1542 = vld [vmem:[%s266 + $0x4] sm:$0xf]
      %v1543 = vld [vmem:[%s266 + $0x8] sm:$0xf]
      %v1544 = vld [vmem:[%s266 + $0xc] sm:$0xf]
      %v1545 = vld [vmem:[%s266 + $0x10] sm:$0xf]
      %v1546 = vld [vmem:[%s266 + $0x14] sm:$0xf]
      %v1547 = vld [vmem:[%s266 + $0x18] sm:$0xf]
      %v1548 = vld [vmem:[%s266 + $0x1c] sm:$0xf]
      %v1549 = vld [vmem:[%s266 + $0x20] sm:$0xf]
      %v1550 = vld [vmem:[%s266 + $0x24] sm:$0xf]
      %v1551 = vld [vmem:[%s4] sm:$0x3]
      %v1562 = vunpack.c.l.b16 %v1541
      %v1563 = vunpack.c.l.b16 %v1542
      %v1564 = vunpack.c.l.b16 %v1543
      %v1565 = vunpack.c.l.b16 %v1544
      %v1566 = vunpack.c.l.b16 %v1545
      %v1567 = vunpack.c.l.b16 %v1546
      %v1568 = vunpack.c.l.b16 %v1547
      %v1569 = vunpack.c.l.b16 %v1548
      %v1570 = vunpack.c.l.b16 %v1549
      %v1571 = vunpack.c.l.b16 %v1550
      %v1572 = vpack.c.b16 %v1563, %v1562
      %v1573 = vpack.c.b16 %v1565, %v1564
      %v1574 = vpack.c.b16 %v1567, %v1566
      %v1575 = vpack.c.b16 %v1569, %v1568
      %v1576 = vpack.c.b16 %v1571, %v1570
      %vm1577 = vcmask 31744
      %v1579 = vsel %vm1577, %v1572, 0
      %v1582 = vsel %vm1577, %v1573, 0
      %v1585 = vsel %vm1577, %v1574, 0
      %v1588 = vsel %vm1577, %v1575, 0
      %v1591 = vsel %vm1577, %v1576, 0
      %vm1593 = vcmask 1041408
      %v1595 = vsel %vm1593, %v1551, 0
      %1597 = vmatprep.subr.bf16.mxu0 0
      %1598 = vmatpush1.bf16.msra.mxu0 %v1595
      %1599 = vmatprep.subr.bf16.mxu0 0
      %1600 = vmatpush1.bf16.msra.mxu0 0
      %1601 = vmatprep.subr.bf16.mxu0 0
      %1602 = vmatpush1.bf16.msra.mxu0 0
      %1603 = vmatprep.subr.bf16.mxu0 0
      %1604 = vmatpush1.bf16.msra.mxu0 0
      %1605 = vmatprep.subr.bf16.mxu0 0
      %1606 = vmatpush1.bf16.msra.mxu0 0
      %1607 = vmatprep.subr.bf16.mxu0 0
      %1608 = vmatpush1.bf16.msra.mxu0 0
      %1609 = vmatprep.subr.bf16.mxu0 0
      %1610 = vmatpush1.bf16.msra.mxu0 0
      %1611 = vmatprep.subr.bf16.mxu0 0
      %1612 = vmatpush1.bf16.msra.mxu0 0
      %1613 = vmatprep.subr.bf16.mxu0 0
      %1614 = vmatpush1.bf16.msra.mxu0 0
      %1615 = vmatprep.subr.bf16.mxu0 0
      %1616 = vmatpush1.bf16.msra.mxu0 0
      %1617 = vmatprep.subr.bf16.mxu0 0
      %1618 = vmatpush1.bf16.msra.mxu0 0
      %1619 = vmatprep.subr.bf16.mxu0 0
      %1620 = vmatpush1.bf16.msra.mxu0 0
      %1621 = vmatprep.subr.bf16.mxu0 0
      %1622 = vmatpush1.bf16.msra.mxu0 0
      %1623 = vmatprep.subr.bf16.mxu0 0
      %1624 = vmatpush1.bf16.msra.mxu0 0
      %1625 = vmatprep.subr.bf16.mxu0 0
      %1626 = vmatpush1.bf16.msra.mxu0 0
      %1627 = vmatprep.subr.bf16.mxu0 0
      %1628 = vmatpush1.bf16.msra.mxu0 0
      %1629 = vmatprep.mubr.bf16.mxu0 0
      %1630 = vmatmul.mubr.bf16.gmra.mrb[0].mxu0 %v1579
      %v1631 = vpop.f32.mrb[0].mxu0
      %v1632 = vadd.f32 0.0, %v1631
      %v1633 = vpop.f32.mrb[0].mxu0
      %v1634 = vpop.f32.mrb[0].mxu0
      %v1635 = vadd.f32 0.0, %v1634
      %v1636 = vpop.f32.mrb[0].mxu0
      %1637 = vmatprep.mubr.bf16.mxu0 0
      %1638 = vmatmul.mubr.bf16.gmra.mrb[0].mxu0 %v1582
      %v1639 = vpop.f32.mrb[0].mxu0
      %v1640 = vadd.f32 0.0, %v1639
      %v1641 = vpop.f32.mrb[0].mxu0
      %v1642 = vpop.f32.mrb[0].mxu0
      %v1643 = vadd.f32 0.0, %v1642
      %v1644 = vpop.f32.mrb[0].mxu0
      %1645 = vmatprep.mubr.bf16.mxu0 0
      %1646 = vmatmul.mubr.bf16.gmra.mrb[0].mxu0 %v1585
      %v1647 = vpop.f32.mrb[0].mxu0
      %v1648 = vadd.f32 0.0, %v1647
      %v1649 = vpop.f32.mrb[0].mxu0
      %v1650 = vpop.f32.mrb[0].mxu0
      %v1651 = vadd.f32 0.0, %v1650
      %v1652 = vpop.f32.mrb[0].mxu0
      %1653 = vmatprep.mubr.bf16.mxu0 0
      %1654 = vmatmul.mubr.bf16.gmra.mrb[0].mxu0 %v1588
      %v1655 = vpop.f32.mrb[0].mxu0
      %v1656 = vadd.f32 0.0, %v1655
      %v1657 = vpop.f32.mrb[0].mxu0
      %v1658 = vpop.f32.mrb[0].mxu0
      %v1659 = vadd.f32 0.0, %v1658
      %v1660 = vpop.f32.mrb[0].mxu0
      %1661 = vmatprep.mubr.bf16.mxu0 0
      %1662 = vmatmul.mubr.bf16.gmra.mrb[0].mxu0 %v1591
      %v1663 = vpop.f32.mrb[0].mxu0
      %v1664 = vadd.f32 0.0, %v1663
      %v1665 = vpop.f32.mrb[0].mxu0
      %v1666 = vpop.f32.mrb[0].mxu0
      %v1667 = vadd.f32 0.0, %v1666
      %v1668 = vpop.f32.mrb[0].mxu0
      %1669 = vdwg.mxu0
      %v1670 = vadd.f32 %v1531, %v1632
      %v1671 = vadd.f32 %v1532, %v1635
      %v1672 = vadd.f32 %v1533, %v1640
      %v1673 = vadd.f32 %v1534, %v1643
      %v1674 = vadd.f32 %v1535, %v1648
      %v1675 = vadd.f32 %v1536, %v1651
      %v1676 = vadd.f32 %v1537, %v1656
      %v1677 = vadd.f32 %v1538, %v1659
      %v1678 = vadd.f32 %v1539, %v1664
      %v1679 = vadd.f32 %v1540, %v1667
      %v1680 = vld [vmem:[%s5] sm:$0x1]
      %v1682 = vlaneseq
      %v1683 = vshrl.u32 %v1682, 7
      %v1684 = vsub.s32 0, %v1683
      %v1685 = vrot.slane %v1680, %v1684
      %v1687 = vadd.f32 %v1670, %v1685
      %v1688 = vadd.f32 %v1671, %v1685
      %v1689 = vadd.f32 %v1672, %v1685
      %v1690 = vadd.f32 %v1673, %v1685
      %v1691 = vadd.f32 %v1674, %v1685
      %v1692 = vadd.f32 %v1675, %v1685
      %v1693 = vadd.f32 %v1676, %v1685
      %v1694 = vadd.f32 %v1677, %v1685
      %v1695 = vadd.f32 %v1678, %v1685
      %v1696 = vadd.f32 %v1679, %v1685
      %v1697 = vmax.f32 %v1687, 0.0
      %v1698 = vmax.f32 %v1688, 0.0
      %v1699 = vmax.f32 %v1689, 0.0
      %v1700 = vmax.f32 %v1690, 0.0
      %v1701 = vmax.f32 %v1691, 0.0
      %v1702 = vmax.f32 %v1692, 0.0
      %v1703 = vmax.f32 %v1693, 0.0
      %v1704 = vmax.f32 %v1694, 0.0
      %v1705 = vmax.f32 %v1695, 0.0
      %v1706 = vmax.f32 %v1696, 0.0
      %1707 = vst [vmem:[%s271] sm:$0xff] %v1697
      %1708 = vst [vmem:[%s271 + $0x8] sm:$0xff] %v1698
      %1709 = vst [vmem:[%s271 + $0x10] sm:$0xff] %v1699
      %1710 = vst [vmem:[%s271 + $0x18] sm:$0xff] %v1700
      %1711 = vst [vmem:[%s271 + $0x20] sm:$0xff] %v1701
      %1712 = vst [vmem:[%s271 + $0x28] sm:$0xff] %v1702
      %1713 = vst [vmem:[%s271 + $0x30] sm:$0xff] %v1703
      %1714 = vst [vmem:[%s271 + $0x38] sm:$0xff] %v1704
      %1715 = vst [vmem:[%s271 + $0x40] sm:$0xff] %v1705
      %1716 = vst [vmem:[%s271 + $0x48] sm:$0xff] %v1706
      %p1717 = scmp.lt.s32.totalorder %s17, 1
      %s1718 = scalar_select %p1717, %s17, 1
      %s1719 = smul.addr %s1718, 10
      %s1720 = smul.addr %s1719, 8
      %s1721 = scalar_lea.vmem %s6, %s1720
      // Predicated region
      $region45: #{basic_block_forward.3} parent=43 // pred_check
        %p1722 = pneg %p171
      $region46: #{basic_block_forward.3} parent=43 // pred_check_branch
        %1724 = sbr.rel (%p1722) target = $region48
      $region47: #{basic_block_forward.3} parent=43 // pred_region
        _
      $region48: #{basic_block_forward.3} parent=43 // pred_fallthru
        _
    $region44: #{basic_block_forward.3} parent=5 // pred_fallthru
      _
    %p1725 = scmp.le.s32.totalorder 2, %s12
    // Predicated region
    $region49: #{basic_block_forward.3} parent=5 // pred_check
      %p1726 = pneg %p1725
    $region50: #{basic_block_forward.3} parent=5 // pred_check_branch
      %1728 = sbr.rel (%p1726) target = $region52
    $region51: #{basic_block_forward.3} parent=5 // pred_region
      %s1729 = ssub.s32 %s12, 2
      // Predicated region
      $region53: #{basic_block_forward.3} parent=51 // pred_check
        %p1730 = pneg %p177
      $region54: #{basic_block_forward.3} parent=51 // pred_check_branch
        %1732 = sbr.rel (%p1730) target = $region56
      $region55: #{basic_block_forward.3} parent=51 // pred_region
        %p1733 = scmp.lt.s32.totalorder %s18, 1
        %s1734 = scalar_select %p1733, %s18, 1
        %s1735 = smul.addr %s1734, 10
        %s1736 = smul.addr %s1735, 8
        %s1737 = scalar_lea.vmem %s6, %s1736
      $region56: #{basic_block_forward.3} parent=51 // pred_fallthru
        _
    $region52: #{basic_block_forward.3} parent=5 // pred_fallthru
      _
  $region6: #{basic_block_forward.3} parent=0 // loop_footer
    %s16 = sadd.s32 1, %s12
  $region7: #{basic_block_forward.3} parent=0 // loop_footer_branch
    %11 = sbr.rel target = $region3
  $region8: #{basic_block_forward.3} parent=0 // loop_exit
    _

</llo_original>
